<compile_context>
chip_gen: v7x
topology: tpu7x:2x2x1
jax: 0.10.0
libtpu: 0.0.40
codegen_flags: <defaults>
</compile_context>

<pallas_src>
import functools
import numpy as np
import jax
import jax.numpy as jnp
from jax.experimental import pallas as pl
from jax.experimental.pallas import tpu as pltpu

ALPHA = 0.25          # torch.nn.PReLU() default init (shared scalar)


def _round_up(x, m):
    return (x + m - 1) // m * m


# --------------------------------------------------------------------------
# Pallas GEMM kernel:  W(Cp,K) @ A(K,M) + bias (+ PReLU), lane dim = spatial
# --------------------------------------------------------------------------
def _gemm_bias_act_kernel(w_ref, a_ref, b_ref, o_ref, *, alpha, use_act):
    acc = jnp.dot(w_ref[...], a_ref[...], preferred_element_type=jnp.float32)
    acc = acc + b_ref[...]                       # (Cp,1) broadcasts over (Cp,TN)
    if use_act:                                  # PReLU with shared scalar alpha
        acc = jnp.where(acc >= 0.0, acc, alpha * acc)
    o_ref[...] = acc


def _gemm(p, col, use_act):
    """p['w']: (Cp,K) bf16, p['b']: (Cp,1) f32, col: (K,M) -> (rows, M) f32."""
    wmat, bias, rows = p['w'], p['b'], p['rows']
    Cp, K = wmat.shape
    M = col.shape[1]
    Mp = _round_up(M, 128)
    a = col.astype(jnp.bfloat16)
    if Mp != M:
        a = jnp.pad(a, ((0, 0), (0, Mp - M)))
    if Mp > 256 and Mp % 256 == 0:
        TN = 256                  # >=2 parallel grid steps (feeds both v7x TCs)
    elif Mp <= 512:
        TN = Mp                   # single step for small GEMMs (overhead-bound)
    else:
        TN = 128

    out = pl.pallas_call(
        functools.partial(_gemm_bias_act_kernel, alpha=ALPHA, use_act=use_act),
        out_shape=jax.ShapeDtypeStruct((Cp, Mp), jnp.float32),
        grid_spec=pltpu.PrefetchScalarGridSpec(
            num_scalar_prefetch=0,
            grid=(Mp // TN,),
            in_specs=[pl.BlockSpec((Cp, K), lambda i: (0, 0)),   # weights (resident)
                      pl.BlockSpec((K, TN), lambda i: (0, i)),   # im2col slab
                      pl.BlockSpec((Cp, 1), lambda i: (0, 0))],  # bias
            out_specs=pl.BlockSpec((Cp, TN), lambda i: (0, i))),
        compiler_params=pltpu.CompilerParams(
            dimension_semantics=("parallel",)),
    )(wmat, a, bias)
    if Mp != M:
        out = out[:, :M]
    if rows != Cp:
        out = out[:rows]
    return out


# --------------------------------------------------------------------------
# im2col (channels-first layout) and conv / deconv forwards
# --------------------------------------------------------------------------
def _im2col(x, kh, kw, stride, padding):
    """x: (C,N,H,W) -> (C*kh*kw, N*Ho*Wo); K order = (C major, kh, kw minor)."""
    C, N, H, W = x.shape
    if padding:
        x = jnp.pad(x, ((0, 0), (0, 0), (padding, padding), (padding, padding)))
    Ho = (H + 2 * padding - kh) // stride + 1
    Wo = (W + 2 * padding - kw) // stride + 1
    taps = []
    for i in range(kh):
        for j in range(kw):
            taps.append(x[:, :, i:i + stride * Ho:stride, j:j + stride * Wo:stride])
    col = jnp.stack(taps, axis=1)                # (C, kh*kw, N, Ho, Wo)
    return col.reshape(C * kh * kw, N * Ho * Wo), Ho, Wo


def conv_block(p, x, stride, padding, act):
    """x: (Cin, N, H, W) -> (Cout, N, Ho, Wo)."""
    C, N, H, W = x.shape
    x = x.astype(jnp.bfloat16)
    k = p['k']
    if k == 1 and stride == 1 and padding == 0:
        col, Ho, Wo = x.reshape(C, N * H * W), H, W
    else:
        col, Ho, Wo = _im2col(x, k, k, stride, padding)
    out = _gemm(p, col, act)
    return out.reshape(p['cout'], N, Ho, Wo)


def deconv_block(p, x, act):
    """ConvTranspose2d via sub-pixel (phase) decomposition: s*s stride-1 phase
    convolutions on the un-dilated input + pixel-shuffle interleave."""
    C, N, H, W = x.shape
    x = x.astype(jnp.bfloat16)
    s, KL = p['s'], p['KL']
    xp = jnp.pad(x, ((0, 0), (0, 0),
                     (p['padl'], p['padr']), (p['padl'], p['padr'])))
    st = p['start']
    xe = xp[:, :, st:st + H - 1 + KL, st:st + W - 1 + KL]
    col, _, _ = _im2col(xe, KL, KL, 1, 0)            # -> (Cin*KL*KL, N*H*W)
    out = _gemm(p, col, act)                         # (s*s*Cout, N*H*W)
    cout = p['cout']
    out = out.reshape(s, s, cout, N, H, W)
    out = out.transpose(2, 3, 4, 0, 5, 1).reshape(cout, N, H * s, W * s)
    return out


# --------------------------------------------------------------------------
# Parameter construction (deterministic, kaiming-normal-like, zero bias).
# Weights are packed once: reshaped to (rows, K), sublane-padded, cast to bf16.
# --------------------------------------------------------------------------
class ParamGen:
    def __init__(self, key):
        self.key = key

    def next(self):
        self.key, k = jax.random.split(self.key)
        return k


def _pack_rows(wmat, bias):
    rows = wmat.shape[0]
    Cp = _round_up(rows, 8)
    if Cp != rows:
        wmat = np.pad(wmat, ((0, Cp - rows), (0, 0)))
        bias = np.pad(bias, (0, Cp - rows))
    return (jnp.asarray(wmat, jnp.bfloat16),
            jnp.asarray(bias.reshape(Cp, 1), jnp.float32), rows)


def make_conv(pg, cin, cout, k):
    std = float(np.sqrt(2.0 / (cin * k * k)))
    w = np.asarray(jax.random.normal(pg.next(), (cout, cin, k, k), jnp.float32)) * std
    b = np.zeros((cout,), np.float32)
    wm, bm, rows = _pack_rows(w.reshape(cout, cin * k * k), b)
    return {'w': wm, 'b': bm, 'rows': rows, 'cout': cout, 'cin': cin, 'k': k}


def _phase_meta(k, s, p):
    # Sub-pixel decomposition of ConvTranspose(k, s, p); all configs used here
    # (k,s,p) in {(6,2,2),(8,4,2),(12,8,2),(20,16,2)} satisfy k - 2p == s.
    assert k - 2 * p == s, "phase decomposition assumes k - 2*pad == stride"
    P = k - 1 - p
    t, c, nq = [], [], []
    for r in range(s):
        cr = (P - r) % s
        c.append(cr)
        nq.append((k - cr + s - 1) // s)
        t.append((r + cr - P) // s)          # exact (r + cr - P is multiple of s)
    minq = min(t)
    maxq = max(t[r] + nq[r] - 1 for r in range(s))
    return t, c, nq, minq, maxq, maxq - minq + 1


def make_deconv(pg, cin, cout, k, s, p):
    std = float(np.sqrt(2.0 / (cout * k * k)))
    W = np.asarray(jax.random.normal(pg.next(), (cin, cout, k, k), jnp.float32)) * std
    b = np.zeros((cout,), np.float32)
    t, c, nq, minq, maxq, KL = _phase_meta(k, s, p)
    # cross-correlation kernel of the equivalent dense conv on the dilated input
    Wc = np.flip(W, axis=(2, 3)).transpose(1, 0, 2, 3)      # (cout, cin, k, k)
    g = np.zeros((s, s, cout, cin, KL, KL), np.float32)
    for rh in range(s):
        for rw in range(s):
            for qh in range(nq[rh]):
                for qw in range(nq[rw]):
                    g[rh, rw, :, :, qh + t[rh] - minq, qw + t[rw] - minq] = \
                        Wc[:, :, qh * s + c[rh], qw * s + c[rw]]
    wm, bm, rows = _pack_rows(g.reshape(s * s * cout, cin * KL * KL),
                              np.tile(b, s * s))
    return {'w': wm, 'b': bm, 'rows': rows, 'cout': cout, 's': s, 'KL': KL,
            'padl': max(0, -minq), 'padr': max(0, maxq), 'start': max(0, minq)}


def make_upblock(pg, nf, k, s, pad):
    return {'dc1': make_deconv(pg, nf, nf, k, s, pad),
            'c2':  make_conv(pg, nf, nf, k),
            'dc3': make_deconv(pg, nf, nf, k, s, pad)}


def make_downblock(pg, cin, cout, k, s, pad):
    # TODO(synk): DownBlock source not provided; DBPN D_DownBlock layout assumed
    # (1x1 reduce only when cin != cout, then conv / deconv / conv).
    d = {}
    if cin != cout:
        d['reduce'] = make_conv(pg, cin, cout, 1)
    d['c1'] = make_conv(pg, cout, cout, k)
    d['dc2'] = make_deconv(pg, cout, cout, k, s, pad)
    d['c3'] = make_conv(pg, cout, cout, k)
    return d


def make_resnet(pg, cin, cout):
    # TODO(synk): ResnetBlock source not provided; conv-act-conv with residual
    # add only when channel counts match.
    return {'c1': make_conv(pg, cin, cout, 3),
            'c2': make_conv(pg, cout, cout, 3),
            'cin': cin, 'cout': cout}


# --------------------------------------------------------------------------
# Block forward functions (activations are (C, N, H, W))
# --------------------------------------------------------------------------
def up_block(p, x, s, pad):
    h0 = deconv_block(p['dc1'], x, True)
    l0 = conv_block(p['c2'], h0, s, pad, True)
    h1 = deconv_block(p['dc3'], l0 - x, True)
    return h1 + h0


def down_block(p, x, s, pad):
    if 'reduce' in p:
        x = conv_block(p['reduce'], x, 1, 0, True)
    l0 = conv_block(p['c1'], x, s, pad, True)
    h0 = deconv_block(p['dc2'], l0, True)
    l1 = conv_block(p['c3'], h0 - x, s, pad, True)
    return l1 + l0


def resnet_block(p, x):
    y = conv_block(p['c1'], x, 1, 1, True)
    y = conv_block(p['c2'], y, 1, 1, False)
    if p['cin'] == p['cout']:
        y = y + x
    return jnp.where(y >= 0.0, y, ALPHA * y)    # PReLU after residual


def gradient_map(x):
    # TODO(synk): Gradient_Map source not provided; forward-difference gradient
    # magnitude per channel (output shape == input shape).
    dx = jnp.pad(x[:, :, :, 1:] - x[:, :, :, :-1], ((0, 0), (0, 0), (0, 0), (0, 1)))
    dy = jnp.pad(x[:, :, 1:, :] - x[:, :, :-1, :], ((0, 0), (0, 0), (0, 1), (0, 0)))
    return jnp.sqrt(dx * dx + dy * dy + 1e-12)


# --------------------------------------------------------------------------
# Net
# --------------------------------------------------------------------------
def build_net_params(key, num_channels, base_filter, scale_factor):
    if scale_factor == 2:
        k, s, pad = 6, 2, 2
    elif scale_factor == 4:
        k, s, pad = 8, 4, 2
    elif scale_factor == 8:
        k, s, pad = 12, 8, 2
    elif scale_factor == 16:
        k, s, pad = 20, 16, 2
    else:
        raise ValueError(scale_factor)

    nc, bf = num_channels, base_filter
    pg = ParamGen(key)
    P = {}
    P['feat0'] = make_conv(pg, nc, bf, 3)
    P['feat1'] = make_conv(pg, bf, bf, 1)
    P['featc0'] = make_conv(pg, nc, bf, 3)
    P['featc1'] = make_conv(pg, bf, bf, 1)
    P['feat2_0'] = make_conv(pg, bf, bf, 3)
    P['feat2_1'] = make_conv(pg, bf, bf, 1)
    for i in range(1, 9):
        P[f'up{i}'] = make_upblock(pg, bf, k, s, pad)
    for i in range(1, 4):
        P[f'down{i}'] = make_downblock(pg, 2 * bf, bf, k, s, pad)
    for i in range(4, 8):
        P[f'down{i}'] = make_downblock(pg, bf, bf, k, s, pad)
    P['Gblock1'] = make_resnet(pg, bf, bf)
    for i in range(2, 6):
        P[f'Gblock{i}'] = make_resnet(pg, 2 * bf, bf)
    P['out_depth1'] = make_conv(pg, 2 * bf, bf, 3)
    P['out_depth2'] = make_conv(pg, nc, bf, 3)          # defined but unused in forward
    P['output_depth_conv'] = make_conv(pg, bf, nc, 3)
    P['out_SR1'] = make_conv(pg, 2 * bf, bf, 3)
    P['out_SR2'] = make_conv(pg, nc, bf, 3)             # defined but unused in forward
    P['output_SR_conv'] = make_conv(pg, bf, nc, 3)
    P['out_SR_f'] = make_conv(pg, 4 * bf, bf, 3)
    P['output_SR_conv_f'] = make_conv(pg, bf, nc, 1)
    P['input_lr1'] = make_conv(pg, nc, bf, 3)
    P['Gblock6'] = make_resnet(pg, bf, bf)
    P['Gblock7'] = make_resnet(pg, bf, bf)
    P['input_lr2'] = make_conv(pg, bf, bf, k)
    P['input_lr'] = make_conv(pg, bf, nc, 1)
    return P, (k, s, pad)


def net_forward(P, x, color, ksp):
    """x, color: (C, N, H, W) channels-first-flattened layout."""
    k, s, pad = ksp
    gard = gradient_map(color)
    x1 = conv_block(P['feat0'], x, 1, 1, True)
    x2 = conv_block(P['feat1'], x1, 1, 0, True)
    c1 = conv_block(P['featc0'], gard, 1, 1, True)
    c2 = conv_block(P['featc1'], c1, 1, 0, True)

    h1 = up_block(P['up1'], x2, s, pad)
    c_res1 = resnet_block(P['Gblock1'], c2)
    concat_1 = jnp.concatenate([h1, c_res1], axis=0)
    l1 = down_block(P['down1'], concat_1, s, pad)

    h2 = up_block(P['up2'], l1, s, pad)
    c_res2 = resnet_block(P['Gblock2'], concat_1)
    concat_2 = jnp.concatenate([h2, c_res2], axis=0)
    l2 = down_block(P['down2'], concat_2, s, pad)

    h3 = up_block(P['up3'], l2, s, pad)
    c_res3 = resnet_block(P['Gblock3'], concat_2)
    concat_3 = jnp.concatenate([h3, c_res3], axis=0)
    l3 = down_block(P['down3'], concat_3, s, pad)

    h4 = up_block(P['up4'], l3, s, pad)
    c_res4 = resnet_block(P['Gblock4'], concat_3)
    concat_4 = jnp.concatenate([h4, c_res4], axis=0)

    d1 = conv_block(P['out_depth1'], concat_4, 1, 1, True)
    d = conv_block(P['output_depth_conv'], d1, 1, 1, False)
    sr1 = conv_block(P['out_SR1'], concat_4, 1, 1, True)
    sr = conv_block(P['output_SR_conv'], sr1, 1, 1, False)

    x21 = conv_block(P['feat2_0'], d1, 1, 1, True)
    x22 = conv_block(P['feat2_1'], x21, 1, 0, True)
    l4 = down_block(P['down4'], x22, s, pad)
    h5 = up_block(P['up5'], l4, s, pad)
    l5 = down_block(P['down5'], h5, s, pad)
    h6 = up_block(P['up6'], l5, s, pad)
    l6 = down_block(P['down6'], h6, s, pad)
    h7 = up_block(P['up7'], l6, s, pad)
    l7 = down_block(P['down7'], h7, s, pad)
    h8 = up_block(P['up8'], l7, s, pad)

    concat_all = jnp.concatenate([h5, h6, h7, h8], axis=0)
    out1 = conv_block(P['out_SR_f'], concat_all, 1, 1, True)
    out = conv_block(P['output_SR_conv_f'], out1, 1, 0, True)

    lr1 = conv_block(P['input_lr1'], out, 1, 1, True)
    lr2 = resnet_block(P['Gblock6'], lr1)
    lr3 = resnet_block(P['Gblock7'], lr2)
    lr2b = conv_block(P['input_lr2'], lr3, s, pad, True)
    lr = conv_block(P['input_lr'], lr2b, 1, 0, False)
    return d, sr, out, lr


# --------------------------------------------------------------------------
if __name__ == "__main__":
    num_channels, base_filter, scale = 1, 8, 2
    B, H, W = 2, 8, 8                      # LR depth input; HR color is 16x16

    key = jax.random.PRNGKey(0)
    kp, kx, kc = jax.random.split(key, 3)
    P, ksp = build_net_params(kp, num_channels, base_filter, scale)

    x = jax.random.normal(kx, (B, num_channels, H, W), jnp.float32)
    color = jax.random.normal(kc, (B, num_channels, H * scale, W * scale), jnp.float32)

    @jax.jit
    def forward(x_nchw, color_nchw):
        xc = jnp.transpose(x_nchw, (1, 0, 2, 3))       # NCHW -> (C, N, H, W)
        cc = jnp.transpose(color_nchw, (1, 0, 2, 3))
        d, sr, out, lr = net_forward(P, xc, cc, ksp)
        back = lambda t: jnp.transpose(t, (1, 0, 2, 3))
        return back(d), back(sr), back(out), back(lr)

    d, sr, out, lr = forward(x, color)
    jax.block_until_ready((d, sr, out, lr))

    assert d.shape == (B, num_channels, H * scale, W * scale)
    assert sr.shape == (B, num_channels, H * scale, W * scale)
    assert out.shape == (B, num_channels, H * scale, W * scale)
    assert lr.shape == (B, num_channels, H, W)
    assert all(bool(jnp.isfinite(t).all()) for t in (d, sr, out, lr))
    print("KERNEL_OK")
</pallas_src>

<mosaic_0001>
module attributes {stable_mosaic.version = 11 : i64} {
  func.func @_gemm_bias_act_kernel(%arg0: i32, %arg1: memref<8x9xbf16, #tpu.memory_space<vmem>>, %arg2: memref<9x256xbf16, #tpu.memory_space<vmem>>, %arg3: memref<8x1xf32, #tpu.memory_space<vmem>>, %arg4: memref<8x256xf32, #tpu.memory_space<vmem>>) attributes {dimension_semantics = [#tpu.dimension_semantics<parallel>], iteration_bounds = array<i64: 2>, scalar_prefetch = 0 : i64, scratch_operands = 0 : i64, tpu.core_type = #tpu.core_type<tc>, window_params = [{pipeline_mode = #tpu.pipeline_mode<synchronous>, transform_indices = @transform_0, window_bounds = array<i64: 8, 9>}, {transform_indices = @transform_1, window_bounds = array<i64: 9, 256>}, {pipeline_mode = #tpu.pipeline_mode<synchronous>, transform_indices = @transform_2, window_bounds = array<i64: 8, 1>}, {transform_indices = @transform_3, window_bounds = array<i64: 8, 256>}]} {
    %c0 = arith.constant 0 : index
    %c0_0 = arith.constant 0 : index
    %0 = vector.load %arg1[%c0, %c0_0] : memref<8x9xbf16, #tpu.memory_space<vmem>>, vector<8x9xbf16>
    %c0_1 = arith.constant 0 : index
    %c0_2 = arith.constant 0 : index
    %1 = vector.load %arg2[%c0_1, %c0_2] : memref<9x256xbf16, #tpu.memory_space<vmem>>, vector<9x256xbf16>
    %cst = arith.constant dense<0.000000e+00> : vector<8x256xf32>
    %2 = tpu.matmul %0, %1, %cst {dimension_numbers = #tpu.dot_dimension_numbers<[1], [0], [0], [1], [0, 0, 1, 1], [], []>} : vector<8x9xbf16>, vector<9x256xbf16>, vector<8x256xf32> -> vector<8x256xf32>
    %c0_3 = arith.constant 0 : index
    %c0_4 = arith.constant 0 : index
    %3 = vector.load %arg3[%c0_3, %c0_4] : memref<8x1xf32, #tpu.memory_space<vmem>>, vector<8x1xf32>
    %4 = vector.broadcast %3 : vector<8x1xf32> to vector<8x256xf32>
    %5 = arith.addf %2, %4 : vector<8x256xf32>
    %cst_5 = arith.constant 0.000000e+00 : f32
    %6 = vector.broadcast %cst_5 : f32 to vector<8x256xf32>
    %7 = arith.cmpf oge, %5, %6 : vector<8x256xf32>
    %cst_6 = arith.constant 2.500000e-01 : f32
    %8 = vector.broadcast %cst_6 : f32 to vector<8x256xf32>
    %9 = arith.mulf %8, %5 : vector<8x256xf32>
    %10 = arith.select %7, %5, %9 : vector<8x256xi1>, vector<8x256xf32>
    %c0_7 = arith.constant 0 : index
    %c0_8 = arith.constant 0 : index
    %11 = vector.load %arg4[%c0_7, %c0_8] : memref<8x256xf32, #tpu.memory_space<vmem>>, vector<8x256xf32>
    tpu.vector_store %arg4[%c0_7, %c0_8], %10 {strides = array<i32>} : memref<8x256xf32, #tpu.memory_space<vmem>>, vector<8x256xf32>,
    return
  }
  func.func @transform_0(%arg0: i32) -> (i32, i32) {
    %c0_i32 = arith.constant 0 : i32
    %c0_i32_0 = arith.constant 0 : i32
    %c0_i32_1 = arith.constant 0 : i32
    return %c0_i32, %c0_i32_0 : i32, i32
  }
  func.func @transform_1(%arg0: i32) -> (i32, i32) {
    %c0_i32 = arith.constant 0 : i32
    %c0_i32_0 = arith.constant 0 : i32
    return %c0_i32, %arg0 : i32, i32
  }
  func.func @transform_2(%arg0: i32) -> (i32, i32) {
    %c0_i32 = arith.constant 0 : i32
    %c0_i32_0 = arith.constant 0 : i32
    %c0_i32_1 = arith.constant 0 : i32
    return %c0_i32, %c0_i32_0 : i32, i32
  }
  func.func @transform_3(%arg0: i32) -> (i32, i32) {
    %c0_i32 = arith.constant 0 : i32
    %c0_i32_0 = arith.constant 0 : i32
    return %c0_i32, %arg0 : i32, i32
  }
}

module attributes {stable_mosaic.version = 11 : i64} {
  func.func @_gemm_bias_act_kernel(%arg0: i32, %arg1: memref<8x8xbf16, #tpu.memory_space<vmem>>, %arg2: memref<8x256xbf16, #tpu.memory_space<vmem>>, %arg3: memref<8x1xf32, #tpu.memory_space<vmem>>, %arg4: memref<8x256xf32, #tpu.memory_space<vmem>>) attributes {dimension_semantics = [#tpu.dimension_semantics<parallel>], iteration_bounds = array<i64: 2>, scalar_prefetch = 0 : i64, scratch_operands = 0 : i64, tpu.core_type = #tpu.core_type<tc>, window_params = [{pipeline_mode = #tpu.pipeline_mode<synchronous>, transform_indices = @transform_0, window_bounds = array<i64: 8, 8>}, {transform_indices = @transform_1, window_bounds = array<i64: 8, 256>}, {pipeline_mode = #tpu.pipeline_mode<synchronous>, transform_indices = @transform_2, window_bounds = array<i64: 8, 1>}, {transform_indices = @transform_3, window_bounds = array<i64: 8, 256>}]} {
    %c0 = arith.constant 0 : index
    %c0_0 = arith.constant 0 : index
    %0 = vector.load %arg1[%c0, %c0_0] : memref<8x8xbf16, #tpu.memory_space<vmem>>, vector<8x8xbf16>
    %c0_1 = arith.constant 0 : index
    %c0_2 = arith.constant 0 : index
    %1 = vector.load %arg2[%c0_1, %c0_2] : memref<8x256xbf16, #tpu.memory_space<vmem>>, vector<8x256xbf16>
    %cst = arith.constant dense<0.000000e+00> : vector<8x256xf32>
    %2 = tpu.matmul %0, %1, %cst {dimension_numbers = #tpu.dot_dimension_numbers<[1], [0], [0], [1], [0, 0, 1, 1], [], []>} : vector<8x8xbf16>, vector<8x256xbf16>, vector<8x256xf32> -> vector<8x256xf32>
    %c0_3 = arith.constant 0 : index
    %c0_4 = arith.constant 0 : index
    %3 = vector.load %arg3[%c0_3, %c0_4] : memref<8x1xf32, #tpu.memory_space<vmem>>, vector<8x1xf32>
    %4 = vector.broadcast %3 : vector<8x1xf32> to vector<8x256xf32>
    %5 = arith.addf %2, %4 : vector<8x256xf32>
    %cst_5 = arith.constant 0.000000e+00 : f32
    %6 = vector.broadcast %cst_5 : f32 to vector<8x256xf32>
    %7 = arith.cmpf oge, %5, %6 : vector<8x256xf32>
    %cst_6 = arith.constant 2.500000e-01 : f32
    %8 = vector.broadcast %cst_6 : f32 to vector<8x256xf32>
    %9 = arith.mulf %8, %5 : vector<8x256xf32>
    %10 = arith.select %7, %5, %9 : vector<8x256xi1>, vector<8x256xf32>
    %c0_7 = arith.constant 0 : index
    %c0_8 = arith.constant 0 : index
    %11 = vector.load %arg4[%c0_7, %c0_8] : memref<8x256xf32, #tpu.memory_space<vmem>>, vector<8x256xf32>
    tpu.vector_store %arg4[%c0_7, %c0_8], %10 {strides = array<i32>} : memref<8x256xf32, #tpu.memory_space<vmem>>, vector<8x256xf32>,
    return
  }
  func.func @transform_0(%arg0: i32) -> (i32, i32) {
    %c0_i32 = arith.constant 0 : i32
    %c0_i32_0 = arith.constant 0 : i32
    %c0_i32_1 = arith.constant 0 : i32
    return %c0_i32, %c0_i32_0 : i32, i32
  }
  func.func @transform_1(%arg0: i32) -> (i32, i32) {
    %c0_i32 = arith.constant 0 : i32
    %c0_i32_0 = arith.constant 0 : i32
    return %c0_i32, %arg0 : i32, i32
  }
  func.func @transform_2(%arg0: i32) -> (i32, i32) {
    %c0_i32 = arith.constant 0 : i32
    %c0_i32_0 = arith.constant 0 : i32
    %c0_i32_1 = arith.constant 0 : i32
    return %c0_i32, %c0_i32_0 : i32, i32
  }
  func.func @transform_3(%arg0: i32) -> (i32, i32) {
    %c0_i32 = arith.constant 0 : i32
    %c0_i32_0 = arith.constant 0 : i32
    return %c0_i32, %arg0 : i32, i32
  }
}

module attributes {stable_mosaic.version = 11 : i64} {
  func.func @_gemm_bias_act_kernel(%arg0: i32, %arg1: memref<8x72xbf16, #tpu.memory_space<vmem>>, %arg2: memref<72x256xbf16, #tpu.memory_space<vmem>>, %arg3: memref<8x1xf32, #tpu.memory_space<vmem>>, %arg4: memref<8x256xf32, #tpu.memory_space<vmem>>) attributes {dimension_semantics = [#tpu.dimension_semantics<parallel>], iteration_bounds = array<i64: 2>, scalar_prefetch = 0 : i64, scratch_operands = 0 : i64, tpu.core_type = #tpu.core_type<tc>, window_params = [{pipeline_mode = #tpu.pipeline_mode<synchronous>, transform_indices = @transform_0, window_bounds = array<i64: 8, 72>}, {transform_indices = @transform_1, window_bounds = array<i64: 72, 256>}, {pipeline_mode = #tpu.pipeline_mode<synchronous>, transform_indices = @transform_2, window_bounds = array<i64: 8, 1>}, {transform_indices = @transform_3, window_bounds = array<i64: 8, 256>}]} {
    %c0 = arith.constant 0 : index
    %c0_0 = arith.constant 0 : index
    %0 = vector.load %arg1[%c0, %c0_0] : memref<8x72xbf16, #tpu.memory_space<vmem>>, vector<8x72xbf16>
    %c0_1 = arith.constant 0 : index
    %c0_2 = arith.constant 0 : index
    %1 = vector.load %arg2[%c0_1, %c0_2] : memref<72x256xbf16, #tpu.memory_space<vmem>>, vector<72x256xbf16>
    %cst = arith.constant dense<0.000000e+00> : vector<8x256xf32>
    %2 = tpu.matmul %0, %1, %cst {dimension_numbers = #tpu.dot_dimension_numbers<[1], [0], [0], [1], [0, 0, 1, 1], [], []>} : vector<8x72xbf16>, vector<72x256xbf16>, vector<8x256xf32> -> vector<8x256xf32>
    %c0_3 = arith.constant 0 : index
    %c0_4 = arith.constant 0 : index
    %3 = vector.load %arg3[%c0_3, %c0_4] : memref<8x1xf32, #tpu.memory_space<vmem>>, vector<8x1xf32>
    %4 = vector.broadcast %3 : vector<8x1xf32> to vector<8x256xf32>
    %5 = arith.addf %2, %4 : vector<8x256xf32>
    %cst_5 = arith.constant 0.000000e+00 : f32
    %6 = vector.broadcast %cst_5 : f32 to vector<8x256xf32>
    %7 = arith.cmpf oge, %5, %6 : vector<8x256xf32>
    %cst_6 = arith.constant 2.500000e-01 : f32
    %8 = vector.broadcast %cst_6 : f32 to vector<8x256xf32>
    %9 = arith.mulf %8, %5 : vector<8x256xf32>
    %10 = arith.select %7, %5, %9 : vector<8x256xi1>, vector<8x256xf32>
    %c0_7 = arith.constant 0 : index
    %c0_8 = arith.constant 0 : index
    %11 = vector.load %arg4[%c0_7, %c0_8] : memref<8x256xf32, #tpu.memory_space<vmem>>, vector<8x256xf32>
    tpu.vector_store %arg4[%c0_7, %c0_8], %10 {strides = array<i32>} : memref<8x256xf32, #tpu.memory_space<vmem>>, vector<8x256xf32>,
    return
  }
  func.func @transform_0(%arg0: i32) -> (i32, i32) {
    %c0_i32 = arith.constant 0 : i32
    %c0_i32_0 = arith.constant 0 : i32
    %c0_i32_1 = arith.constant 0 : i32
    return %c0_i32, %c0_i32_0 : i32, i32
  }
  func.func @transform_1(%arg0: i32) -> (i32, i32) {
    %c0_i32 = arith.constant 0 : i32
    %c0_i32_0 = arith.constant 0 : i32
    return %c0_i32, %arg0 : i32, i32
  }
  func.func @transform_2(%arg0: i32) -> (i32, i32) {
    %c0_i32 = arith.constant 0 : i32
    %c0_i32_0 = arith.constant 0 : i32
    %c0_i32_1 = arith.constant 0 : i32
    return %c0_i32, %c0_i32_0 : i32, i32
  }
  func.func @transform_3(%arg0: i32) -> (i32, i32) {
    %c0_i32 = arith.constant 0 : i32
    %c0_i32_0 = arith.constant 0 : i32
    return %c0_i32, %arg0 : i32, i32
  }
}

module attributes {stable_mosaic.version = 11 : i64} {
  func.func @_gemm_bias_act_kernel(%arg0: i32, %arg1: memref<8x72xbf16, #tpu.memory_space<vmem>>, %arg2: memref<72x256xbf16, #tpu.memory_space<vmem>>, %arg3: memref<8x1xf32, #tpu.memory_space<vmem>>, %arg4: memref<8x256xf32, #tpu.memory_space<vmem>>) attributes {dimension_semantics = [#tpu.dimension_semantics<parallel>], iteration_bounds = array<i64: 2>, scalar_prefetch = 0 : i64, scratch_operands = 0 : i64, tpu.core_type = #tpu.core_type<tc>, window_params = [{pipeline_mode = #tpu.pipeline_mode<synchronous>, transform_indices = @transform_0, window_bounds = array<i64: 8, 72>}, {transform_indices = @transform_1, window_bounds = array<i64: 72, 256>}, {pipeline_mode = #tpu.pipeline_mode<synchronous>, transform_indices = @transform_2, window_bounds = array<i64: 8, 1>}, {transform_indices = @transform_3, window_bounds = array<i64: 8, 256>}]} {
    %c0 = arith.constant 0 : index
    %c0_0 = arith.constant 0 : index
    %0 = vector.load %arg1[%c0, %c0_0] : memref<8x72xbf16, #tpu.memory_space<vmem>>, vector<8x72xbf16>
    %c0_1 = arith.constant 0 : index
    %c0_2 = arith.constant 0 : index
    %1 = vector.load %arg2[%c0_1, %c0_2] : memref<72x256xbf16, #tpu.memory_space<vmem>>, vector<72x256xbf16>
    %cst = arith.constant dense<0.000000e+00> : vector<8x256xf32>
    %2 = tpu.matmul %0, %1, %cst {dimension_numbers = #tpu.dot_dimension_numbers<[1], [0], [0], [1], [0, 0, 1, 1], [], []>} : vector<8x72xbf16>, vector<72x256xbf16>, vector<8x256xf32> -> vector<8x256xf32>
    %c0_3 = arith.constant 0 : index
    %c0_4 = arith.constant 0 : index
    %3 = vector.load %arg3[%c0_3, %c0_4] : memref<8x1xf32, #tpu.memory_space<vmem>>, vector<8x1xf32>
    %4 = vector.broadcast %3 : vector<8x1xf32> to vector<8x256xf32>
    %5 = arith.addf %2, %4 : vector<8x256xf32>
    %c0_5 = arith.constant 0 : index
    %c0_6 = arith.constant 0 : index
    %6 = vector.load %arg4[%c0_5, %c0_6] : memref<8x256xf32, #tpu.memory_space<vmem>>, vector<8x256xf32>
    tpu.vector_store %arg4[%c0_5, %c0_6], %5 {strides = array<i32>} : memref<8x256xf32, #tpu.memory_space<vmem>>, vector<8x256xf32>,
    return
  }
  func.func @transform_0(%arg0: i32) -> (i32, i32) {
    %c0_i32 = arith.constant 0 : i32
    %c0_i32_0 = arith.constant 0 : i32
    %c0_i32_1 = arith.constant 0 : i32
    return %c0_i32, %c0_i32_0 : i32, i32
  }
  func.func @transform_1(%arg0: i32) -> (i32, i32) {
    %c0_i32 = arith.constant 0 : i32
    %c0_i32_0 = arith.constant 0 : i32
    return %c0_i32, %arg0 : i32, i32
  }
  func.func @transform_2(%arg0: i32) -> (i32, i32) {
    %c0_i32 = arith.constant 0 : i32
    %c0_i32_0 = arith.constant 0 : i32
    %c0_i32_1 = arith.constant 0 : i32
    return %c0_i32, %c0_i32_0 : i32, i32
  }
  func.func @transform_3(%arg0: i32) -> (i32, i32) {
    %c0_i32 = arith.constant 0 : i32
    %c0_i32_0 = arith.constant 0 : i32
    return %c0_i32, %arg0 : i32, i32
  }
}

module attributes {stable_mosaic.version = 11 : i64} {
  func.func @_gemm_bias_act_kernel(%arg0: i32, %arg1: memref<8x8xbf16, #tpu.memory_space<vmem>>, %arg2: memref<8x128xbf16, #tpu.memory_space<vmem>>, %arg3: memref<8x1xf32, #tpu.memory_space<vmem>>, %arg4: memref<8x128xf32, #tpu.memory_space<vmem>>) attributes {dimension_semantics = [#tpu.dimension_semantics<parallel>], iteration_bounds = array<i64: 1>, scalar_prefetch = 0 : i64, scratch_operands = 0 : i64, tpu.core_type = #tpu.core_type<tc>, window_params = [{pipeline_mode = #tpu.pipeline_mode<synchronous>, transform_indices = @transform_0, window_bounds = array<i64: 8, 8>}, {transform_indices = @transform_1, window_bounds = array<i64: 8, 128>}, {pipeline_mode = #tpu.pipeline_mode<synchronous>, transform_indices = @transform_2, window_bounds = array<i64: 8, 1>}, {transform_indices = @transform_3, window_bounds = array<i64: 8, 128>}]} {
    %c0 = arith.constant 0 : index
    %c0_0 = arith.constant 0 : index
    %0 = vector.load %arg1[%c0, %c0_0] : memref<8x8xbf16, #tpu.memory_space<vmem>>, vector<8x8xbf16>
    %c0_1 = arith.constant 0 : index
    %c0_2 = arith.constant 0 : index
    %1 = vector.load %arg2[%c0_1, %c0_2] : memref<8x128xbf16, #tpu.memory_space<vmem>>, vector<8x128xbf16>
    %cst = arith.constant dense<0.000000e+00> : vector<8x128xf32>
    %2 = tpu.matmul %0, %1, %cst {dimension_numbers = #tpu.dot_dimension_numbers<[1], [0], [0], [1], [0, 0, 1, 1], [], []>} : vector<8x8xbf16>, vector<8x128xbf16>, vector<8x128xf32> -> vector<8x128xf32>
    %c0_3 = arith.constant 0 : index
    %c0_4 = arith.constant 0 : index
    %3 = vector.load %arg3[%c0_3, %c0_4] : memref<8x1xf32, #tpu.memory_space<vmem>>, vector<8x1xf32>
    %4 = vector.broadcast %3 : vector<8x1xf32> to vector<8x128xf32>
    %5 = arith.addf %2, %4 : vector<8x128xf32>
    %cst_5 = arith.constant 0.000000e+00 : f32
    %6 = vector.broadcast %cst_5 : f32 to vector<8x128xf32>
    %7 = arith.cmpf oge, %5, %6 : vector<8x128xf32>
    %cst_6 = arith.constant 2.500000e-01 : f32
    %8 = vector.broadcast %cst_6 : f32 to vector<8x128xf32>
    %9 = arith.mulf %8, %5 : vector<8x128xf32>
    %10 = arith.select %7, %5, %9 : vector<8x128xi1>, vector<8x128xf32>
    %c0_7 = arith.constant 0 : index
    %c0_8 = arith.constant 0 : index
    %11 = vector.load %arg4[%c0_7, %c0_8] : memref<8x128xf32, #tpu.memory_space<vmem>>, vector<8x128xf32>
    tpu.vector_store %arg4[%c0_7, %c0_8], %10 {strides = array<i32>} : memref<8x128xf32, #tpu.memory_space<vmem>>, vector<8x128xf32>,
    return
  }
  func.func @transform_0(%arg0: i32) -> (i32, i32) {
    %c0_i32 = arith.constant 0 : i32
    %c0_i32_0 = arith.constant 0 : i32
    %c0_i32_1 = arith.constant 0 : i32
    return %c0_i32, %c0_i32_0 : i32, i32
  }
  func.func @transform_1(%arg0: i32) -> (i32, i32) {
    %c0_i32 = arith.constant 0 : i32
    %c0_i32_0 = arith.constant 0 : i32
    return %c0_i32, %arg0 : i32, i32
  }
  func.func @transform_2(%arg0: i32) -> (i32, i32) {
    %c0_i32 = arith.constant 0 : i32
    %c0_i32_0 = arith.constant 0 : i32
    %c0_i32_1 = arith.constant 0 : i32
    return %c0_i32, %c0_i32_0 : i32, i32
  }
  func.func @transform_3(%arg0: i32) -> (i32, i32) {
    %c0_i32 = arith.constant 0 : i32
    %c0_i32_0 = arith.constant 0 : i32
    return %c0_i32, %arg0 : i32, i32
  }
}

module attributes {stable_mosaic.version = 11 : i64} {
  func.func @_gemm_bias_act_kernel(%arg0: i32, %arg1: memref<8x9xbf16, #tpu.memory_space<vmem>>, %arg2: memref<9x128xbf16, #tpu.memory_space<vmem>>, %arg3: memref<8x1xf32, #tpu.memory_space<vmem>>, %arg4: memref<8x128xf32, #tpu.memory_space<vmem>>) attributes {dimension_semantics = [#tpu.dimension_semantics<parallel>], iteration_bounds = array<i64: 1>, scalar_prefetch = 0 : i64, scratch_operands = 0 : i64, tpu.core_type = #tpu.core_type<tc>, window_params = [{pipeline_mode = #tpu.pipeline_mode<synchronous>, transform_indices = @transform_0, window_bounds = array<i64: 8, 9>}, {transform_indices = @transform_1, window_bounds = array<i64: 9, 128>}, {pipeline_mode = #tpu.pipeline_mode<synchronous>, transform_indices = @transform_2, window_bounds = array<i64: 8, 1>}, {transform_indices = @transform_3, window_bounds = array<i64: 8, 128>}]} {
    %c0 = arith.constant 0 : index
    %c0_0 = arith.constant 0 : index
    %0 = vector.load %arg1[%c0, %c0_0] : memref<8x9xbf16, #tpu.memory_space<vmem>>, vector<8x9xbf16>
    %c0_1 = arith.constant 0 : index
    %c0_2 = arith.constant 0 : index
    %1 = vector.load %arg2[%c0_1, %c0_2] : memref<9x128xbf16, #tpu.memory_space<vmem>>, vector<9x128xbf16>
    %cst = arith.constant dense<0.000000e+00> : vector<8x128xf32>
    %2 = tpu.matmul %0, %1, %cst {dimension_numbers = #tpu.dot_dimension_numbers<[1], [0], [0], [1], [0, 0, 1, 1], [], []>} : vector<8x9xbf16>, vector<9x128xbf16>, vector<8x128xf32> -> vector<8x128xf32>
    %c0_3 = arith.constant 0 : index
    %c0_4 = arith.constant 0 : index
    %3 = vector.load %arg3[%c0_3, %c0_4] : memref<8x1xf32, #tpu.memory_space<vmem>>, vector<8x1xf32>
    %4 = vector.broadcast %3 : vector<8x1xf32> to vector<8x128xf32>
    %5 = arith.addf %2, %4 : vector<8x128xf32>
    %cst_5 = arith.constant 0.000000e+00 : f32
    %6 = vector.broadcast %cst_5 : f32 to vector<8x128xf32>
    %7 = arith.cmpf oge, %5, %6 : vector<8x128xf32>
    %cst_6 = arith.constant 2.500000e-01 : f32
    %8 = vector.broadcast %cst_6 : f32 to vector<8x128xf32>
    %9 = arith.mulf %8, %5 : vector<8x128xf32>
    %10 = arith.select %7, %5, %9 : vector<8x128xi1>, vector<8x128xf32>
    %c0_7 = arith.constant 0 : index
    %c0_8 = arith.constant 0 : index
    %11 = vector.load %arg4[%c0_7, %c0_8] : memref<8x128xf32, #tpu.memory_space<vmem>>, vector<8x128xf32>
    tpu.vector_store %arg4[%c0_7, %c0_8], %10 {strides = array<i32>} : memref<8x128xf32, #tpu.memory_space<vmem>>, vector<8x128xf32>,
    return
  }
  func.func @transform_0(%arg0: i32) -> (i32, i32) {
    %c0_i32 = arith.constant 0 : i32
    %c0_i32_0 = arith.constant 0 : i32
    %c0_i32_1 = arith.constant 0 : i32
    return %c0_i32, %c0_i32_0 : i32, i32
  }
  func.func @transform_1(%arg0: i32) -> (i32, i32) {
    %c0_i32 = arith.constant 0 : i32
    %c0_i32_0 = arith.constant 0 : i32
    return %c0_i32, %arg0 : i32, i32
  }
  func.func @transform_2(%arg0: i32) -> (i32, i32) {
    %c0_i32 = arith.constant 0 : i32
    %c0_i32_0 = arith.constant 0 : i32
    %c0_i32_1 = arith.constant 0 : i32
    return %c0_i32, %c0_i32_0 : i32, i32
  }
  func.func @transform_3(%arg0: i32) -> (i32, i32) {
    %c0_i32 = arith.constant 0 : i32
    %c0_i32_0 = arith.constant 0 : i32
    return %c0_i32, %arg0 : i32, i32
  }
}

module attributes {stable_mosaic.version = 11 : i64} {
  func.func @_gemm_bias_act_kernel(%arg0: i32, %arg1: memref<32x72xbf16, #tpu.memory_space<vmem>>, %arg2: memref<72x128xbf16, #tpu.memory_space<vmem>>, %arg3: memref<32x1xf32, #tpu.memory_space<vmem>>, %arg4: memref<32x128xf32, #tpu.memory_space<vmem>>) attributes {dimension_semantics = [#tpu.dimension_semantics<parallel>], iteration_bounds = array<i64: 1>, scalar_prefetch = 0 : i64, scratch_operands = 0 : i64, tpu.core_type = #tpu.core_type<tc>, window_params = [{pipeline_mode = #tpu.pipeline_mode<synchronous>, transform_indices = @transform_0, window_bounds = array<i64: 32, 72>}, {transform_indices = @transform_1, window_bounds = array<i64: 72, 128>}, {pipeline_mode = #tpu.pipeline_mode<synchronous>, transform_indices = @transform_2, window_bounds = array<i64: 32, 1>}, {transform_indices = @transform_3, window_bounds = array<i64: 32, 128>}]} {
    %c0 = arith.constant 0 : index
    %c0_0 = arith.constant 0 : index
    %0 = vector.load %arg1[%c0, %c0_0] : memref<32x72xbf16, #tpu.memory_space<vmem>>, vector<32x72xbf16>
    %c0_1 = arith.constant 0 : index
    %c0_2 = arith.constant 0 : index
    %1 = vector.load %arg2[%c0_1, %c0_2] : memref<72x128xbf16, #tpu.memory_space<vmem>>, vector<72x128xbf16>
    %cst = arith.constant dense<0.000000e+00> : vector<32x128xf32>
    %2 = tpu.matmul %0, %1, %cst {dimension_numbers = #tpu.dot_dimension_numbers<[1], [0], [0], [1], [0, 0, 1, 1], [], []>} : vector<32x72xbf16>, vector<72x128xbf16>, vector<32x128xf32> -> vector<32x128xf32>
    %c0_3 = arith.constant 0 : index
    %c0_4 = arith.constant 0 : index
    %3 = vector.load %arg3[%c0_3, %c0_4] : memref<32x1xf32, #tpu.memory_space<vmem>>, vector<32x1xf32>
    %4 = vector.broadcast %3 : vector<32x1xf32> to vector<32x128xf32>
    %5 = arith.addf %2, %4 : vector<32x128xf32>
    %cst_5 = arith.constant 0.000000e+00 : f32
    %6 = vector.broadcast %cst_5 : f32 to vector<32x128xf32>
    %7 = arith.cmpf oge, %5, %6 : vector<32x128xf32>
    %cst_6 = arith.constant 2.500000e-01 : f32
    %8 = vector.broadcast %cst_6 : f32 to vector<32x128xf32>
    %9 = arith.mulf %8, %5 : vector<32x128xf32>
    %10 = arith.select %7, %5, %9 : vector<32x128xi1>, vector<32x128xf32>
    %c0_7 = arith.constant 0 : index
    %c0_8 = arith.constant 0 : index
    %11 = vector.load %arg4[%c0_7, %c0_8] : memref<32x128xf32, #tpu.memory_space<vmem>>, vector<32x128xf32>
    tpu.vector_store %arg4[%c0_7, %c0_8], %10 {strides = array<i32>} : memref<32x128xf32, #tpu.memory_space<vmem>>, vector<32x128xf32>,
    return
  }
  func.func @transform_0(%arg0: i32) -> (i32, i32) {
    %c0_i32 = arith.constant 0 : i32
    %c0_i32_0 = arith.constant 0 : i32
    %c0_i32_1 = arith.constant 0 : i32
    return %c0_i32, %c0_i32_0 : i32, i32
  }
  func.func @transform_1(%arg0: i32) -> (i32, i32) {
    %c0_i32 = arith.constant 0 : i32
    %c0_i32_0 = arith.constant 0 : i32
    return %c0_i32, %arg0 : i32, i32
  }
  func.func @transform_2(%arg0: i32) -> (i32, i32) {
    %c0_i32 = arith.constant 0 : i32
    %c0_i32_0 = arith.constant 0 : i32
    %c0_i32_1 = arith.constant 0 : i32
    return %c0_i32, %c0_i32_0 : i32, i32
  }
  func.func @transform_3(%arg0: i32) -> (i32, i32) {
    %c0_i32 = arith.constant 0 : i32
    %c0_i32_0 = arith.constant 0 : i32
    return %c0_i32, %arg0 : i32, i32
  }
}

module attributes {stable_mosaic.version = 11 : i64} {
  func.func @_gemm_bias_act_kernel(%arg0: i32, %arg1: memref<8x288xbf16, #tpu.memory_space<vmem>>, %arg2: memref<288x128xbf16, #tpu.memory_space<vmem>>, %arg3: memref<8x1xf32, #tpu.memory_space<vmem>>, %arg4: memref<8x128xf32, #tpu.memory_space<vmem>>) attributes {dimension_semantics = [#tpu.dimension_semantics<parallel>], iteration_bounds = array<i64: 1>, scalar_prefetch = 0 : i64, scratch_operands = 0 : i64, tpu.core_type = #tpu.core_type<tc>, window_params = [{pipeline_mode = #tpu.pipeline_mode<synchronous>, transform_indices = @transform_0, window_bounds = array<i64: 8, 288>}, {transform_indices = @transform_1, window_bounds = array<i64: 288, 128>}, {pipeline_mode = #tpu.pipeline_mode<synchronous>, transform_indices = @transform_2, window_bounds = array<i64: 8, 1>}, {transform_indices = @transform_3, window_bounds = array<i64: 8, 128>}]} {
    %c0 = arith.constant 0 : index
    %c0_0 = arith.constant 0 : index
    %0 = vector.load %arg1[%c0, %c0_0] : memref<8x288xbf16, #tpu.memory_space<vmem>>, vector<8x288xbf16>
    %c0_1 = arith.constant 0 : index
    %c0_2 = arith.constant 0 : index
    %1 = vector.load %arg2[%c0_1, %c0_2] : memref<288x128xbf16, #tpu.memory_space<vmem>>, vector<288x128xbf16>
    %cst = arith.constant dense<0.000000e+00> : vector<8x128xf32>
    %2 = tpu.matmul %0, %1, %cst {dimension_numbers = #tpu.dot_dimension_numbers<[1], [0], [0], [1], [0, 0, 1, 1], [], []>} : vector<8x288xbf16>, vector<288x128xbf16>, vector<8x128xf32> -> vector<8x128xf32>
    %c0_3 = arith.constant 0 : index
    %c0_4 = arith.constant 0 : index
    %3 = vector.load %arg3[%c0_3, %c0_4] : memref<8x1xf32, #tpu.memory_space<vmem>>, vector<8x1xf32>
    %4 = vector.broadcast %3 : vector<8x1xf32> to vector<8x128xf32>
    %5 = arith.addf %2, %4 : vector<8x128xf32>
    %cst_5 = arith.constant 0.000000e+00 : f32
    %6 = vector.broadcast %cst_5 : f32 to vector<8x128xf32>
    %7 = arith.cmpf oge, %5, %6 : vector<8x128xf32>
    %cst_6 = arith.constant 2.500000e-01 : f32
    %8 = vector.broadcast %cst_6 : f32 to vector<8x128xf32>
    %9 = arith.mulf %8, %5 : vector<8x128xf32>
    %10 = arith.select %7, %5, %9 : vector<8x128xi1>, vector<8x128xf32>
    %c0_7 = arith.constant 0 : index
    %c0_8 = arith.constant 0 : index
    %11 = vector.load %arg4[%c0_7, %c0_8] : memref<8x128xf32, #tpu.memory_space<vmem>>, vector<8x128xf32>
    tpu.vector_store %arg4[%c0_7, %c0_8], %10 {strides = array<i32>} : memref<8x128xf32, #tpu.memory_space<vmem>>, vector<8x128xf32>,
    return
  }
  func.func @transform_0(%arg0: i32) -> (i32, i32) {
    %c0_i32 = arith.constant 0 : i32
    %c0_i32_0 = arith.constant 0 : i32
    %c0_i32_1 = arith.constant 0 : i32
    return %c0_i32, %c0_i32_0 : i32, i32
  }
  func.func @transform_1(%arg0: i32) -> (i32, i32) {
    %c0_i32 = arith.constant 0 : i32
    %c0_i32_0 = arith.constant 0 : i32
    return %c0_i32, %arg0 : i32, i32
  }
  func.func @transform_2(%arg0: i32) -> (i32, i32) {
    %c0_i32 = arith.constant 0 : i32
    %c0_i32_0 = arith.constant 0 : i32
    %c0_i32_1 = arith.constant 0 : i32
    return %c0_i32, %c0_i32_0 : i32, i32
  }
  func.func @transform_3(%arg0: i32) -> (i32, i32) {
    %c0_i32 = arith.constant 0 : i32
    %c0_i32_0 = arith.constant 0 : i32
    return %c0_i32, %arg0 : i32, i32
  }
}

module attributes {stable_mosaic.version = 11 : i64} {
  func.func @_gemm_bias_act_kernel(%arg0: i32, %arg1: memref<8x144xbf16, #tpu.memory_space<vmem>>, %arg2: memref<144x256xbf16, #tpu.memory_space<vmem>>, %arg3: memref<8x1xf32, #tpu.memory_space<vmem>>, %arg4: memref<8x256xf32, #tpu.memory_space<vmem>>) attributes {dimension_semantics = [#tpu.dimension_semantics<parallel>], iteration_bounds = array<i64: 2>, scalar_prefetch = 0 : i64, scratch_operands = 0 : i64, tpu.core_type = #tpu.core_type<tc>, window_params = [{pipeline_mode = #tpu.pipeline_mode<synchronous>, transform_indices = @transform_0, window_bounds = array<i64: 8, 144>}, {transform_indices = @transform_1, window_bounds = array<i64: 144, 256>}, {pipeline_mode = #tpu.pipeline_mode<synchronous>, transform_indices = @transform_2, window_bounds = array<i64: 8, 1>}, {transform_indices = @transform_3, window_bounds = array<i64: 8, 256>}]} {
    %c0 = arith.constant 0 : index
    %c0_0 = arith.constant 0 : index
    %0 = vector.load %arg1[%c0, %c0_0] : memref<8x144xbf16, #tpu.memory_space<vmem>>, vector<8x144xbf16>
    %c0_1 = arith.constant 0 : index
    %c0_2 = arith.constant 0 : index
    %1 = vector.load %arg2[%c0_1, %c0_2] : memref<144x256xbf16, #tpu.memory_space<vmem>>, vector<144x256xbf16>
    %cst = arith.constant dense<0.000000e+00> : vector<8x256xf32>
    %2 = tpu.matmul %0, %1, %cst {dimension_numbers = #tpu.dot_dimension_numbers<[1], [0], [0], [1], [0, 0, 1, 1], [], []>} : vector<8x144xbf16>, vector<144x256xbf16>, vector<8x256xf32> -> vector<8x256xf32>
    %c0_3 = arith.constant 0 : index
    %c0_4 = arith.constant 0 : index
    %3 = vector.load %arg3[%c0_3, %c0_4] : memref<8x1xf32, #tpu.memory_space<vmem>>, vector<8x1xf32>
    %4 = vector.broadcast %3 : vector<8x1xf32> to vector<8x256xf32>
    %5 = arith.addf %2, %4 : vector<8x256xf32>
    %cst_5 = arith.constant 0.000000e+00 : f32
    %6 = vector.broadcast %cst_5 : f32 to vector<8x256xf32>
    %7 = arith.cmpf oge, %5, %6 : vector<8x256xf32>
    %cst_6 = arith.constant 2.500000e-01 : f32
    %8 = vector.broadcast %cst_6 : f32 to vector<8x256xf32>
    %9 = arith.mulf %8, %5 : vector<8x256xf32>
    %10 = arith.select %7, %5, %9 : vector<8x256xi1>, vector<8x256xf32>
    %c0_7 = arith.constant 0 : index
    %c0_8 = arith.constant 0 : index
    %11 = vector.load %arg4[%c0_7, %c0_8] : memref<8x256xf32, #tpu.memory_space<vmem>>, vector<8x256xf32>
    tpu.vector_store %arg4[%c0_7, %c0_8], %10 {strides = array<i32>} : memref<8x256xf32, #tpu.memory_space<vmem>>, vector<8x256xf32>,
    return
  }
  func.func @transform_0(%arg0: i32) -> (i32, i32) {
    %c0_i32 = arith.constant 0 : i32
    %c0_i32_0 = arith.constant 0 : i32
    %c0_i32_1 = arith.constant 0 : i32
    return %c0_i32, %c0_i32_0 : i32, i32
  }
  func.func @transform_1(%arg0: i32) -> (i32, i32) {
    %c0_i32 = arith.constant 0 : i32
    %c0_i32_0 = arith.constant 0 : i32
    return %c0_i32, %arg0 : i32, i32
  }
  func.func @transform_2(%arg0: i32) -> (i32, i32) {
    %c0_i32 = arith.constant 0 : i32
    %c0_i32_0 = arith.constant 0 : i32
    %c0_i32_1 = arith.constant 0 : i32
    return %c0_i32, %c0_i32_0 : i32, i32
  }
  func.func @transform_3(%arg0: i32) -> (i32, i32) {
    %c0_i32 = arith.constant 0 : i32
    %c0_i32_0 = arith.constant 0 : i32
    return %c0_i32, %arg0 : i32, i32
  }
}

module attributes {stable_mosaic.version = 11 : i64} {
  func.func @_gemm_bias_act_kernel(%arg0: i32, %arg1: memref<8x16xbf16, #tpu.memory_space<vmem>>, %arg2: memref<16x256xbf16, #tpu.memory_space<vmem>>, %arg3: memref<8x1xf32, #tpu.memory_space<vmem>>, %arg4: memref<8x256xf32, #tpu.memory_space<vmem>>) attributes {dimension_semantics = [#tpu.dimension_semantics<parallel>], iteration_bounds = array<i64: 2>, scalar_prefetch = 0 : i64, scratch_operands = 0 : i64, tpu.core_type = #tpu.core_type<tc>, window_params = [{pipeline_mode = #tpu.pipeline_mode<synchronous>, transform_indices = @transform_0, window_bounds = array<i64: 8, 16>}, {transform_indices = @transform_1, window_bounds = array<i64: 16, 256>}, {pipeline_mode = #tpu.pipeline_mode<synchronous>, transform_indices = @transform_2, window_bounds = array<i64: 8, 1>}, {transform_indices = @transform_3, window_bounds = array<i64: 8, 256>}]} {
    %c0 = arith.constant 0 : index
    %c0_0 = arith.constant 0 : index
    %0 = vector.load %arg1[%c0, %c0_0] : memref<8x16xbf16, #tpu.memory_space<vmem>>, vector<8x16xbf16>
    %c0_1 = arith.constant 0 : index
    %c0_2 = arith.constant 0 : index
    %1 = vector.load %arg2[%c0_1, %c0_2] : memref<16x256xbf16, #tpu.memory_space<vmem>>, vector<16x256xbf16>
    %cst = arith.constant dense<0.000000e+00> : vector<8x256xf32>
    %2 = tpu.matmul %0, %1, %cst {dimension_numbers = #tpu.dot_dimension_numbers<[1], [0], [0], [1], [0, 0, 1, 1], [], []>} : vector<8x16xbf16>, vector<16x256xbf16>, vector<8x256xf32> -> vector<8x256xf32>
    %c0_3 = arith.constant 0 : index
    %c0_4 = arith.constant 0 : index
    %3 = vector.load %arg3[%c0_3, %c0_4] : memref<8x1xf32, #tpu.memory_space<vmem>>, vector<8x1xf32>
    %4 = vector.broadcast %3 : vector<8x1xf32> to vector<8x256xf32>
    %5 = arith.addf %2, %4 : vector<8x256xf32>
    %cst_5 = arith.constant 0.000000e+00 : f32
    %6 = vector.broadcast %cst_5 : f32 to vector<8x256xf32>
    %7 = arith.cmpf oge, %5, %6 : vector<8x256xf32>
    %cst_6 = arith.constant 2.500000e-01 : f32
    %8 = vector.broadcast %cst_6 : f32 to vector<8x256xf32>
    %9 = arith.mulf %8, %5 : vector<8x256xf32>
    %10 = arith.select %7, %5, %9 : vector<8x256xi1>, vector<8x256xf32>
    %c0_7 = arith.constant 0 : index
    %c0_8 = arith.constant 0 : index
    %11 = vector.load %arg4[%c0_7, %c0_8] : memref<8x256xf32, #tpu.memory_space<vmem>>, vector<8x256xf32>
    tpu.vector_store %arg4[%c0_7, %c0_8], %10 {strides = array<i32>} : memref<8x256xf32, #tpu.memory_space<vmem>>, vector<8x256xf32>,
    return
  }
  func.func @transform_0(%arg0: i32) -> (i32, i32) {
    %c0_i32 = arith.constant 0 : i32
    %c0_i32_0 = arith.constant 0 : i32
    %c0_i32_1 = arith.constant 0 : i32
    return %c0_i32, %c0_i32_0 : i32, i32
  }
  func.func @transform_1(%arg0: i32) -> (i32, i32) {
    %c0_i32 = arith.constant 0 : i32
    %c0_i32_0 = arith.constant 0 : i32
    return %c0_i32, %arg0 : i32, i32
  }
  func.func @transform_2(%arg0: i32) -> (i32, i32) {
    %c0_i32 = arith.constant 0 : i32
    %c0_i32_0 = arith.constant 0 : i32
    %c0_i32_1 = arith.constant 0 : i32
    return %c0_i32, %c0_i32_0 : i32, i32
  }
  func.func @transform_3(%arg0: i32) -> (i32, i32) {
    %c0_i32 = arith.constant 0 : i32
    %c0_i32_0 = arith.constant 0 : i32
    return %c0_i32, %arg0 : i32, i32
  }
}

module attributes {stable_mosaic.version = 11 : i64} {
  func.func @_gemm_bias_act_kernel(%arg0: i32, %arg1: memref<8x8xbf16, #tpu.memory_space<vmem>>, %arg2: memref<8x256xbf16, #tpu.memory_space<vmem>>, %arg3: memref<8x1xf32, #tpu.memory_space<vmem>>, %arg4: memref<8x256xf32, #tpu.memory_space<vmem>>) attributes {dimension_semantics = [#tpu.dimension_semantics<parallel>], iteration_bounds = array<i64: 2>, scalar_prefetch = 0 : i64, scratch_operands = 0 : i64, tpu.core_type = #tpu.core_type<tc>, window_params = [{pipeline_mode = #tpu.pipeline_mode<synchronous>, transform_indices = @transform_0, window_bounds = array<i64: 8, 8>}, {transform_indices = @transform_1, window_bounds = array<i64: 8, 256>}, {pipeline_mode = #tpu.pipeline_mode<synchronous>, transform_indices = @transform_2, window_bounds = array<i64: 8, 1>}, {transform_indices = @transform_3, window_bounds = array<i64: 8, 256>}]} {
    %c0 = arith.constant 0 : index
    %c0_0 = arith.constant 0 : index
    %0 = vector.load %arg1[%c0, %c0_0] : memref<8x8xbf16, #tpu.memory_space<vmem>>, vector<8x8xbf16>
    %c0_1 = arith.constant 0 : index
    %c0_2 = arith.constant 0 : index
    %1 = vector.load %arg2[%c0_1, %c0_2] : memref<8x256xbf16, #tpu.memory_space<vmem>>, vector<8x256xbf16>
    %cst = arith.constant dense<0.000000e+00> : vector<8x256xf32>
    %2 = tpu.matmul %0, %1, %cst {dimension_numbers = #tpu.dot_dimension_numbers<[1], [0], [0], [1], [0, 0, 1, 1], [], []>} : vector<8x8xbf16>, vector<8x256xbf16>, vector<8x256xf32> -> vector<8x256xf32>
    %c0_3 = arith.constant 0 : index
    %c0_4 = arith.constant 0 : index
    %3 = vector.load %arg3[%c0_3, %c0_4] : memref<8x1xf32, #tpu.memory_space<vmem>>, vector<8x1xf32>
    %4 = vector.broadcast %3 : vector<8x1xf32> to vector<8x256xf32>
    %5 = arith.addf %2, %4 : vector<8x256xf32>
    %cst_5 = arith.constant 0.000000e+00 : f32
    %6 = vector.broadcast %cst_5 : f32 to vector<8x256xf32>
    %7 = arith.cmpf oge, %5, %6 : vector<8x256xf32>
    %cst_6 = arith.constant 2.500000e-01 : f32
    %8 = vector.broadcast %cst_6 : f32 to vector<8x256xf32>
    %9 = arith.mulf %8, %5 : vector<8x256xf32>
    %10 = arith.select %7, %5, %9 : vector<8x256xi1>, vector<8x256xf32>
    %c0_7 = arith.constant 0 : index
    %c0_8 = arith.constant 0 : index
    %11 = vector.load %arg4[%c0_7, %c0_8] : memref<8x256xf32, #tpu.memory_space<vmem>>, vector<8x256xf32>
    tpu.vector_store %arg4[%c0_7, %c0_8], %10 {strides = array<i32>} : memref<8x256xf32, #tpu.memory_space<vmem>>, vector<8x256xf32>,
    return
  }
  func.func @transform_0(%arg0: i32) -> (i32, i32) {
    %c0_i32 = arith.constant 0 : i32
    %c0_i32_0 = arith.constant 0 : i32
    %c0_i32_1 = arith.constant 0 : i32
    return %c0_i32, %c0_i32_0 : i32, i32
  }
  func.func @transform_1(%arg0: i32) -> (i32, i32) {
    %c0_i32 = arith.constant 0 : i32
    %c0_i32_0 = arith.constant 0 : i32
    return %c0_i32, %arg0 : i32, i32
  }
  func.func @transform_2(%arg0: i32) -> (i32, i32) {
    %c0_i32 = arith.constant 0 : i32
    %c0_i32_0 = arith.constant 0 : i32
    %c0_i32_1 = arith.constant 0 : i32
    return %c0_i32, %c0_i32_0 : i32, i32
  }
  func.func @transform_3(%arg0: i32) -> (i32, i32) {
    %c0_i32 = arith.constant 0 : i32
    %c0_i32_0 = arith.constant 0 : i32
    return %c0_i32, %arg0 : i32, i32
  }
}

module attributes {stable_mosaic.version = 11 : i64} {
  func.func @_gemm_bias_act_kernel(%arg0: i32, %arg1: memref<8x288xbf16, #tpu.memory_space<vmem>>, %arg2: memref<288x256xbf16, #tpu.memory_space<vmem>>, %arg3: memref<8x1xf32, #tpu.memory_space<vmem>>, %arg4: memref<8x256xf32, #tpu.memory_space<vmem>>) attributes {dimension_semantics = [#tpu.dimension_semantics<parallel>], iteration_bounds = array<i64: 2>, scalar_prefetch = 0 : i64, scratch_operands = 0 : i64, tpu.core_type = #tpu.core_type<tc>, window_params = [{pipeline_mode = #tpu.pipeline_mode<synchronous>, transform_indices = @transform_0, window_bounds = array<i64: 8, 288>}, {transform_indices = @transform_1, window_bounds = array<i64: 288, 256>}, {pipeline_mode = #tpu.pipeline_mode<synchronous>, transform_indices = @transform_2, window_bounds = array<i64: 8, 1>}, {transform_indices = @transform_3, window_bounds = array<i64: 8, 256>}]} {
    %c0 = arith.constant 0 : index
    %c0_0 = arith.constant 0 : index
    %0 = vector.load %arg1[%c0, %c0_0] : memref<8x288xbf16, #tpu.memory_space<vmem>>, vector<8x288xbf16>
    %c0_1 = arith.constant 0 : index
    %c0_2 = arith.constant 0 : index
    %1 = vector.load %arg2[%c0_1, %c0_2] : memref<288x256xbf16, #tpu.memory_space<vmem>>, vector<288x256xbf16>
    %cst = arith.constant dense<0.000000e+00> : vector<8x256xf32>
    %2 = tpu.matmul %0, %1, %cst {dimension_numbers = #tpu.dot_dimension_numbers<[1], [0], [0], [1], [0, 0, 1, 1], [], []>} : vector<8x288xbf16>, vector<288x256xbf16>, vector<8x256xf32> -> vector<8x256xf32>
    %c0_3 = arith.constant 0 : index
    %c0_4 = arith.constant 0 : index
    %3 = vector.load %arg3[%c0_3, %c0_4] : memref<8x1xf32, #tpu.memory_space<vmem>>, vector<8x1xf32>
    %4 = vector.broadcast %3 : vector<8x1xf32> to vector<8x256xf32>
    %5 = arith.addf %2, %4 : vector<8x256xf32>
    %cst_5 = arith.constant 0.000000e+00 : f32
    %6 = vector.broadcast %cst_5 : f32 to vector<8x256xf32>
    %7 = arith.cmpf oge, %5, %6 : vector<8x256xf32>
    %cst_6 = arith.constant 2.500000e-01 : f32
    %8 = vector.broadcast %cst_6 : f32 to vector<8x256xf32>
    %9 = arith.mulf %8, %5 : vector<8x256xf32>
    %10 = arith.select %7, %5, %9 : vector<8x256xi1>, vector<8x256xf32>
    %c0_7 = arith.constant 0 : index
    %c0_8 = arith.constant 0 : index
    %11 = vector.load %arg4[%c0_7, %c0_8] : memref<8x256xf32, #tpu.memory_space<vmem>>, vector<8x256xf32>
    tpu.vector_store %arg4[%c0_7, %c0_8], %10 {strides = array<i32>} : memref<8x256xf32, #tpu.memory_space<vmem>>, vector<8x256xf32>,
    return
  }
  func.func @transform_0(%arg0: i32) -> (i32, i32) {
    %c0_i32 = arith.constant 0 : i32
    %c0_i32_0 = arith.constant 0 : i32
    %c0_i32_1 = arith.constant 0 : i32
    return %c0_i32, %c0_i32_0 : i32, i32
  }
  func.func @transform_1(%arg0: i32) -> (i32, i32) {
    %c0_i32 = arith.constant 0 : i32
    %c0_i32_0 = arith.constant 0 : i32
    return %c0_i32, %arg0 : i32, i32
  }
  func.func @transform_2(%arg0: i32) -> (i32, i32) {
    %c0_i32 = arith.constant 0 : i32
    %c0_i32_0 = arith.constant 0 : i32
    %c0_i32_1 = arith.constant 0 : i32
    return %c0_i32, %c0_i32_0 : i32, i32
  }
  func.func @transform_3(%arg0: i32) -> (i32, i32) {
    %c0_i32 = arith.constant 0 : i32
    %c0_i32_0 = arith.constant 0 : i32
    return %c0_i32, %arg0 : i32, i32
  }
}

module attributes {stable_mosaic.version = 11 : i64} {
  func.func @_gemm_bias_act_kernel(%arg0: i32, %arg1: memref<8x9xbf16, #tpu.memory_space<vmem>>, %arg2: memref<9x256xbf16, #tpu.memory_space<vmem>>, %arg3: memref<8x1xf32, #tpu.memory_space<vmem>>, %arg4: memref<8x256xf32, #tpu.memory_space<vmem>>) attributes {dimension_semantics = [#tpu.dimension_semantics<parallel>], iteration_bounds = array<i64: 2>, scalar_prefetch = 0 : i64, scratch_operands = 0 : i64, tpu.core_type = #tpu.core_type<tc>, window_params = [{pipeline_mode = #tpu.pipeline_mode<synchronous>, transform_indices = @transform_0, window_bounds = array<i64: 8, 9>}, {transform_indices = @transform_1, window_bounds = array<i64: 9, 256>}, {pipeline_mode = #tpu.pipeline_mode<synchronous>, transform_indices = @transform_2, window_bounds = array<i64: 8, 1>}, {transform_indices = @transform_3, window_bounds = array<i64: 8, 256>}]} {
    %c0 = arith.constant 0 : index
    %c0_0 = arith.constant 0 : index
    %0 = vector.load %arg1[%c0, %c0_0] : memref<8x9xbf16, #tpu.memory_space<vmem>>, vector<8x9xbf16>
    %c0_1 = arith.constant 0 : index
    %c0_2 = arith.constant 0 : index
    %1 = vector.load %arg2[%c0_1, %c0_2] : memref<9x256xbf16, #tpu.memory_space<vmem>>, vector<9x256xbf16>
    %cst = arith.constant dense<0.000000e+00> : vector<8x256xf32>
    %2 = tpu.matmul %0, %1, %cst {dimension_numbers = #tpu.dot_dimension_numbers<[1], [0], [0], [1], [0, 0, 1, 1], [], []>} : vector<8x9xbf16>, vector<9x256xbf16>, vector<8x256xf32> -> vector<8x256xf32>
    %c0_3 = arith.constant 0 : index
    %c0_4 = arith.constant 0 : index
    %3 = vector.load %arg3[%c0_3, %c0_4] : memref<8x1xf32, #tpu.memory_space<vmem>>, vector<8x1xf32>
    %4 = vector.broadcast %3 : vector<8x1xf32> to vector<8x256xf32>
    %5 = arith.addf %2, %4 : vector<8x256xf32>
    %cst_5 = arith.constant 0.000000e+00 : f32
    %6 = vector.broadcast %cst_5 : f32 to vector<8x256xf32>
    %7 = arith.cmpf oge, %5, %6 : vector<8x256xf32>
    %cst_6 = arith.constant 2.500000e-01 : f32
    %8 = vector.broadcast %cst_6 : f32 to vector<8x256xf32>
    %9 = arith.mulf %8, %5 : vector<8x256xf32>
    %10 = arith.select %7, %5, %9 : vector<8x256xi1>, vector<8x256xf32>
    %c0_7 = arith.constant 0 : index
    %c0_8 = arith.constant 0 : index
    %11 = vector.load %arg4[%c0_7, %c0_8] : memref<8x256xf32, #tpu.memory_space<vmem>>, vector<8x256xf32>
    tpu.vector_store %arg4[%c0_7, %c0_8], %10 {strides = array<i32>} : memref<8x256xf32, #tpu.memory_space<vmem>>, vector<8x256xf32>,
    return
  }
  func.func @transform_0(%arg0: i32) -> (i32, i32) {
    %c0_i32 = arith.constant 0 : i32
    %c0_i32_0 = arith.constant 0 : i32
    %c0_i32_1 = arith.constant 0 : i32
    return %c0_i32, %c0_i32_0 : i32, i32
  }
  func.func @transform_1(%arg0: i32) -> (i32, i32) {
    %c0_i32 = arith.constant 0 : i32
    %c0_i32_0 = arith.constant 0 : i32
    return %c0_i32, %arg0 : i32, i32
  }
  func.func @transform_2(%arg0: i32) -> (i32, i32) {
    %c0_i32 = arith.constant 0 : i32
    %c0_i32_0 = arith.constant 0 : i32
    %c0_i32_1 = arith.constant 0 : i32
    return %c0_i32, %c0_i32_0 : i32, i32
  }
  func.func @transform_3(%arg0: i32) -> (i32, i32) {
    %c0_i32 = arith.constant 0 : i32
    %c0_i32_0 = arith.constant 0 : i32
    return %c0_i32, %arg0 : i32, i32
  }
}

module attributes {stable_mosaic.version = 11 : i64} {
  func.func @_gemm_bias_act_kernel(%arg0: i32, %arg1: memref<8x8xbf16, #tpu.memory_space<vmem>>, %arg2: memref<8x128xbf16, #tpu.memory_space<vmem>>, %arg3: memref<8x1xf32, #tpu.memory_space<vmem>>, %arg4: memref<8x128xf32, #tpu.memory_space<vmem>>) attributes {dimension_semantics = [#tpu.dimension_semantics<parallel>], iteration_bounds = array<i64: 1>, scalar_prefetch = 0 : i64, scratch_operands = 0 : i64, tpu.core_type = #tpu.core_type<tc>, window_params = [{pipeline_mode = #tpu.pipeline_mode<synchronous>, transform_indices = @transform_0, window_bounds = array<i64: 8, 8>}, {transform_indices = @transform_1, window_bounds = array<i64: 8, 128>}, {pipeline_mode = #tpu.pipeline_mode<synchronous>, transform_indices = @transform_2, window_bounds = array<i64: 8, 1>}, {transform_indices = @transform_3, window_bounds = array<i64: 8, 128>}]} {
    %c0 = arith.constant 0 : index
    %c0_0 = arith.constant 0 : index
    %0 = vector.load %arg1[%c0, %c0_0] : memref<8x8xbf16, #tpu.memory_space<vmem>>, vector<8x8xbf16>
    %c0_1 = arith.constant 0 : index
    %c0_2 = arith.constant 0 : index
    %1 = vector.load %arg2[%c0_1, %c0_2] : memref<8x128xbf16, #tpu.memory_space<vmem>>, vector<8x128xbf16>
    %cst = arith.constant dense<0.000000e+00> : vector<8x128xf32>
    %2 = tpu.matmul %0, %1, %cst {dimension_numbers = #tpu.dot_dimension_numbers<[1], [0], [0], [1], [0, 0, 1, 1], [], []>} : vector<8x8xbf16>, vector<8x128xbf16>, vector<8x128xf32> -> vector<8x128xf32>
    %c0_3 = arith.constant 0 : index
    %c0_4 = arith.constant 0 : index
    %3 = vector.load %arg3[%c0_3, %c0_4] : memref<8x1xf32, #tpu.memory_space<vmem>>, vector<8x1xf32>
    %4 = vector.broadcast %3 : vector<8x1xf32> to vector<8x128xf32>
    %5 = arith.addf %2, %4 : vector<8x128xf32>
    %c0_5 = arith.constant 0 : index
    %c0_6 = arith.constant 0 : index
    %6 = vector.load %arg4[%c0_5, %c0_6] : memref<8x128xf32, #tpu.memory_space<vmem>>, vector<8x128xf32>
    tpu.vector_store %arg4[%c0_5, %c0_6], %5 {strides = array<i32>} : memref<8x128xf32, #tpu.memory_space<vmem>>, vector<8x128xf32>,
    return
  }
  func.func @transform_0(%arg0: i32) -> (i32, i32) {
    %c0_i32 = arith.constant 0 : i32
    %c0_i32_0 = arith.constant 0 : i32
    %c0_i32_1 = arith.constant 0 : i32
    return %c0_i32, %c0_i32_0 : i32, i32
  }
  func.func @transform_1(%arg0: i32) -> (i32, i32) {
    %c0_i32 = arith.constant 0 : i32
    %c0_i32_0 = arith.constant 0 : i32
    return %c0_i32, %arg0 : i32, i32
  }
  func.func @transform_2(%arg0: i32) -> (i32, i32) {
    %c0_i32 = arith.constant 0 : i32
    %c0_i32_0 = arith.constant 0 : i32
    %c0_i32_1 = arith.constant 0 : i32
    return %c0_i32, %c0_i32_0 : i32, i32
  }
  func.func @transform_3(%arg0: i32) -> (i32, i32) {
    %c0_i32 = arith.constant 0 : i32
    %c0_i32_0 = arith.constant 0 : i32
    return %c0_i32, %arg0 : i32, i32
  }
}

</mosaic_0001>

<llo_original>
// kernel: forward.77
$region0: #{forward.77}
  #allocation0 [shape = 'u32[]', space=smem, size = 0x4, offset = 0x4, fixed_abs, tag = 'smem constant byte address 0x4 - core index']
  #allocation1 [shape = 'u32[144,128]{1,0:T(1,128)}', space=vmem, size = 0x12000, scoped, tag = 'internal scratch']
  %s0 = inlined_call_operand.hbm [shape: bf16[8,9], index: 0, kind: input, shape index: {}]
  %s1 = inlined_call_operand.vmem [shape: bf16[9,512], index: 1, kind: input, shape index: {}]
  %s2 = inlined_call_operand.vmem [shape: f32[8,1], index: 2, kind: input, shape index: {}]
  %s3 = inlined_call_operand.vmem [shape: f32[8,512], index: 3, kind: output, shape index: {}]
  %s4 = sld [smem:[#allocation0]]
  $region87: #{forward.77} parent=0
    _
  %s6 = ssub.s32 1, %s4
  %s7 = scalar_select 0, %s6, %s4
  $region1: #{forward.77} parent=0
    #allocation2 [shape = 'u8[2048]{0}', space=vmem, size = 0x800, scoped, tag = 'input window, operand 0, single buffered']
    #allocation3 [shape = 's32[2]{0}', space=sflag, size = 0x8, scoped, tag = 'scoped memory for forward.77']
    #allocation4 [shape = 'u8[16384]{0}', space=vmem, size = 0x4000, scoped, tag = 'input window, operand 1']
    %8 = vsyncpa [#allocation3], 0
    loop: start=0, step=1, limit=4
    $region2: #{forward.77} parent=1 // loop_pre_header
      _
    $region3: #{forward.77} parent=1 // loop_header
      %s10 = sphi 0, %s14
      %p11 = scmp.ge.s32.totalorder %s10, 4
      %s18 = sphi 0, %s18
      %s20 = sphi 0, %s18
      %s21 = sphi 0, %s20
      %s35 = sphi 0, %s21
      %s41 = sphi 0, %s43
      %s44 = sphi 0, %s41
      %s45 = sphi 0, %s44
      %s61 = sphi 0, %s45
      %s65 = sphi 0, %s65
      %s67 = sphi 0, %s65
      %s68 = sphi 0, %s67
      %s82 = sphi 0, %s68
      %s88 = sphi 0, %s90
      %s91 = sphi 0, %s88
      %s92 = sphi 0, %s91
      %s108 = sphi 0, %s92
    $region4: #{forward.77} parent=1 // loop_header_branch
      %13 = sbr.rel (%p11) target = $region8
    $region5: #{forward.77} parent=1 // loop_body
      %s15 = ssub.s32 %s10, 1
      %s16 = ssub.s32 %s10, 2
      %s17 = sadd.s32 %s10, 1
      %s19 = sadd.s32 %s18, 1
      %p22 = scmp.eq.s32.totalorder %s10, 1
      %p23 = scmp.ne.s32.totalorder %s18, %s20
      %p24 = scmp.eq.s32.totalorder %s10, 0
      %p25 = por %p23, %p24
      %p26 = scmp.ne.s32.totalorder %s18, %s20
      %p27 = scmp.eq.s32.totalorder %s15, 1
      %p28 = por %p26, %p27
      %p29 = scmp.ne.s32.totalorder %s20, %s21
      %p30 = scmp.eq.s32.totalorder %s15, 0
      %p31 = por %p29, %p30
      %p32 = scmp.ne.s32.totalorder %s20, %s21
      %p33 = scmp.eq.s32.totalorder %s16, 1
      %p34 = por %p32, %p33
      %p36 = scmp.ne.s32.totalorder %s21, %s35
      %p37 = scmp.eq.s32.totalorder %s16, 0
      %p38 = por %p36, %p37
      %s39 = ssub.s32 %s10, %s17
      %p40 = scmp.eq.s32.totalorder %s39, 0
      %s42 = sadd.s32 %s41, 1
      %s43 = scalar_select %p40, %s41, %s42
      %p46 = pneg %p40
      %p47 = scmp.eq.s32.totalorder %s10, 1
      %p48 = por %p46, %p47
      %p49 = scmp.ne.s32.totalorder %s41, %s44
      %p50 = scmp.eq.s32.totalorder %s10, 0
      %p51 = por %p49, %p50
      %p52 = scmp.ne.s32.totalorder %s41, %s44
      %p53 = scmp.eq.s32.totalorder %s15, 1
      %p54 = por %p52, %p53
      %p55 = scmp.ne.s32.totalorder %s44, %s45
      %p56 = scmp.eq.s32.totalorder %s15, 0
      %p57 = por %p55, %p56
      %p58 = scmp.ne.s32.totalorder %s44, %s45
      %p59 = scmp.eq.s32.totalorder %s16, 1
      %p60 = por %p58, %p59
      %p62 = scmp.ne.s32.totalorder %s45, %s61
      %p63 = scmp.eq.s32.totalorder %s16, 0
      %p64 = por %p62, %p63
      %s66 = sadd.s32 %s65, 1
      %p69 = scmp.eq.s32.totalorder %s10, 1
      %p70 = scmp.ne.s32.totalorder %s65, %s67
      %p71 = scmp.eq.s32.totalorder %s10, 0
      %p72 = por %p70, %p71
      %p73 = scmp.ne.s32.totalorder %s65, %s67
      %p74 = scmp.eq.s32.totalorder %s15, 1
      %p75 = por %p73, %p74
      %p76 = scmp.ne.s32.totalorder %s67, %s68
      %p77 = scmp.eq.s32.totalorder %s15, 0
      %p78 = por %p76, %p77
      %p79 = scmp.ne.s32.totalorder %s67, %s68
      %p80 = scmp.eq.s32.totalorder %s16, 1
      %p81 = por %p79, %p80
      %p83 = scmp.ne.s32.totalorder %s68, %s82
      %p84 = scmp.eq.s32.totalorder %s16, 0
      %p85 = por %p83, %p84
      %s86 = ssub.s32 %s10, %s17
      %p87 = scmp.eq.s32.totalorder %s86, 0
      %s89 = sadd.s32 %s88, 1
      %s90 = scalar_select %p87, %s88, %s89
      %p93 = pneg %p87
      %p94 = scmp.eq.s32.totalorder %s10, 1
      %p95 = por %p93, %p94
      %p96 = scmp.ne.s32.totalorder %s88, %s91
      %p97 = scmp.eq.s32.totalorder %s10, 0
      %p98 = por %p96, %p97
      %p99 = scmp.ne.s32.totalorder %s88, %s91
      %p100 = scmp.eq.s32.totalorder %s15, 1
      %p101 = por %p99, %p100
      %p102 = scmp.ne.s32.totalorder %s91, %s92
      %p103 = scmp.eq.s32.totalorder %s15, 0
      %p104 = por %p102, %p103
      %p105 = scmp.ne.s32.totalorder %s91, %s92
      %p106 = scmp.eq.s32.totalorder %s16, 1
      %p107 = por %p105, %p106
      %p109 = scmp.ne.s32.totalorder %s92, %s108
      %p110 = scmp.eq.s32.totalorder %s16, 0
      %p111 = por %p109, %p110
      %p112 = scmp.le.s32.totalorder 1, %s10
      %p113 = scmp.lt.s32.totalorder %s10, 3
      %p114 = pnand %p112, %p113
      %p115 = pneg %p114
      // Predicated region
      $region9: #{forward.77} parent=5 // pred_check
        _
      $region10: #{forward.77} parent=5 // pred_check_branch
        %117 = sbr.rel (%p114) target = $region12
      $region11: #{forward.77} parent=5 // pred_region
        %s118 = ssub.s32 %s10, 1
        // Predicated region
        $region13: #{forward.77} parent=11 // pred_check
          %p119 = pneg %p31
        $region14: #{forward.77} parent=11 // pred_check_branch
          %121 = sbr.rel (%p119) target = $region16
        $region15: #{forward.77} parent=11 // pred_region
          %s123 = ssub.s32 64, 64
          %124 = vsyncadd [#allocation3], %s123
          %s126 = sshll.u32 [#allocation2], 4
          %s127 = int_to_ptr.vmem [resolvable:$true] %s126
          %129 = dma.hbm_to_vmem [thread:$0]  %s0, 64, %s127, [#allocation3]
        $region16: #{forward.77} parent=11 // pred_fallthru
          _
        // Predicated region
        $region17: #{forward.77} parent=11 // pred_check
          %p130 = pneg %p78
        $region18: #{forward.77} parent=11 // pred_check_branch
          %132 = sbr.rel (%p130) target = $region20
        $region19: #{forward.77} parent=11 // pred_region
          _
        $region20: #{forward.77} parent=11 // pred_fallthru
          _
      $region12: #{forward.77} parent=5 // pred_fallthru
        _
      %p133 = scmp.lt.s32.totalorder %s10, 2
      // Predicated region
      $region21: #{forward.77} parent=5 // pred_check
        %p134 = pneg %p133
      $region22: #{forward.77} parent=5 // pred_check_branch
        %136 = sbr.rel (%p134) target = $region24
      $region23: #{forward.77} parent=5 // pred_region
        // Predicated region
        $region25: #{forward.77} parent=23 // pred_check
          %p137 = pneg %p51
        $region26: #{forward.77} parent=23 // pred_check_branch
          %139 = sbr.rel (%p137) target = $region28
        $region27: #{forward.77} parent=23 // pred_region
          %s140 = sand.u32 %s41, 1
          %s141 = sand.u32 %s41, 1
          %s142 = smul.addr %s141, 16
          %s143 = scalar_lea.vmem [#allocation4], %s142
          %s144 = smul.u32 2, %s10
          %s145 = smul.addr %s144, 4
          %s146 = scalar_lea.vmem %s1, %s145
          // Predicated region
          $region29: #{forward.77} parent=27 // pred_check
            _
          $region30: #{forward.77} parent=27 // pred_check_branch
            %148 = sbr.rel (0) target = $region32
          $region31: #{forward.77} parent=27 // pred_region
            // Predicated region
            $region33: #{forward.77} parent=31 // pred_check
              _
            $region34: #{forward.77} parent=31 // pred_check_branch
              %150 = sbr.rel (0) target = $region36
            $region35: #{forward.77} parent=31 // pred_region
              // Predicated region
              $region48: #{forward.77} parent=35 // pred_check
                _
              $region49: #{forward.77} parent=35 // pred_check_branch
                %167 = sbr.rel (0) target = $region51
              $region50: #{forward.77} parent=35 // pred_region
                loop: start=0, step=1, limit=1
                $region52: #{forward.77} parent=50 // loop_pre_header
                  _
                $region53: #{forward.77} parent=50 // loop_header
                  %s169 = sphi 0, %s173
                  %p170 = scmp.ge.s32.totalorder %s169, 1
                  %s174 = sphi %s146, %s146
                  %s175 = sphi %s143, %s143
                $region54: #{forward.77} parent=50 // loop_header_branch
                  %172 = sbr.rel (%p170) target = $region58
                $region55: #{forward.77} parent=50 // loop_body
                  %v176 = vld [vmem:[%s174] sm:$0xff]
                  %177 = vst [vmem:[%s175] sm:$0xff] %v176
                  %v178 = vld [vmem:[%s174 + $0x10] sm:$0xff]
                  %179 = vst [vmem:[%s175 + $0x8] sm:$0xff] %v178
                $region56: #{forward.77} parent=50 // loop_footer
                  %s173 = sadd.s32 1, %s169
                $region57: #{forward.77} parent=50 // loop_footer_branch
                  %168 = sbr.rel target = $region53
                $region58: #{forward.77} parent=50 // loop_exit
                  _
              $region51: #{forward.77} parent=35 // pred_fallthru
                _
              // Predicated region
              $region59: #{forward.77} parent=35 // pred_check
                _
              $region60: #{forward.77} parent=35 // pred_check_branch
                %181 = sbr.rel target = $region62
              $region61: #{forward.77} parent=35 // pred_region
                _
              $region62: #{forward.77} parent=35 // pred_fallthru
                _
            $region36: #{forward.77} parent=31 // pred_fallthru
              _
            // Predicated region
            $region37: #{forward.77} parent=31 // pred_check
              _
            $region38: #{forward.77} parent=31 // pred_check_branch
              %152 = sbr.rel target = $region40
            $region39: #{forward.77} parent=31 // pred_region
              loop: start=0, step=1, limit=1
              $region41: #{forward.77} parent=39 // loop_pre_header
                _
              $region42: #{forward.77} parent=39 // loop_header
                %s155 = sphi 0, %s159
                %p156 = scmp.ge.s32.totalorder %s155, 1
                %s160 = sphi %s146, %s146
                %s161 = sphi %s143, %s143
              $region43: #{forward.77} parent=39 // loop_header_branch
                %158 = sbr.rel (%p156) target = $region47
              $region44: #{forward.77} parent=39 // loop_body
                %v162 = vld [vmem:[%s160] sm:$0xff]
                %163 = vst [vmem:[%s161] sm:$0xff] %v162
                %v164 = vld [vmem:[%s160 + $0x10] sm:$0xff]
                %165 = vst [vmem:[%s161 + $0x8] sm:$0xff] %v164
              $region45: #{forward.77} parent=39 // loop_footer
                %s159 = sadd.s32 1, %s155
              $region46: #{forward.77} parent=39 // loop_footer_branch
                %154 = sbr.rel target = $region42
              $region47: #{forward.77} parent=39 // loop_exit
                _
            $region40: #{forward.77} parent=31 // pred_fallthru
              _
          $region32: #{forward.77} parent=27 // pred_fallthru
            _
          %182 = vnop
        $region28: #{forward.77} parent=23 // pred_fallthru
          _
      $region24: #{forward.77} parent=5 // pred_fallthru
        _
      %p183 = scmp.le.s32.totalorder 1, %s10
      %p184 = scmp.lt.s32.totalorder %s10, 3
      %p185 = pnand %p183, %p184
      %p186 = pneg %p185
      // Predicated region
      $region63: #{forward.77} parent=5 // pred_check
        _
      $region64: #{forward.77} parent=5 // pred_check_branch
        %188 = sbr.rel (%p185) target = $region66
      $region65: #{forward.77} parent=5 // pred_region
        %s189 = ssub.s32 %s10, 1
        // Predicated region
        $region67: #{forward.77} parent=65 // pred_check
          %p190 = pneg %p31
        $region68: #{forward.77} parent=65 // pred_check_branch
          %192 = sbr.rel (%p190) target = $region70
        $region69: #{forward.77} parent=65 // pred_region
          %193 = dma.done [#allocation3], 64
        $region70: #{forward.77} parent=65 // pred_fallthru
          _
        %s194 = sand.u32 %s44, 1
        %s195 = sand.u32 %s44, 1
        %s196 = smul.addr %s195, 16
        %s197 = scalar_lea.vmem [#allocation4], %s196
        // Predicated region
        $region71: #{forward.77} parent=65 // pred_check
          %p198 = pneg %p57
        $region72: #{forward.77} parent=65 // pred_check_branch
          %200 = sbr.rel (%p198) target = $region74
        $region73: #{forward.77} parent=65 // pred_region
          _
        $region74: #{forward.77} parent=65 // pred_fallthru
          _
        %p201 = pneg %p31
        %p202 = pneg %p28
        %s203 = sand.u32 %s44, 1
        %s204 = sand.u32 %s44, 1
        %s205 = smul.addr %s204, 16
        %s206 = scalar_lea.vmem [#allocation4], %s205
        %p207 = pneg %p57
        %p208 = pneg %p54
        %p209 = pneg %p78
        %p210 = pneg %p75
        %p211 = pneg %p104
        %p212 = pneg %p101
        %s213 = smul.u32 2, %s15
        %p214 = scmp.lt.s32.totalorder %s213, 3
        %s215 = scalar_select %p214, %s213, 3
        %s216 = smul.addr %s215, 8
        %s217 = scalar_lea.vmem %s3, %s216
        %s218 = smul.u32 2, %s15
        %s219 = smul.u32 2, %s15
        %p220 = scmp.lt.s32.totalorder %s219, 3
        %s221 = scalar_select %p220, %s219, 3
        %s222 = smul.addr %s221, 8
        %s223 = scalar_lea.vmem %s3, %s222
        %s224 = smul.u32 2, %s15
        %v226 = vld [vmem:[#allocation2] sm:$0xf]
        %v227 = vld [vmem:[%s197] sm:$0xff]
        %v228 = vld [vmem:[%s197 + $0x8] sm:$0x11]
        %v229 = vld [vmem:[%s2] sm:$0xff]
        %231 = vset.pattern.permute.xlu0 0
        %232 = vperm.xlu0 %231, %v229
        %v233 = vpop.permute.xlu0 %232
        %v237 = vunpack.c.l.b16 %v227
        %v238 = vunpack.c.h.b16 %v227
        %v239 = vunpack.c.l.b16 %v228
        %v240 = vunpack.c.h.b16 %v228
        %v241 = vpack.c.b16 %v239, %v237
        %v242 = vpack.c.b16 %v240, %v238
        %vm243 = vcmask 72704
        %v245 = vsel %vm243, %v226, 0
        %vm247 = vcmask 1043456
        %vm248 = vcmask 1044480
        %v249 = vsel %vm247, 4294967295, 65535
        %v250 = vsel %vm248, %v249, 0
        %v252 = vand.u32 %v241, %v250
        %v255 = vand.u32 %v242, %v250
        %257 = vmatprep.subr.bf16.mxu0 %v255
        %258 = vmatpush1.bf16.msra.mxu0 %v252
        %259 = vmatprep.subr.bf16.mxu0 0
        %260 = vmatpush1.bf16.msra.mxu0 0
        %261 = vmatprep.subr.bf16.mxu0 0
        %262 = vmatpush1.bf16.msra.mxu0 0
        %263 = vmatprep.subr.bf16.mxu0 0
        %264 = vmatpush1.bf16.msra.mxu0 0
        %265 = vmatprep.subr.bf16.mxu0 0
        %266 = vmatpush1.bf16.msra.mxu0 0
        %267 = vmatprep.subr.bf16.mxu0 0
        %268 = vmatpush1.bf16.msra.mxu0 0
        %269 = vmatprep.subr.bf16.mxu0 0
        %270 = vmatpush1.bf16.msra.mxu0 0
        %271 = vmatprep.subr.bf16.mxu0 0
        %272 = vmatpush1.bf16.msra.mxu0 0
        %273 = vmatprep.subr.bf16.mxu0 0
        %274 = vmatpush1.bf16.msra.mxu0 0
        %275 = vmatprep.subr.bf16.mxu0 0
        %276 = vmatpush1.bf16.msra.mxu0 0
        %277 = vmatprep.subr.bf16.mxu0 0
        %278 = vmatpush1.bf16.msra.mxu0 0
        %279 = vmatprep.subr.bf16.mxu0 0
        %280 = vmatpush1.bf16.msra.mxu0 0
        %281 = vmatprep.subr.bf16.mxu0 0
        %282 = vmatpush1.bf16.msra.mxu0 0
        %283 = vmatprep.subr.bf16.mxu0 0
        %284 = vmatpush1.bf16.msra.mxu0 0
        %285 = vmatprep.subr.bf16.mxu0 0
        %286 = vmatpush1.bf16.msra.mxu0 0
        %287 = vmatprep.subr.bf16.mxu0 0
        %288 = vmatpush1.bf16.msra.mxu0 0
        %289 = vmatprep.mubr.bf16.mxu0 0
        %290 = vmatmul.mubr.bf16.gmra.mrb[0].mxu0 %v245
        %v291 = vpop.f32.mrb[0].mxu0
        %v292 = vadd.f32 %v233, %v291
        %v293 = vpop.f32.mrb[0].mxu0
        %v294 = vadd.f32 %v233, %v293
        %v295 = vpop.f32.mrb[0].mxu0
        %v296 = vpop.f32.mrb[0].mxu0
        %297 = vdwg.mxu0
        %vm298 = vcmp.ge.f32.partialorder %v292, 0.0
        %vm299 = vcmp.ge.f32.partialorder %v294, 0.0
        %v300 = vmul.f32 %v292, 0.25
        %v301 = vmul.f32 %v294, 0.25
        %v302 = vsel %vm298, %v292, %v300
        %v303 = vsel %vm299, %v294, %v301
        %304 = vst [vmem:[%s223] sm:$0xff] %v302
        %305 = vst [vmem:[%s223 + $0x8] sm:$0xff] %v303
        %s306 = smul.u32 2, %s15
        %p307 = scmp.lt.s32.totalorder %s306, 3
        %s308 = scalar_select %p307, %s306, 3
        %s309 = smul.addr %s308, 8
        %s310 = scalar_lea.vmem %s3, %s309
        // Predicated region
        $region75: #{forward.77} parent=65 // pred_check
          %p311 = pneg %p101
        $region76: #{forward.77} parent=65 // pred_check_branch
          %313 = sbr.rel (%p311) target = $region78
        $region77: #{forward.77} parent=65 // pred_region
          %s314 = smul.u32 2, %s15
        $region78: #{forward.77} parent=65 // pred_fallthru
          _
      $region66: #{forward.77} parent=5 // pred_fallthru
        _
      %p315 = scmp.le.s32.totalorder 2, %s10
      // Predicated region
      $region79: #{forward.77} parent=5 // pred_check
        %p316 = pneg %p315
      $region80: #{forward.77} parent=5 // pred_check_branch
        %318 = sbr.rel (%p316) target = $region82
      $region81: #{forward.77} parent=5 // pred_region
        %s319 = ssub.s32 %s10, 2
        // Predicated region
        $region83: #{forward.77} parent=81 // pred_check
          %p320 = pneg %p107
        $region84: #{forward.77} parent=81 // pred_check_branch
          %322 = sbr.rel (%p320) target = $region86
        $region85: #{forward.77} parent=81 // pred_region
          %s323 = smul.u32 2, %s16
          %p324 = scmp.lt.s32.totalorder %s323, 3
          %s325 = scalar_select %p324, %s323, 3
          %s326 = smul.addr %s325, 8
          %s327 = scalar_lea.vmem %s3, %s326
        $region86: #{forward.77} parent=81 // pred_fallthru
          _
      $region82: #{forward.77} parent=5 // pred_fallthru
        _
    $region6: #{forward.77} parent=1 // loop_footer
      %s14 = sadd.s32 1, %s10
    $region7: #{forward.77} parent=1 // loop_footer_branch
      %9 = sbr.rel target = $region3
    $region8: #{forward.77} parent=1 // loop_exit
      _
    %328 = vsyncpa [#allocation3], 1
    %s329 = scalar_lea.sflag [#allocation3], 1
    %330 = vsyncpa %s329, 1

// kernel: forward.78
$region0: #{forward.78}
  #allocation0 [shape = 'u32[]', space=smem, size = 0x4, offset = 0x4, fixed_abs, tag = 'smem constant byte address 0x4 - core index']
  #allocation1 [shape = 'u32[144,128]{1,0:T(1,128)}', space=vmem, size = 0x12000, scoped, tag = 'internal scratch']
  %s0 = inlined_call_operand.hbm [shape: bf16[8,8], index: 0, kind: input, shape index: {}]
  %s1 = inlined_call_operand.vmem [shape: bf16[8,512], index: 1, kind: input, shape index: {}]
  %s2 = inlined_call_operand.vmem [shape: f32[8,1], index: 2, kind: input, shape index: {}]
  %s3 = inlined_call_operand.vmem [shape: f32[8,512], index: 3, kind: output, shape index: {}]
  %s4 = sld [smem:[#allocation0]]
  $region49: #{forward.78} parent=0
    _
  %s6 = ssub.s32 1, %s4
  %s7 = scalar_select 0, %s6, %s4
  $region1: #{forward.78} parent=0
    #allocation2 [shape = 'u8[2048]{0}', space=vmem, size = 0x800, scoped, tag = 'input window, operand 0, single buffered']
    #allocation3 [shape = 's32[2]{0}', space=sflag, size = 0x8, scoped, tag = 'scoped memory for forward.78']
    %8 = vsyncpa [#allocation3], 0
    loop: start=0, step=1, limit=4
    $region2: #{forward.78} parent=1 // loop_pre_header
      _
    $region3: #{forward.78} parent=1 // loop_header
      %s10 = sphi 0, %s14
      %p11 = scmp.ge.s32.totalorder %s10, 4
      %s18 = sphi 0, %s18
      %s20 = sphi 0, %s18
      %s21 = sphi 0, %s20
      %s35 = sphi 0, %s21
      %s41 = sphi 0, %s43
      %s44 = sphi 0, %s41
      %s45 = sphi 0, %s44
      %s61 = sphi 0, %s45
      %s65 = sphi 0, %s65
      %s67 = sphi 0, %s65
      %s68 = sphi 0, %s67
      %s82 = sphi 0, %s68
      %s88 = sphi 0, %s90
      %s91 = sphi 0, %s88
      %s92 = sphi 0, %s91
      %s108 = sphi 0, %s92
    $region4: #{forward.78} parent=1 // loop_header_branch
      %13 = sbr.rel (%p11) target = $region8
    $region5: #{forward.78} parent=1 // loop_body
      %s15 = ssub.s32 %s10, 1
      %s16 = ssub.s32 %s10, 2
      %s17 = sadd.s32 %s10, 1
      %s19 = sadd.s32 %s18, 1
      %p22 = scmp.eq.s32.totalorder %s10, 1
      %p23 = scmp.ne.s32.totalorder %s18, %s20
      %p24 = scmp.eq.s32.totalorder %s10, 0
      %p25 = por %p23, %p24
      %p26 = scmp.ne.s32.totalorder %s18, %s20
      %p27 = scmp.eq.s32.totalorder %s15, 1
      %p28 = por %p26, %p27
      %p29 = scmp.ne.s32.totalorder %s20, %s21
      %p30 = scmp.eq.s32.totalorder %s15, 0
      %p31 = por %p29, %p30
      %p32 = scmp.ne.s32.totalorder %s20, %s21
      %p33 = scmp.eq.s32.totalorder %s16, 1
      %p34 = por %p32, %p33
      %p36 = scmp.ne.s32.totalorder %s21, %s35
      %p37 = scmp.eq.s32.totalorder %s16, 0
      %p38 = por %p36, %p37
      %s39 = ssub.s32 %s10, %s17
      %p40 = scmp.eq.s32.totalorder %s39, 0
      %s42 = sadd.s32 %s41, 1
      %s43 = scalar_select %p40, %s41, %s42
      %p46 = pneg %p40
      %p47 = scmp.eq.s32.totalorder %s10, 1
      %p48 = por %p46, %p47
      %p49 = scmp.ne.s32.totalorder %s41, %s44
      %p50 = scmp.eq.s32.totalorder %s10, 0
      %p51 = por %p49, %p50
      %p52 = scmp.ne.s32.totalorder %s41, %s44
      %p53 = scmp.eq.s32.totalorder %s15, 1
      %p54 = por %p52, %p53
      %p55 = scmp.ne.s32.totalorder %s44, %s45
      %p56 = scmp.eq.s32.totalorder %s15, 0
      %p57 = por %p55, %p56
      %p58 = scmp.ne.s32.totalorder %s44, %s45
      %p59 = scmp.eq.s32.totalorder %s16, 1
      %p60 = por %p58, %p59
      %p62 = scmp.ne.s32.totalorder %s45, %s61
      %p63 = scmp.eq.s32.totalorder %s16, 0
      %p64 = por %p62, %p63
      %s66 = sadd.s32 %s65, 1
      %p69 = scmp.eq.s32.totalorder %s10, 1
      %p70 = scmp.ne.s32.totalorder %s65, %s67
      %p71 = scmp.eq.s32.totalorder %s10, 0
      %p72 = por %p70, %p71
      %p73 = scmp.ne.s32.totalorder %s65, %s67
      %p74 = scmp.eq.s32.totalorder %s15, 1
      %p75 = por %p73, %p74
      %p76 = scmp.ne.s32.totalorder %s67, %s68
      %p77 = scmp.eq.s32.totalorder %s15, 0
      %p78 = por %p76, %p77
      %p79 = scmp.ne.s32.totalorder %s67, %s68
      %p80 = scmp.eq.s32.totalorder %s16, 1
      %p81 = por %p79, %p80
      %p83 = scmp.ne.s32.totalorder %s68, %s82
      %p84 = scmp.eq.s32.totalorder %s16, 0
      %p85 = por %p83, %p84
      %s86 = ssub.s32 %s10, %s17
      %p87 = scmp.eq.s32.totalorder %s86, 0
      %s89 = sadd.s32 %s88, 1
      %s90 = scalar_select %p87, %s88, %s89
      %p93 = pneg %p87
      %p94 = scmp.eq.s32.totalorder %s10, 1
      %p95 = por %p93, %p94
      %p96 = scmp.ne.s32.totalorder %s88, %s91
      %p97 = scmp.eq.s32.totalorder %s10, 0
      %p98 = por %p96, %p97
      %p99 = scmp.ne.s32.totalorder %s88, %s91
      %p100 = scmp.eq.s32.totalorder %s15, 1
      %p101 = por %p99, %p100
      %p102 = scmp.ne.s32.totalorder %s91, %s92
      %p103 = scmp.eq.s32.totalorder %s15, 0
      %p104 = por %p102, %p103
      %p105 = scmp.ne.s32.totalorder %s91, %s92
      %p106 = scmp.eq.s32.totalorder %s16, 1
      %p107 = por %p105, %p106
      %p109 = scmp.ne.s32.totalorder %s92, %s108
      %p110 = scmp.eq.s32.totalorder %s16, 0
      %p111 = por %p109, %p110
      %p112 = scmp.le.s32.totalorder 1, %s10
      %p113 = scmp.lt.s32.totalorder %s10, 3
      %p114 = pnand %p112, %p113
      %p115 = pneg %p114
      // Predicated region
      $region9: #{forward.78} parent=5 // pred_check
        _
      $region10: #{forward.78} parent=5 // pred_check_branch
        %117 = sbr.rel (%p114) target = $region12
      $region11: #{forward.78} parent=5 // pred_region
        %s118 = ssub.s32 %s10, 1
        // Predicated region
        $region13: #{forward.78} parent=11 // pred_check
          %p119 = pneg %p31
        $region14: #{forward.78} parent=11 // pred_check_branch
          %121 = sbr.rel (%p119) target = $region16
        $region15: #{forward.78} parent=11 // pred_region
          %s123 = ssub.s32 64, 64
          %124 = vsyncadd [#allocation3], %s123
          %s126 = sshll.u32 [#allocation2], 4
          %s127 = int_to_ptr.vmem [resolvable:$true] %s126
          %129 = dma.hbm_to_vmem [thread:$0]  %s0, 64, %s127, [#allocation3]
        $region16: #{forward.78} parent=11 // pred_fallthru
          _
        // Predicated region
        $region17: #{forward.78} parent=11 // pred_check
          %p130 = pneg %p78
        $region18: #{forward.78} parent=11 // pred_check_branch
          %132 = sbr.rel (%p130) target = $region20
        $region19: #{forward.78} parent=11 // pred_region
          _
        $region20: #{forward.78} parent=11 // pred_fallthru
          _
      $region12: #{forward.78} parent=5 // pred_fallthru
        _
      %p133 = scmp.lt.s32.totalorder %s10, 2
      // Predicated region
      $region21: #{forward.78} parent=5 // pred_check
        %p134 = pneg %p133
      $region22: #{forward.78} parent=5 // pred_check_branch
        %136 = sbr.rel (%p134) target = $region24
      $region23: #{forward.78} parent=5 // pred_region
        // Predicated region
        $region25: #{forward.78} parent=23 // pred_check
          %p137 = pneg %p51
        $region26: #{forward.78} parent=23 // pred_check_branch
          %139 = sbr.rel (%p137) target = $region28
        $region27: #{forward.78} parent=23 // pred_region
          %s140 = smul.u32 2, %s10
          %p141 = scmp.lt.s32.totalorder %s140, 3
          %s142 = scalar_select %p141, %s140, 3
          %s143 = smul.addr %s142, 4
          %s144 = scalar_lea.vmem %s1, %s143
          %s145 = smul.u32 2, %s10
        $region28: #{forward.78} parent=23 // pred_fallthru
          _
      $region24: #{forward.78} parent=5 // pred_fallthru
        _
      %p146 = scmp.le.s32.totalorder 1, %s10
      %p147 = scmp.lt.s32.totalorder %s10, 3
      %p148 = pnand %p146, %p147
      %p149 = pneg %p148
      // Predicated region
      $region29: #{forward.78} parent=5 // pred_check
        _
      $region30: #{forward.78} parent=5 // pred_check_branch
        %151 = sbr.rel (%p148) target = $region32
      $region31: #{forward.78} parent=5 // pred_region
        %s152 = ssub.s32 %s10, 1
        // Predicated region
        $region33: #{forward.78} parent=31 // pred_check
          %p153 = pneg %p31
        $region34: #{forward.78} parent=31 // pred_check_branch
          %155 = sbr.rel (%p153) target = $region36
        $region35: #{forward.78} parent=31 // pred_region
          %156 = dma.done [#allocation3], 64
        $region36: #{forward.78} parent=31 // pred_fallthru
          _
        %p157 = pneg %p31
        %p158 = pneg %p28
        %s159 = smul.u32 2, %s15
        %p160 = scmp.lt.s32.totalorder %s159, 3
        %s161 = scalar_select %p160, %s159, 3
        %s162 = smul.addr %s161, 4
        %s163 = scalar_lea.vmem %s1, %s162
        %p164 = pneg %p57
        %p165 = pneg %p54
        %p166 = pneg %p78
        %p167 = pneg %p75
        %p168 = pneg %p104
        %p169 = pneg %p101
        %s170 = smul.u32 2, %s15
        %p171 = scmp.lt.s32.totalorder %s170, 3
        %s172 = scalar_select %p171, %s170, 3
        %s173 = smul.addr %s172, 8
        %s174 = scalar_lea.vmem %s3, %s173
        %s175 = smul.u32 2, %s15
        %p176 = scmp.lt.s32.totalorder %s175, 3
        %s177 = scalar_select %p176, %s175, 3
        %s178 = smul.addr %s177, 4
        %s179 = scalar_lea.vmem %s1, %s178
        %s180 = smul.u32 2, %s15
        %s181 = smul.u32 2, %s15
        %p182 = scmp.lt.s32.totalorder %s181, 3
        %s183 = scalar_select %p182, %s181, 3
        %s184 = smul.addr %s183, 8
        %s185 = scalar_lea.vmem %s3, %s184
        %s186 = smul.u32 2, %s15
        %v188 = vld [vmem:[#allocation2] sm:$0xf]
        %v189 = vld [vmem:[%s179] sm:$0xff]
        %v190 = vld [vmem:[%s2] sm:$0xff]
        %192 = vset.pattern.permute.xlu0 0
        %193 = vperm.xlu0 %192, %v190
        %v194 = vpop.permute.xlu0 %193
        %v197 = vunpack.c.l.b16 %v189
        %v198 = vunpack.c.h.b16 %v189
        %v199 = vpack.c.b16 %v197, %v197
        %v200 = vpack.c.b16 %v198, %v198
        %vm201 = vcmask 64512
        %v203 = vsel %vm201, %v188, 0
        %vm205 = vcmask 1043456
        %v207 = vsel %vm205, %v199, 0
        %v210 = vsel %vm205, %v200, 0
        %212 = vmatprep.subr.bf16.mxu0 %v210
        %213 = vmatpush1.bf16.msra.mxu0 %v207
        %214 = vmatprep.subr.bf16.mxu0 0
        %215 = vmatpush1.bf16.msra.mxu0 0
        %216 = vmatprep.subr.bf16.mxu0 0
        %217 = vmatpush1.bf16.msra.mxu0 0
        %218 = vmatprep.subr.bf16.mxu0 0
        %219 = vmatpush1.bf16.msra.mxu0 0
        %220 = vmatprep.subr.bf16.mxu0 0
        %221 = vmatpush1.bf16.msra.mxu0 0
        %222 = vmatprep.subr.bf16.mxu0 0
        %223 = vmatpush1.bf16.msra.mxu0 0
        %224 = vmatprep.subr.bf16.mxu0 0
        %225 = vmatpush1.bf16.msra.mxu0 0
        %226 = vmatprep.subr.bf16.mxu0 0
        %227 = vmatpush1.bf16.msra.mxu0 0
        %228 = vmatprep.subr.bf16.mxu0 0
        %229 = vmatpush1.bf16.msra.mxu0 0
        %230 = vmatprep.subr.bf16.mxu0 0
        %231 = vmatpush1.bf16.msra.mxu0 0
        %232 = vmatprep.subr.bf16.mxu0 0
        %233 = vmatpush1.bf16.msra.mxu0 0
        %234 = vmatprep.subr.bf16.mxu0 0
        %235 = vmatpush1.bf16.msra.mxu0 0
        %236 = vmatprep.subr.bf16.mxu0 0
        %237 = vmatpush1.bf16.msra.mxu0 0
        %238 = vmatprep.subr.bf16.mxu0 0
        %239 = vmatpush1.bf16.msra.mxu0 0
        %240 = vmatprep.subr.bf16.mxu0 0
        %241 = vmatpush1.bf16.msra.mxu0 0
        %242 = vmatprep.subr.bf16.mxu0 0
        %243 = vmatpush1.bf16.msra.mxu0 0
        %244 = vmatprep.mubr.bf16.mxu0 0
        %245 = vmatmul.mubr.bf16.gmra.mrb[0].mxu0 %v203
        %v246 = vpop.f32.mrb[0].mxu0
        %v247 = vadd.f32 %v194, %v246
        %v248 = vpop.f32.mrb[0].mxu0
        %v249 = vadd.f32 %v194, %v248
        %v250 = vpop.f32.mrb[0].mxu0
        %v251 = vpop.f32.mrb[0].mxu0
        %252 = vdwg.mxu0
        %vm253 = vcmp.ge.f32.partialorder %v247, 0.0
        %vm254 = vcmp.ge.f32.partialorder %v249, 0.0
        %v255 = vmul.f32 %v247, 0.25
        %v256 = vmul.f32 %v249, 0.25
        %v257 = vsel %vm253, %v247, %v255
        %v258 = vsel %vm254, %v249, %v256
        %259 = vst [vmem:[%s185] sm:$0xff] %v257
        %260 = vst [vmem:[%s185 + $0x8] sm:$0xff] %v258
        %s261 = smul.u32 2, %s15
        %p262 = scmp.lt.s32.totalorder %s261, 3
        %s263 = scalar_select %p262, %s261, 3
        %s264 = smul.addr %s263, 8
        %s265 = scalar_lea.vmem %s3, %s264
        // Predicated region
        $region37: #{forward.78} parent=31 // pred_check
          %p266 = pneg %p101
        $region38: #{forward.78} parent=31 // pred_check_branch
          %268 = sbr.rel (%p266) target = $region40
        $region39: #{forward.78} parent=31 // pred_region
          %s269 = smul.u32 2, %s15
        $region40: #{forward.78} parent=31 // pred_fallthru
          _
      $region32: #{forward.78} parent=5 // pred_fallthru
        _
      %p270 = scmp.le.s32.totalorder 2, %s10
      // Predicated region
      $region41: #{forward.78} parent=5 // pred_check
        %p271 = pneg %p270
      $region42: #{forward.78} parent=5 // pred_check_branch
        %273 = sbr.rel (%p271) target = $region44
      $region43: #{forward.78} parent=5 // pred_region
        %s274 = ssub.s32 %s10, 2
        // Predicated region
        $region45: #{forward.78} parent=43 // pred_check
          %p275 = pneg %p107
        $region46: #{forward.78} parent=43 // pred_check_branch
          %277 = sbr.rel (%p275) target = $region48
        $region47: #{forward.78} parent=43 // pred_region
          %s278 = smul.u32 2, %s16
          %p279 = scmp.lt.s32.totalorder %s278, 3
          %s280 = scalar_select %p279, %s278, 3
          %s281 = smul.addr %s280, 8
          %s282 = scalar_lea.vmem %s3, %s281
        $region48: #{forward.78} parent=43 // pred_fallthru
          _
      $region44: #{forward.78} parent=5 // pred_fallthru
        _
    $region6: #{forward.78} parent=1 // loop_footer
      %s14 = sadd.s32 1, %s10
    $region7: #{forward.78} parent=1 // loop_footer_branch
      %9 = sbr.rel target = $region3
    $region8: #{forward.78} parent=1 // loop_exit
      _
    %283 = vsyncpa [#allocation3], 1
    %s284 = scalar_lea.sflag [#allocation3], 1
    %285 = vsyncpa %s284, 1

// kernel: forward.83
$region0: #{forward.83}
  #allocation0 [shape = 'u32[]', space=smem, size = 0x4, offset = 0x4, fixed_abs, tag = 'smem constant byte address 0x4 - core index']
  #allocation1 [shape = 'u32[144,128]{1,0:T(1,128)}', space=vmem, size = 0x12000, scoped, tag = 'internal scratch']
  %s0 = inlined_call_operand.vmem [shape: bf16[8,72], index: 0, kind: input, shape index: {}]
  %s1 = inlined_call_operand.vmem [shape: bf16[72,512], index: 1, kind: input, shape index: {}]
  %s2 = inlined_call_operand.vmem [shape: f32[8,1], index: 2, kind: input, shape index: {}]
  %s3 = inlined_call_operand.vmem [shape: f32[8,512], index: 3, kind: output, shape index: {}]
  %s4 = sld [smem:[#allocation0]]
  $region83: #{forward.83} parent=0
    _
  %s6 = ssub.s32 1, %s4
  %s7 = scalar_select 0, %s6, %s4
  $region1: #{forward.83} parent=0
    #allocation2 [shape = 'u8[73728]{0}', space=vmem, size = 0x12000, scoped, tag = 'input window, operand 1']
    loop: start=0, step=1, limit=4
    $region2: #{forward.83} parent=1 // loop_pre_header
      _
    $region3: #{forward.83} parent=1 // loop_header
      %s9 = sphi 0, %s13
      %p10 = scmp.ge.s32.totalorder %s9, 4
      %s17 = sphi 0, %s17
      %s19 = sphi 0, %s17
      %s20 = sphi 0, %s19
      %s34 = sphi 0, %s20
      %s40 = sphi 0, %s42
      %s43 = sphi 0, %s40
      %s44 = sphi 0, %s43
      %s60 = sphi 0, %s44
      %s64 = sphi 0, %s64
      %s66 = sphi 0, %s64
      %s67 = sphi 0, %s66
      %s81 = sphi 0, %s67
      %s87 = sphi 0, %s89
      %s90 = sphi 0, %s87
      %s91 = sphi 0, %s90
      %s107 = sphi 0, %s91
    $region4: #{forward.83} parent=1 // loop_header_branch
      %12 = sbr.rel (%p10) target = $region8
    $region5: #{forward.83} parent=1 // loop_body
      %s14 = ssub.s32 %s9, 1
      %s15 = ssub.s32 %s9, 2
      %s16 = sadd.s32 %s9, 1
      %s18 = sadd.s32 %s17, 1
      %p21 = scmp.eq.s32.totalorder %s9, 1
      %p22 = scmp.ne.s32.totalorder %s17, %s19
      %p23 = scmp.eq.s32.totalorder %s9, 0
      %p24 = por %p22, %p23
      %p25 = scmp.ne.s32.totalorder %s17, %s19
      %p26 = scmp.eq.s32.totalorder %s14, 1
      %p27 = por %p25, %p26
      %p28 = scmp.ne.s32.totalorder %s19, %s20
      %p29 = scmp.eq.s32.totalorder %s14, 0
      %p30 = por %p28, %p29
      %p31 = scmp.ne.s32.totalorder %s19, %s20
      %p32 = scmp.eq.s32.totalorder %s15, 1
      %p33 = por %p31, %p32
      %p35 = scmp.ne.s32.totalorder %s20, %s34
      %p36 = scmp.eq.s32.totalorder %s15, 0
      %p37 = por %p35, %p36
      %s38 = ssub.s32 %s9, %s16
      %p39 = scmp.eq.s32.totalorder %s38, 0
      %s41 = sadd.s32 %s40, 1
      %s42 = scalar_select %p39, %s40, %s41
      %p45 = pneg %p39
      %p46 = scmp.eq.s32.totalorder %s9, 1
      %p47 = por %p45, %p46
      %p48 = scmp.ne.s32.totalorder %s40, %s43
      %p49 = scmp.eq.s32.totalorder %s9, 0
      %p50 = por %p48, %p49
      %p51 = scmp.ne.s32.totalorder %s40, %s43
      %p52 = scmp.eq.s32.totalorder %s14, 1
      %p53 = por %p51, %p52
      %p54 = scmp.ne.s32.totalorder %s43, %s44
      %p55 = scmp.eq.s32.totalorder %s14, 0
      %p56 = por %p54, %p55
      %p57 = scmp.ne.s32.totalorder %s43, %s44
      %p58 = scmp.eq.s32.totalorder %s15, 1
      %p59 = por %p57, %p58
      %p61 = scmp.ne.s32.totalorder %s44, %s60
      %p62 = scmp.eq.s32.totalorder %s15, 0
      %p63 = por %p61, %p62
      %s65 = sadd.s32 %s64, 1
      %p68 = scmp.eq.s32.totalorder %s9, 1
      %p69 = scmp.ne.s32.totalorder %s64, %s66
      %p70 = scmp.eq.s32.totalorder %s9, 0
      %p71 = por %p69, %p70
      %p72 = scmp.ne.s32.totalorder %s64, %s66
      %p73 = scmp.eq.s32.totalorder %s14, 1
      %p74 = por %p72, %p73
      %p75 = scmp.ne.s32.totalorder %s66, %s67
      %p76 = scmp.eq.s32.totalorder %s14, 0
      %p77 = por %p75, %p76
      %p78 = scmp.ne.s32.totalorder %s66, %s67
      %p79 = scmp.eq.s32.totalorder %s15, 1
      %p80 = por %p78, %p79
      %p82 = scmp.ne.s32.totalorder %s67, %s81
      %p83 = scmp.eq.s32.totalorder %s15, 0
      %p84 = por %p82, %p83
      %s85 = ssub.s32 %s9, %s16
      %p86 = scmp.eq.s32.totalorder %s85, 0
      %s88 = sadd.s32 %s87, 1
      %s89 = scalar_select %p86, %s87, %s88
      %p92 = pneg %p86
      %p93 = scmp.eq.s32.totalorder %s9, 1
      %p94 = por %p92, %p93
      %p95 = scmp.ne.s32.totalorder %s87, %s90
      %p96 = scmp.eq.s32.totalorder %s9, 0
      %p97 = por %p95, %p96
      %p98 = scmp.ne.s32.totalorder %s87, %s90
      %p99 = scmp.eq.s32.totalorder %s14, 1
      %p100 = por %p98, %p99
      %p101 = scmp.ne.s32.totalorder %s90, %s91
      %p102 = scmp.eq.s32.totalorder %s14, 0
      %p103 = por %p101, %p102
      %p104 = scmp.ne.s32.totalorder %s90, %s91
      %p105 = scmp.eq.s32.totalorder %s15, 1
      %p106 = por %p104, %p105
      %p108 = scmp.ne.s32.totalorder %s91, %s107
      %p109 = scmp.eq.s32.totalorder %s15, 0
      %p110 = por %p108, %p109
      %p111 = scmp.le.s32.totalorder 1, %s9
      %p112 = scmp.lt.s32.totalorder %s9, 3
      %p113 = pnand %p111, %p112
      %p114 = pneg %p113
      // Predicated region
      $region9: #{forward.83} parent=5 // pred_check
        _
      $region10: #{forward.83} parent=5 // pred_check_branch
        %116 = sbr.rel (%p113) target = $region12
      $region11: #{forward.83} parent=5 // pred_region
        %s117 = ssub.s32 %s9, 1
        // Predicated region
        $region13: #{forward.83} parent=11 // pred_check
          %p118 = pneg %p30
        $region14: #{forward.83} parent=11 // pred_check_branch
          %120 = sbr.rel (%p118) target = $region16
        $region15: #{forward.83} parent=11 // pred_region
          _
        $region16: #{forward.83} parent=11 // pred_fallthru
          _
        // Predicated region
        $region17: #{forward.83} parent=11 // pred_check
          %p121 = pneg %p77
        $region18: #{forward.83} parent=11 // pred_check_branch
          %123 = sbr.rel (%p121) target = $region20
        $region19: #{forward.83} parent=11 // pred_region
          _
        $region20: #{forward.83} parent=11 // pred_fallthru
          _
      $region12: #{forward.83} parent=5 // pred_fallthru
        _
      %p124 = scmp.lt.s32.totalorder %s9, 2
      // Predicated region
      $region21: #{forward.83} parent=5 // pred_check
        %p125 = pneg %p124
      $region22: #{forward.83} parent=5 // pred_check_branch
        %127 = sbr.rel (%p125) target = $region24
      $region23: #{forward.83} parent=5 // pred_region
        // Predicated region
        $region25: #{forward.83} parent=23 // pred_check
          %p128 = pneg %p50
        $region26: #{forward.83} parent=23 // pred_check_branch
          %130 = sbr.rel (%p128) target = $region28
        $region27: #{forward.83} parent=23 // pred_region
          %s131 = sand.u32 %s40, 1
          %s132 = sand.u32 %s40, 1
          %s133 = smul.addr %s132, 72
          %s134 = scalar_lea.vmem [#allocation2], %s133
          %s135 = smul.u32 2, %s9
          %s136 = smul.addr %s135, 4
          %s137 = scalar_lea.vmem %s1, %s136
          // Predicated region
          $region29: #{forward.83} parent=27 // pred_check
            _
          $region30: #{forward.83} parent=27 // pred_check_branch
            %139 = sbr.rel (0) target = $region32
          $region31: #{forward.83} parent=27 // pred_region
            // Predicated region
            $region33: #{forward.83} parent=31 // pred_check
              _
            $region34: #{forward.83} parent=31 // pred_check_branch
              %141 = sbr.rel (0) target = $region36
            $region35: #{forward.83} parent=31 // pred_region
              // Predicated region
              $region48: #{forward.83} parent=35 // pred_check
                _
              $region49: #{forward.83} parent=35 // pred_check_branch
                %172 = sbr.rel (0) target = $region51
              $region50: #{forward.83} parent=35 // pred_region
                loop: start=0, step=1, limit=1
                $region52: #{forward.83} parent=50 // loop_pre_header
                  _
                $region53: #{forward.83} parent=50 // loop_header
                  %s174 = sphi 0, %s178
                  %p175 = scmp.ge.s32.totalorder %s174, 1
                  %s179 = sphi %s137, %s137
                  %s180 = sphi %s134, %s134
                $region54: #{forward.83} parent=50 // loop_header_branch
                  %177 = sbr.rel (%p175) target = $region58
                $region55: #{forward.83} parent=50 // loop_body
                  %v181 = vld [vmem:[%s179] sm:$0xff]
                  %182 = vst [vmem:[%s180] sm:$0xff] %v181
                  %v183 = vld [vmem:[%s179 + $0x10] sm:$0xff]
                  %184 = vst [vmem:[%s180 + $0x8] sm:$0xff] %v183
                  %v185 = vld [vmem:[%s179 + $0x20] sm:$0xff]
                  %186 = vst [vmem:[%s180 + $0x10] sm:$0xff] %v185
                  %v187 = vld [vmem:[%s179 + $0x30] sm:$0xff]
                  %188 = vst [vmem:[%s180 + $0x18] sm:$0xff] %v187
                  %v189 = vld [vmem:[%s179 + $0x40] sm:$0xff]
                  %190 = vst [vmem:[%s180 + $0x20] sm:$0xff] %v189
                  %v191 = vld [vmem:[%s179 + $0x50] sm:$0xff]
                  %192 = vst [vmem:[%s180 + $0x28] sm:$0xff] %v191
                  %v193 = vld [vmem:[%s179 + $0x60] sm:$0xff]
                  %194 = vst [vmem:[%s180 + $0x30] sm:$0xff] %v193
                  %v195 = vld [vmem:[%s179 + $0x70] sm:$0xff]
                  %196 = vst [vmem:[%s180 + $0x38] sm:$0xff] %v195
                  %v197 = vld [vmem:[%s179 + $0x80] sm:$0xff]
                  %198 = vst [vmem:[%s180 + $0x40] sm:$0xff] %v197
                $region56: #{forward.83} parent=50 // loop_footer
                  %s178 = sadd.s32 1, %s174
                $region57: #{forward.83} parent=50 // loop_footer_branch
                  %173 = sbr.rel target = $region53
                $region58: #{forward.83} parent=50 // loop_exit
                  _
              $region51: #{forward.83} parent=35 // pred_fallthru
                _
              // Predicated region
              $region59: #{forward.83} parent=35 // pred_check
                _
              $region60: #{forward.83} parent=35 // pred_check_branch
                %200 = sbr.rel target = $region62
              $region61: #{forward.83} parent=35 // pred_region
                _
              $region62: #{forward.83} parent=35 // pred_fallthru
                _
            $region36: #{forward.83} parent=31 // pred_fallthru
              _
            // Predicated region
            $region37: #{forward.83} parent=31 // pred_check
              _
            $region38: #{forward.83} parent=31 // pred_check_branch
              %143 = sbr.rel target = $region40
            $region39: #{forward.83} parent=31 // pred_region
              loop: start=0, step=1, limit=1
              $region41: #{forward.83} parent=39 // loop_pre_header
                _
              $region42: #{forward.83} parent=39 // loop_header
                %s146 = sphi 0, %s150
                %p147 = scmp.ge.s32.totalorder %s146, 1
                %s151 = sphi %s137, %s137
                %s152 = sphi %s134, %s134
              $region43: #{forward.83} parent=39 // loop_header_branch
                %149 = sbr.rel (%p147) target = $region47
              $region44: #{forward.83} parent=39 // loop_body
                %v153 = vld [vmem:[%s151] sm:$0xff]
                %154 = vst [vmem:[%s152] sm:$0xff] %v153
                %v155 = vld [vmem:[%s151 + $0x10] sm:$0xff]
                %156 = vst [vmem:[%s152 + $0x8] sm:$0xff] %v155
                %v157 = vld [vmem:[%s151 + $0x20] sm:$0xff]
                %158 = vst [vmem:[%s152 + $0x10] sm:$0xff] %v157
                %v159 = vld [vmem:[%s151 + $0x30] sm:$0xff]
                %160 = vst [vmem:[%s152 + $0x18] sm:$0xff] %v159
                %v161 = vld [vmem:[%s151 + $0x40] sm:$0xff]
                %162 = vst [vmem:[%s152 + $0x20] sm:$0xff] %v161
                %v163 = vld [vmem:[%s151 + $0x50] sm:$0xff]
                %164 = vst [vmem:[%s152 + $0x28] sm:$0xff] %v163
                %v165 = vld [vmem:[%s151 + $0x60] sm:$0xff]
                %166 = vst [vmem:[%s152 + $0x30] sm:$0xff] %v165
                %v167 = vld [vmem:[%s151 + $0x70] sm:$0xff]
                %168 = vst [vmem:[%s152 + $0x38] sm:$0xff] %v167
                %v169 = vld [vmem:[%s151 + $0x80] sm:$0xff]
                %170 = vst [vmem:[%s152 + $0x40] sm:$0xff] %v169
              $region45: #{forward.83} parent=39 // loop_footer
                %s150 = sadd.s32 1, %s146
              $region46: #{forward.83} parent=39 // loop_footer_branch
                %145 = sbr.rel target = $region42
              $region47: #{forward.83} parent=39 // loop_exit
                _
            $region40: #{forward.83} parent=31 // pred_fallthru
              _
          $region32: #{forward.83} parent=27 // pred_fallthru
            _
          %201 = vnop
        $region28: #{forward.83} parent=23 // pred_fallthru
          _
      $region24: #{forward.83} parent=5 // pred_fallthru
        _
      %p202 = scmp.le.s32.totalorder 1, %s9
      %p203 = scmp.lt.s32.totalorder %s9, 3
      %p204 = pnand %p202, %p203
      %p205 = pneg %p204
      // Predicated region
      $region63: #{forward.83} parent=5 // pred_check
        _
      $region64: #{forward.83} parent=5 // pred_check_branch
        %207 = sbr.rel (%p204) target = $region66
      $region65: #{forward.83} parent=5 // pred_region
        %s208 = ssub.s32 %s9, 1
        %s209 = sand.u32 %s43, 1
        %s210 = sand.u32 %s43, 1
        %s211 = smul.addr %s210, 72
        %s212 = scalar_lea.vmem [#allocation2], %s211
        // Predicated region
        $region67: #{forward.83} parent=65 // pred_check
          %p213 = pneg %p56
        $region68: #{forward.83} parent=65 // pred_check_branch
          %215 = sbr.rel (%p213) target = $region70
        $region69: #{forward.83} parent=65 // pred_region
          _
        $region70: #{forward.83} parent=65 // pred_fallthru
          _
        %p216 = pneg %p30
        %p217 = pneg %p27
        %s218 = sand.u32 %s43, 1
        %s219 = sand.u32 %s43, 1
        %s220 = smul.addr %s219, 72
        %s221 = scalar_lea.vmem [#allocation2], %s220
        %p222 = pneg %p56
        %p223 = pneg %p53
        %p224 = pneg %p77
        %p225 = pneg %p74
        %p226 = pneg %p103
        %p227 = pneg %p100
        %s228 = smul.u32 2, %s14
        %p229 = scmp.lt.s32.totalorder %s228, 3
        %s230 = scalar_select %p229, %s228, 3
        %s231 = smul.addr %s230, 8
        %s232 = scalar_lea.vmem %s3, %s231
        %s233 = smul.u32 2, %s14
        %s234 = smul.u32 2, %s14
        %p235 = scmp.lt.s32.totalorder %s234, 3
        %s236 = scalar_select %p235, %s234, 3
        %s237 = smul.addr %s236, 8
        %s238 = scalar_lea.vmem %s3, %s237
        %s239 = smul.u32 2, %s14
        %v241 = vld [vmem:[%s0] sm:$0xf]
        %v242 = vld [vmem:[%s212] sm:$0xff]
        %v243 = vld [vmem:[%s212 + $0x8] sm:$0xff]
        %v244 = vld [vmem:[%s212 + $0x10] sm:$0xff]
        %v245 = vld [vmem:[%s212 + $0x18] sm:$0xff]
        %v246 = vld [vmem:[%s212 + $0x20] sm:$0xff]
        %v247 = vld [vmem:[%s212 + $0x28] sm:$0xff]
        %v248 = vld [vmem:[%s212 + $0x30] sm:$0xff]
        %v249 = vld [vmem:[%s212 + $0x38] sm:$0xff]
        %v250 = vld [vmem:[%s212 + $0x40] sm:$0xff]
        %v251 = vld [vmem:[%s2] sm:$0xff]
        %253 = vset.pattern.permute.xlu0 0
        %254 = vperm.xlu0 %253, %v251
        %v255 = vpop.permute.xlu0 %254
        %v266 = vunpack.c.l.b16 %v242
        %v267 = vunpack.c.h.b16 %v242
        %v268 = vunpack.c.l.b16 %v243
        %v269 = vunpack.c.h.b16 %v243
        %v270 = vunpack.c.l.b16 %v244
        %v271 = vunpack.c.h.b16 %v244
        %v272 = vunpack.c.l.b16 %v245
        %v273 = vunpack.c.h.b16 %v245
        %v274 = vunpack.c.l.b16 %v246
        %v275 = vunpack.c.h.b16 %v246
        %v276 = vunpack.c.l.b16 %v247
        %v277 = vunpack.c.h.b16 %v247
        %v278 = vunpack.c.l.b16 %v248
        %v279 = vunpack.c.h.b16 %v248
        %v280 = vunpack.c.l.b16 %v249
        %v281 = vunpack.c.h.b16 %v249
        %v282 = vunpack.c.l.b16 %v250
        %v283 = vunpack.c.h.b16 %v250
        %v284 = vpack.c.b16 %v268, %v266
        %v285 = vpack.c.b16 %v269, %v267
        %v286 = vpack.c.b16 %v272, %v270
        %v287 = vpack.c.b16 %v273, %v271
        %v288 = vpack.c.b16 %v276, %v274
        %v289 = vpack.c.b16 %v277, %v275
        %v290 = vpack.c.b16 %v280, %v278
        %v291 = vpack.c.b16 %v281, %v279
        %v292 = vpack.c.b16 %v282, %v282
        %v293 = vpack.c.b16 %v283, %v283
        %vm302 = vcmask 588800
        %v304 = vsel %vm302, %v241, 0
        %vm306 = vcmask 1043456
        %v308 = vsel %vm306, %v292, 0
        %v311 = vsel %vm306, %v293, 0
        %313 = vmatprep.subr.bf16.mxu0 %v285
        %314 = vmatpush1.bf16.msra.mxu0 %v284
        %315 = vmatprep.subr.bf16.mxu0 %v287
        %316 = vmatpush1.bf16.msra.mxu0 %v286
        %317 = vmatprep.subr.bf16.mxu0 %v289
        %318 = vmatpush1.bf16.msra.mxu0 %v288
        %319 = vmatprep.subr.bf16.mxu0 %v291
        %320 = vmatpush1.bf16.msra.mxu0 %v290
        %321 = vmatprep.subr.bf16.mxu0 %v311
        %322 = vmatpush1.bf16.msra.mxu0 %v308
        %323 = vmatprep.subr.bf16.mxu0 0
        %324 = vmatpush1.bf16.msra.mxu0 0
        %325 = vmatprep.subr.bf16.mxu0 0
        %326 = vmatpush1.bf16.msra.mxu0 0
        %327 = vmatprep.subr.bf16.mxu0 0
        %328 = vmatpush1.bf16.msra.mxu0 0
        %329 = vmatprep.subr.bf16.mxu0 0
        %330 = vmatpush1.bf16.msra.mxu0 0
        %331 = vmatprep.subr.bf16.mxu0 0
        %332 = vmatpush1.bf16.msra.mxu0 0
        %333 = vmatprep.subr.bf16.mxu0 0
        %334 = vmatpush1.bf16.msra.mxu0 0
        %335 = vmatprep.subr.bf16.mxu0 0
        %336 = vmatpush1.bf16.msra.mxu0 0
        %337 = vmatprep.subr.bf16.mxu0 0
        %338 = vmatpush1.bf16.msra.mxu0 0
        %339 = vmatprep.subr.bf16.mxu0 0
        %340 = vmatpush1.bf16.msra.mxu0 0
        %341 = vmatprep.subr.bf16.mxu0 0
        %342 = vmatpush1.bf16.msra.mxu0 0
        %343 = vmatprep.subr.bf16.mxu0 0
        %344 = vmatpush1.bf16.msra.mxu0 0
        %345 = vmatprep.mubr.bf16.mxu0 0
        %346 = vmatmul.mubr.bf16.gmra.mrb[0].mxu0 %v304
        %v347 = vpop.f32.mrb[0].mxu0
        %v348 = vadd.f32 %v255, %v347
        %v349 = vpop.f32.mrb[0].mxu0
        %v350 = vadd.f32 %v255, %v349
        %v351 = vpop.f32.mrb[0].mxu0
        %v352 = vpop.f32.mrb[0].mxu0
        %353 = vdwg.mxu0
        %354 = vst [vmem:[%s238] sm:$0xff] %v348
        %355 = vst [vmem:[%s238 + $0x8] sm:$0xff] %v350
        %s356 = smul.u32 2, %s14
        %p357 = scmp.lt.s32.totalorder %s356, 3
        %s358 = scalar_select %p357, %s356, 3
        %s359 = smul.addr %s358, 8
        %s360 = scalar_lea.vmem %s3, %s359
        // Predicated region
        $region71: #{forward.83} parent=65 // pred_check
          %p361 = pneg %p100
        $region72: #{forward.83} parent=65 // pred_check_branch
          %363 = sbr.rel (%p361) target = $region74
        $region73: #{forward.83} parent=65 // pred_region
          %s364 = smul.u32 2, %s14
        $region74: #{forward.83} parent=65 // pred_fallthru
          _
      $region66: #{forward.83} parent=5 // pred_fallthru
        _
      %p365 = scmp.le.s32.totalorder 2, %s9
      // Predicated region
      $region75: #{forward.83} parent=5 // pred_check
        %p366 = pneg %p365
      $region76: #{forward.83} parent=5 // pred_check_branch
        %368 = sbr.rel (%p366) target = $region78
      $region77: #{forward.83} parent=5 // pred_region
        %s369 = ssub.s32 %s9, 2
        // Predicated region
        $region79: #{forward.83} parent=77 // pred_check
          %p370 = pneg %p106
        $region80: #{forward.83} parent=77 // pred_check_branch
          %372 = sbr.rel (%p370) target = $region82
        $region81: #{forward.83} parent=77 // pred_region
          %s373 = smul.u32 2, %s15
          %p374 = scmp.lt.s32.totalorder %s373, 3
          %s375 = scalar_select %p374, %s373, 3
          %s376 = smul.addr %s375, 8
          %s377 = scalar_lea.vmem %s3, %s376
        $region82: #{forward.83} parent=77 // pred_fallthru
          _
      $region78: #{forward.83} parent=5 // pred_fallthru
        _
    $region6: #{forward.83} parent=1 // loop_footer
      %s13 = sadd.s32 1, %s9
    $region7: #{forward.83} parent=1 // loop_footer_branch
      %8 = sbr.rel target = $region3
    $region8: #{forward.83} parent=1 // loop_exit
      _

// kernel: forward.82
$region0: #{forward.82}
  #allocation0 [shape = 'u32[]', space=smem, size = 0x4, offset = 0x4, fixed_abs, tag = 'smem constant byte address 0x4 - core index']
  #allocation1 [shape = 'u32[144,128]{1,0:T(1,128)}', space=vmem, size = 0x12000, scoped, tag = 'internal scratch']
  %s0 = inlined_call_operand.vmem [shape: bf16[8,72], index: 0, kind: input, shape index: {}]
  %s1 = inlined_call_operand.vmem [shape: bf16[72,512], index: 1, kind: input, shape index: {}]
  %s2 = inlined_call_operand.vmem [shape: f32[8,1], index: 2, kind: input, shape index: {}]
  %s3 = inlined_call_operand.vmem [shape: f32[8,512], index: 3, kind: output, shape index: {}]
  %s4 = sld [smem:[#allocation0]]
  $region83: #{forward.82} parent=0
    _
  %s6 = ssub.s32 1, %s4
  %s7 = scalar_select 0, %s6, %s4
  $region1: #{forward.82} parent=0
    #allocation2 [shape = 'u8[73728]{0}', space=vmem, size = 0x12000, scoped, tag = 'input window, operand 1']
    loop: start=0, step=1, limit=4
    $region2: #{forward.82} parent=1 // loop_pre_header
      _
    $region3: #{forward.82} parent=1 // loop_header
      %s9 = sphi 0, %s13
      %p10 = scmp.ge.s32.totalorder %s9, 4
      %s17 = sphi 0, %s17
      %s19 = sphi 0, %s17
      %s20 = sphi 0, %s19
      %s34 = sphi 0, %s20
      %s40 = sphi 0, %s42
      %s43 = sphi 0, %s40
      %s44 = sphi 0, %s43
      %s60 = sphi 0, %s44
      %s64 = sphi 0, %s64
      %s66 = sphi 0, %s64
      %s67 = sphi 0, %s66
      %s81 = sphi 0, %s67
      %s87 = sphi 0, %s89
      %s90 = sphi 0, %s87
      %s91 = sphi 0, %s90
      %s107 = sphi 0, %s91
    $region4: #{forward.82} parent=1 // loop_header_branch
      %12 = sbr.rel (%p10) target = $region8
    $region5: #{forward.82} parent=1 // loop_body
      %s14 = ssub.s32 %s9, 1
      %s15 = ssub.s32 %s9, 2
      %s16 = sadd.s32 %s9, 1
      %s18 = sadd.s32 %s17, 1
      %p21 = scmp.eq.s32.totalorder %s9, 1
      %p22 = scmp.ne.s32.totalorder %s17, %s19
      %p23 = scmp.eq.s32.totalorder %s9, 0
      %p24 = por %p22, %p23
      %p25 = scmp.ne.s32.totalorder %s17, %s19
      %p26 = scmp.eq.s32.totalorder %s14, 1
      %p27 = por %p25, %p26
      %p28 = scmp.ne.s32.totalorder %s19, %s20
      %p29 = scmp.eq.s32.totalorder %s14, 0
      %p30 = por %p28, %p29
      %p31 = scmp.ne.s32.totalorder %s19, %s20
      %p32 = scmp.eq.s32.totalorder %s15, 1
      %p33 = por %p31, %p32
      %p35 = scmp.ne.s32.totalorder %s20, %s34
      %p36 = scmp.eq.s32.totalorder %s15, 0
      %p37 = por %p35, %p36
      %s38 = ssub.s32 %s9, %s16
      %p39 = scmp.eq.s32.totalorder %s38, 0
      %s41 = sadd.s32 %s40, 1
      %s42 = scalar_select %p39, %s40, %s41
      %p45 = pneg %p39
      %p46 = scmp.eq.s32.totalorder %s9, 1
      %p47 = por %p45, %p46
      %p48 = scmp.ne.s32.totalorder %s40, %s43
      %p49 = scmp.eq.s32.totalorder %s9, 0
      %p50 = por %p48, %p49
      %p51 = scmp.ne.s32.totalorder %s40, %s43
      %p52 = scmp.eq.s32.totalorder %s14, 1
      %p53 = por %p51, %p52
      %p54 = scmp.ne.s32.totalorder %s43, %s44
      %p55 = scmp.eq.s32.totalorder %s14, 0
      %p56 = por %p54, %p55
      %p57 = scmp.ne.s32.totalorder %s43, %s44
      %p58 = scmp.eq.s32.totalorder %s15, 1
      %p59 = por %p57, %p58
      %p61 = scmp.ne.s32.totalorder %s44, %s60
      %p62 = scmp.eq.s32.totalorder %s15, 0
      %p63 = por %p61, %p62
      %s65 = sadd.s32 %s64, 1
      %p68 = scmp.eq.s32.totalorder %s9, 1
      %p69 = scmp.ne.s32.totalorder %s64, %s66
      %p70 = scmp.eq.s32.totalorder %s9, 0
      %p71 = por %p69, %p70
      %p72 = scmp.ne.s32.totalorder %s64, %s66
      %p73 = scmp.eq.s32.totalorder %s14, 1
      %p74 = por %p72, %p73
      %p75 = scmp.ne.s32.totalorder %s66, %s67
      %p76 = scmp.eq.s32.totalorder %s14, 0
      %p77 = por %p75, %p76
      %p78 = scmp.ne.s32.totalorder %s66, %s67
      %p79 = scmp.eq.s32.totalorder %s15, 1
      %p80 = por %p78, %p79
      %p82 = scmp.ne.s32.totalorder %s67, %s81
      %p83 = scmp.eq.s32.totalorder %s15, 0
      %p84 = por %p82, %p83
      %s85 = ssub.s32 %s9, %s16
      %p86 = scmp.eq.s32.totalorder %s85, 0
      %s88 = sadd.s32 %s87, 1
      %s89 = scalar_select %p86, %s87, %s88
      %p92 = pneg %p86
      %p93 = scmp.eq.s32.totalorder %s9, 1
      %p94 = por %p92, %p93
      %p95 = scmp.ne.s32.totalorder %s87, %s90
      %p96 = scmp.eq.s32.totalorder %s9, 0
      %p97 = por %p95, %p96
      %p98 = scmp.ne.s32.totalorder %s87, %s90
      %p99 = scmp.eq.s32.totalorder %s14, 1
      %p100 = por %p98, %p99
      %p101 = scmp.ne.s32.totalorder %s90, %s91
      %p102 = scmp.eq.s32.totalorder %s14, 0
      %p103 = por %p101, %p102
      %p104 = scmp.ne.s32.totalorder %s90, %s91
      %p105 = scmp.eq.s32.totalorder %s15, 1
      %p106 = por %p104, %p105
      %p108 = scmp.ne.s32.totalorder %s91, %s107
      %p109 = scmp.eq.s32.totalorder %s15, 0
      %p110 = por %p108, %p109
      %p111 = scmp.le.s32.totalorder 1, %s9
      %p112 = scmp.lt.s32.totalorder %s9, 3
      %p113 = pnand %p111, %p112
      %p114 = pneg %p113
      // Predicated region
      $region9: #{forward.82} parent=5 // pred_check
        _
      $region10: #{forward.82} parent=5 // pred_check_branch
        %116 = sbr.rel (%p113) target = $region12
      $region11: #{forward.82} parent=5 // pred_region
        %s117 = ssub.s32 %s9, 1
        // Predicated region
        $region13: #{forward.82} parent=11 // pred_check
          %p118 = pneg %p30
        $region14: #{forward.82} parent=11 // pred_check_branch
          %120 = sbr.rel (%p118) target = $region16
        $region15: #{forward.82} parent=11 // pred_region
          _
        $region16: #{forward.82} parent=11 // pred_fallthru
          _
        // Predicated region
        $region17: #{forward.82} parent=11 // pred_check
          %p121 = pneg %p77
        $region18: #{forward.82} parent=11 // pred_check_branch
          %123 = sbr.rel (%p121) target = $region20
        $region19: #{forward.82} parent=11 // pred_region
          _
        $region20: #{forward.82} parent=11 // pred_fallthru
          _
      $region12: #{forward.82} parent=5 // pred_fallthru
        _
      %p124 = scmp.lt.s32.totalorder %s9, 2
      // Predicated region
      $region21: #{forward.82} parent=5 // pred_check
        %p125 = pneg %p124
      $region22: #{forward.82} parent=5 // pred_check_branch
        %127 = sbr.rel (%p125) target = $region24
      $region23: #{forward.82} parent=5 // pred_region
        // Predicated region
        $region25: #{forward.82} parent=23 // pred_check
          %p128 = pneg %p50
        $region26: #{forward.82} parent=23 // pred_check_branch
          %130 = sbr.rel (%p128) target = $region28
        $region27: #{forward.82} parent=23 // pred_region
          %s131 = sand.u32 %s40, 1
          %s132 = sand.u32 %s40, 1
          %s133 = smul.addr %s132, 72
          %s134 = scalar_lea.vmem [#allocation2], %s133
          %s135 = smul.u32 2, %s9
          %s136 = smul.addr %s135, 4
          %s137 = scalar_lea.vmem %s1, %s136
          // Predicated region
          $region29: #{forward.82} parent=27 // pred_check
            _
          $region30: #{forward.82} parent=27 // pred_check_branch
            %139 = sbr.rel (0) target = $region32
          $region31: #{forward.82} parent=27 // pred_region
            // Predicated region
            $region33: #{forward.82} parent=31 // pred_check
              _
            $region34: #{forward.82} parent=31 // pred_check_branch
              %141 = sbr.rel (0) target = $region36
            $region35: #{forward.82} parent=31 // pred_region
              // Predicated region
              $region48: #{forward.82} parent=35 // pred_check
                _
              $region49: #{forward.82} parent=35 // pred_check_branch
                %172 = sbr.rel (0) target = $region51
              $region50: #{forward.82} parent=35 // pred_region
                loop: start=0, step=1, limit=1
                $region52: #{forward.82} parent=50 // loop_pre_header
                  _
                $region53: #{forward.82} parent=50 // loop_header
                  %s174 = sphi 0, %s178
                  %p175 = scmp.ge.s32.totalorder %s174, 1
                  %s179 = sphi %s137, %s137
                  %s180 = sphi %s134, %s134
                $region54: #{forward.82} parent=50 // loop_header_branch
                  %177 = sbr.rel (%p175) target = $region58
                $region55: #{forward.82} parent=50 // loop_body
                  %v181 = vld [vmem:[%s179] sm:$0xff]
                  %182 = vst [vmem:[%s180] sm:$0xff] %v181
                  %v183 = vld [vmem:[%s179 + $0x10] sm:$0xff]
                  %184 = vst [vmem:[%s180 + $0x8] sm:$0xff] %v183
                  %v185 = vld [vmem:[%s179 + $0x20] sm:$0xff]
                  %186 = vst [vmem:[%s180 + $0x10] sm:$0xff] %v185
                  %v187 = vld [vmem:[%s179 + $0x30] sm:$0xff]
                  %188 = vst [vmem:[%s180 + $0x18] sm:$0xff] %v187
                  %v189 = vld [vmem:[%s179 + $0x40] sm:$0xff]
                  %190 = vst [vmem:[%s180 + $0x20] sm:$0xff] %v189
                  %v191 = vld [vmem:[%s179 + $0x50] sm:$0xff]
                  %192 = vst [vmem:[%s180 + $0x28] sm:$0xff] %v191
                  %v193 = vld [vmem:[%s179 + $0x60] sm:$0xff]
                  %194 = vst [vmem:[%s180 + $0x30] sm:$0xff] %v193
                  %v195 = vld [vmem:[%s179 + $0x70] sm:$0xff]
                  %196 = vst [vmem:[%s180 + $0x38] sm:$0xff] %v195
                  %v197 = vld [vmem:[%s179 + $0x80] sm:$0xff]
                  %198 = vst [vmem:[%s180 + $0x40] sm:$0xff] %v197
                $region56: #{forward.82} parent=50 // loop_footer
                  %s178 = sadd.s32 1, %s174
                $region57: #{forward.82} parent=50 // loop_footer_branch
                  %173 = sbr.rel target = $region53
                $region58: #{forward.82} parent=50 // loop_exit
                  _
              $region51: #{forward.82} parent=35 // pred_fallthru
                _
              // Predicated region
              $region59: #{forward.82} parent=35 // pred_check
                _
              $region60: #{forward.82} parent=35 // pred_check_branch
                %200 = sbr.rel target = $region62
              $region61: #{forward.82} parent=35 // pred_region
                _
              $region62: #{forward.82} parent=35 // pred_fallthru
                _
            $region36: #{forward.82} parent=31 // pred_fallthru
              _
            // Predicated region
            $region37: #{forward.82} parent=31 // pred_check
              _
            $region38: #{forward.82} parent=31 // pred_check_branch
              %143 = sbr.rel target = $region40
            $region39: #{forward.82} parent=31 // pred_region
              loop: start=0, step=1, limit=1
              $region41: #{forward.82} parent=39 // loop_pre_header
                _
              $region42: #{forward.82} parent=39 // loop_header
                %s146 = sphi 0, %s150
                %p147 = scmp.ge.s32.totalorder %s146, 1
                %s151 = sphi %s137, %s137
                %s152 = sphi %s134, %s134
              $region43: #{forward.82} parent=39 // loop_header_branch
                %149 = sbr.rel (%p147) target = $region47
              $region44: #{forward.82} parent=39 // loop_body
                %v153 = vld [vmem:[%s151] sm:$0xff]
                %154 = vst [vmem:[%s152] sm:$0xff] %v153
                %v155 = vld [vmem:[%s151 + $0x10] sm:$0xff]
                %156 = vst [vmem:[%s152 + $0x8] sm:$0xff] %v155
                %v157 = vld [vmem:[%s151 + $0x20] sm:$0xff]
                %158 = vst [vmem:[%s152 + $0x10] sm:$0xff] %v157
                %v159 = vld [vmem:[%s151 + $0x30] sm:$0xff]
                %160 = vst [vmem:[%s152 + $0x18] sm:$0xff] %v159
                %v161 = vld [vmem:[%s151 + $0x40] sm:$0xff]
                %162 = vst [vmem:[%s152 + $0x20] sm:$0xff] %v161
                %v163 = vld [vmem:[%s151 + $0x50] sm:$0xff]
                %164 = vst [vmem:[%s152 + $0x28] sm:$0xff] %v163
                %v165 = vld [vmem:[%s151 + $0x60] sm:$0xff]
                %166 = vst [vmem:[%s152 + $0x30] sm:$0xff] %v165
                %v167 = vld [vmem:[%s151 + $0x70] sm:$0xff]
                %168 = vst [vmem:[%s152 + $0x38] sm:$0xff] %v167
                %v169 = vld [vmem:[%s151 + $0x80] sm:$0xff]
                %170 = vst [vmem:[%s152 + $0x40] sm:$0xff] %v169
              $region45: #{forward.82} parent=39 // loop_footer
                %s150 = sadd.s32 1, %s146
              $region46: #{forward.82} parent=39 // loop_footer_branch
                %145 = sbr.rel target = $region42
              $region47: #{forward.82} parent=39 // loop_exit
                _
            $region40: #{forward.82} parent=31 // pred_fallthru
              _
          $region32: #{forward.82} parent=27 // pred_fallthru
            _
          %201 = vnop
        $region28: #{forward.82} parent=23 // pred_fallthru
          _
      $region24: #{forward.82} parent=5 // pred_fallthru
        _
      %p202 = scmp.le.s32.totalorder 1, %s9
      %p203 = scmp.lt.s32.totalorder %s9, 3
      %p204 = pnand %p202, %p203
      %p205 = pneg %p204
      // Predicated region
      $region63: #{forward.82} parent=5 // pred_check
        _
      $region64: #{forward.82} parent=5 // pred_check_branch
        %207 = sbr.rel (%p204) target = $region66
      $region65: #{forward.82} parent=5 // pred_region
        %s208 = ssub.s32 %s9, 1
        %s209 = sand.u32 %s43, 1
        %s210 = sand.u32 %s43, 1
        %s211 = smul.addr %s210, 72
        %s212 = scalar_lea.vmem [#allocation2], %s211
        // Predicated region
        $region67: #{forward.82} parent=65 // pred_check
          %p213 = pneg %p56
        $region68: #{forward.82} parent=65 // pred_check_branch
          %215 = sbr.rel (%p213) target = $region70
        $region69: #{forward.82} parent=65 // pred_region
          _
        $region70: #{forward.82} parent=65 // pred_fallthru
          _
        %p216 = pneg %p30
        %p217 = pneg %p27
        %s218 = sand.u32 %s43, 1
        %s219 = sand.u32 %s43, 1
        %s220 = smul.addr %s219, 72
        %s221 = scalar_lea.vmem [#allocation2], %s220
        %p222 = pneg %p56
        %p223 = pneg %p53
        %p224 = pneg %p77
        %p225 = pneg %p74
        %p226 = pneg %p103
        %p227 = pneg %p100
        %s228 = smul.u32 2, %s14
        %p229 = scmp.lt.s32.totalorder %s228, 3
        %s230 = scalar_select %p229, %s228, 3
        %s231 = smul.addr %s230, 8
        %s232 = scalar_lea.vmem %s3, %s231
        %s233 = smul.u32 2, %s14
        %s234 = smul.u32 2, %s14
        %p235 = scmp.lt.s32.totalorder %s234, 3
        %s236 = scalar_select %p235, %s234, 3
        %s237 = smul.addr %s236, 8
        %s238 = scalar_lea.vmem %s3, %s237
        %s239 = smul.u32 2, %s14
        %v241 = vld [vmem:[%s0] sm:$0xf]
        %v242 = vld [vmem:[%s212] sm:$0xff]
        %v243 = vld [vmem:[%s212 + $0x8] sm:$0xff]
        %v244 = vld [vmem:[%s212 + $0x10] sm:$0xff]
        %v245 = vld [vmem:[%s212 + $0x18] sm:$0xff]
        %v246 = vld [vmem:[%s212 + $0x20] sm:$0xff]
        %v247 = vld [vmem:[%s212 + $0x28] sm:$0xff]
        %v248 = vld [vmem:[%s212 + $0x30] sm:$0xff]
        %v249 = vld [vmem:[%s212 + $0x38] sm:$0xff]
        %v250 = vld [vmem:[%s212 + $0x40] sm:$0xff]
        %v251 = vld [vmem:[%s2] sm:$0xff]
        %253 = vset.pattern.permute.xlu0 0
        %254 = vperm.xlu0 %253, %v251
        %v255 = vpop.permute.xlu0 %254
        %v266 = vunpack.c.l.b16 %v242
        %v267 = vunpack.c.h.b16 %v242
        %v268 = vunpack.c.l.b16 %v243
        %v269 = vunpack.c.h.b16 %v243
        %v270 = vunpack.c.l.b16 %v244
        %v271 = vunpack.c.h.b16 %v244
        %v272 = vunpack.c.l.b16 %v245
        %v273 = vunpack.c.h.b16 %v245
        %v274 = vunpack.c.l.b16 %v246
        %v275 = vunpack.c.h.b16 %v246
        %v276 = vunpack.c.l.b16 %v247
        %v277 = vunpack.c.h.b16 %v247
        %v278 = vunpack.c.l.b16 %v248
        %v279 = vunpack.c.h.b16 %v248
        %v280 = vunpack.c.l.b16 %v249
        %v281 = vunpack.c.h.b16 %v249
        %v282 = vunpack.c.l.b16 %v250
        %v283 = vunpack.c.h.b16 %v250
        %v284 = vpack.c.b16 %v268, %v266
        %v285 = vpack.c.b16 %v269, %v267
        %v286 = vpack.c.b16 %v272, %v270
        %v287 = vpack.c.b16 %v273, %v271
        %v288 = vpack.c.b16 %v276, %v274
        %v289 = vpack.c.b16 %v277, %v275
        %v290 = vpack.c.b16 %v280, %v278
        %v291 = vpack.c.b16 %v281, %v279
        %v292 = vpack.c.b16 %v282, %v282
        %v293 = vpack.c.b16 %v283, %v283
        %vm302 = vcmask 588800
        %v304 = vsel %vm302, %v241, 0
        %vm306 = vcmask 1043456
        %v308 = vsel %vm306, %v292, 0
        %v311 = vsel %vm306, %v293, 0
        %313 = vmatprep.subr.bf16.mxu0 %v285
        %314 = vmatpush1.bf16.msra.mxu0 %v284
        %315 = vmatprep.subr.bf16.mxu0 %v287
        %316 = vmatpush1.bf16.msra.mxu0 %v286
        %317 = vmatprep.subr.bf16.mxu0 %v289
        %318 = vmatpush1.bf16.msra.mxu0 %v288
        %319 = vmatprep.subr.bf16.mxu0 %v291
        %320 = vmatpush1.bf16.msra.mxu0 %v290
        %321 = vmatprep.subr.bf16.mxu0 %v311
        %322 = vmatpush1.bf16.msra.mxu0 %v308
        %323 = vmatprep.subr.bf16.mxu0 0
        %324 = vmatpush1.bf16.msra.mxu0 0
        %325 = vmatprep.subr.bf16.mxu0 0
        %326 = vmatpush1.bf16.msra.mxu0 0
        %327 = vmatprep.subr.bf16.mxu0 0
        %328 = vmatpush1.bf16.msra.mxu0 0
        %329 = vmatprep.subr.bf16.mxu0 0
        %330 = vmatpush1.bf16.msra.mxu0 0
        %331 = vmatprep.subr.bf16.mxu0 0
        %332 = vmatpush1.bf16.msra.mxu0 0
        %333 = vmatprep.subr.bf16.mxu0 0
        %334 = vmatpush1.bf16.msra.mxu0 0
        %335 = vmatprep.subr.bf16.mxu0 0
        %336 = vmatpush1.bf16.msra.mxu0 0
        %337 = vmatprep.subr.bf16.mxu0 0
        %338 = vmatpush1.bf16.msra.mxu0 0
        %339 = vmatprep.subr.bf16.mxu0 0
        %340 = vmatpush1.bf16.msra.mxu0 0
        %341 = vmatprep.subr.bf16.mxu0 0
        %342 = vmatpush1.bf16.msra.mxu0 0
        %343 = vmatprep.subr.bf16.mxu0 0
        %344 = vmatpush1.bf16.msra.mxu0 0
        %345 = vmatprep.mubr.bf16.mxu0 0
        %346 = vmatmul.mubr.bf16.gmra.mrb[0].mxu0 %v304
        %v347 = vpop.f32.mrb[0].mxu0
        %v348 = vadd.f32 %v255, %v347
        %v349 = vpop.f32.mrb[0].mxu0
        %v350 = vadd.f32 %v255, %v349
        %v351 = vpop.f32.mrb[0].mxu0
        %v352 = vpop.f32.mrb[0].mxu0
        %353 = vdwg.mxu0
        %vm354 = vcmp.ge.f32.partialorder %v348, 0.0
        %vm355 = vcmp.ge.f32.partialorder %v350, 0.0
        %v356 = vmul.f32 %v348, 0.25
        %v357 = vmul.f32 %v350, 0.25
        %v358 = vsel %vm354, %v348, %v356
        %v359 = vsel %vm355, %v350, %v357
        %360 = vst [vmem:[%s238] sm:$0xff] %v358
        %361 = vst [vmem:[%s238 + $0x8] sm:$0xff] %v359
        %s362 = smul.u32 2, %s14
        %p363 = scmp.lt.s32.totalorder %s362, 3
        %s364 = scalar_select %p363, %s362, 3
        %s365 = smul.addr %s364, 8
        %s366 = scalar_lea.vmem %s3, %s365
        // Predicated region
        $region71: #{forward.82} parent=65 // pred_check
          %p367 = pneg %p100
        $region72: #{forward.82} parent=65 // pred_check_branch
          %369 = sbr.rel (%p367) target = $region74
        $region73: #{forward.82} parent=65 // pred_region
          %s370 = smul.u32 2, %s14
        $region74: #{forward.82} parent=65 // pred_fallthru
          _
      $region66: #{forward.82} parent=5 // pred_fallthru
        _
      %p371 = scmp.le.s32.totalorder 2, %s9
      // Predicated region
      $region75: #{forward.82} parent=5 // pred_check
        %p372 = pneg %p371
      $region76: #{forward.82} parent=5 // pred_check_branch
        %374 = sbr.rel (%p372) target = $region78
      $region77: #{forward.82} parent=5 // pred_region
        %s375 = ssub.s32 %s9, 2
        // Predicated region
        $region79: #{forward.82} parent=77 // pred_check
          %p376 = pneg %p106
        $region80: #{forward.82} parent=77 // pred_check_branch
          %378 = sbr.rel (%p376) target = $region82
        $region81: #{forward.82} parent=77 // pred_region
          %s379 = smul.u32 2, %s15
          %p380 = scmp.lt.s32.totalorder %s379, 3
          %s381 = scalar_select %p380, %s379, 3
          %s382 = smul.addr %s381, 8
          %s383 = scalar_lea.vmem %s3, %s382
        $region82: #{forward.82} parent=77 // pred_fallthru
          _
      $region78: #{forward.82} parent=5 // pred_fallthru
        _
    $region6: #{forward.82} parent=1 // loop_footer
      %s13 = sadd.s32 1, %s9
    $region7: #{forward.82} parent=1 // loop_footer_branch
      %8 = sbr.rel target = $region3
    $region8: #{forward.82} parent=1 // loop_exit
      _

// kernel: forward.76
$region0: #{forward.76}
  #allocation0 [shape = 'u32[]', space=smem, size = 0x4, offset = 0x4, fixed_abs, tag = 'smem constant byte address 0x4 - core index']
  #allocation1 [shape = 'u32[144,128]{1,0:T(1,128)}', space=vmem, size = 0x12000, scoped, tag = 'internal scratch']
  %s0 = inlined_call_operand.vmem [shape: bf16[8,8], index: 0, kind: input, shape index: {}]
  %s1 = inlined_call_operand.vmem [shape: bf16[8,128], index: 1, kind: input, shape index: {}]
  %s2 = inlined_call_operand.vmem [shape: f32[8,1], index: 2, kind: input, shape index: {}]
  %s3 = inlined_call_operand.vmem [shape: f32[8,128], index: 3, kind: output, shape index: {}]
  %s4 = sld [smem:[#allocation0]]
  $region22: #{forward.76} parent=0
    _
  %s6 = ssub.s32 1, %s4
  %s7 = scalar_select 0, %s6, %s4
  // Predicated region
  $region2: #{forward.76} parent=0 // pred_check
    _
  $region3: #{forward.76} parent=0 // pred_check_branch
    %9 = sbr.rel (0) target = $region5
  $region4: #{forward.76} parent=0 // pred_region
    _
  $region5: #{forward.76} parent=0 // pred_fallthru
    _
  // Predicated region
  $region6: #{forward.76} parent=0 // pred_check
    _
  $region7: #{forward.76} parent=0 // pred_check_branch
    %11 = sbr.rel (0) target = $region9
  $region8: #{forward.76} parent=0 // pred_region
    _
  $region9: #{forward.76} parent=0 // pred_fallthru
    _
  // Predicated region
  $region10: #{forward.76} parent=0 // pred_check
    _
  $region11: #{forward.76} parent=0 // pred_check_branch
    %13 = sbr.rel (0) target = $region13
  $region12: #{forward.76} parent=0 // pred_region
    _
  $region13: #{forward.76} parent=0 // pred_fallthru
    _
  %v15 = vld [vmem:[%s0] sm:$0xf]
  %v16 = vld [vmem:[%s1] sm:$0xf]
  %v17 = vld [vmem:[%s2] sm:$0xff]
  %19 = vset.pattern.permute.xlu0 0
  %20 = vperm.xlu0 %19, %v17
  %v21 = vpop.permute.xlu0 %20
  %vm23 = vcmask 64512
  %v25 = vsel %vm23, %v15, 0
  %vm27 = vcmask 1043456
  %v29 = vsel %vm27, %v16, 0
  %31 = vmatprep.subr.bf16.mxu0 0
  %32 = vmatpush1.bf16.msra.mxu0 %v29
  %33 = vmatprep.subr.bf16.mxu0 0
  %34 = vmatpush1.bf16.msra.mxu0 0
  %35 = vmatprep.subr.bf16.mxu0 0
  %36 = vmatpush1.bf16.msra.mxu0 0
  %37 = vmatprep.subr.bf16.mxu0 0
  %38 = vmatpush1.bf16.msra.mxu0 0
  %39 = vmatprep.subr.bf16.mxu0 0
  %40 = vmatpush1.bf16.msra.mxu0 0
  %41 = vmatprep.subr.bf16.mxu0 0
  %42 = vmatpush1.bf16.msra.mxu0 0
  %43 = vmatprep.subr.bf16.mxu0 0
  %44 = vmatpush1.bf16.msra.mxu0 0
  %45 = vmatprep.subr.bf16.mxu0 0
  %46 = vmatpush1.bf16.msra.mxu0 0
  %47 = vmatprep.subr.bf16.mxu0 0
  %48 = vmatpush1.bf16.msra.mxu0 0
  %49 = vmatprep.subr.bf16.mxu0 0
  %50 = vmatpush1.bf16.msra.mxu0 0
  %51 = vmatprep.subr.bf16.mxu0 0
  %52 = vmatpush1.bf16.msra.mxu0 0
  %53 = vmatprep.subr.bf16.mxu0 0
  %54 = vmatpush1.bf16.msra.mxu0 0
  %55 = vmatprep.subr.bf16.mxu0 0
  %56 = vmatpush1.bf16.msra.mxu0 0
  %57 = vmatprep.subr.bf16.mxu0 0
  %58 = vmatpush1.bf16.msra.mxu0 0
  %59 = vmatprep.subr.bf16.mxu0 0
  %60 = vmatpush1.bf16.msra.mxu0 0
  %61 = vmatprep.subr.bf16.mxu0 0
  %62 = vmatpush1.bf16.msra.mxu0 0
  %63 = vmatprep.mubr.bf16.mxu0 0
  %64 = vmatmul.mubr.bf16.gmra.mrb[0].mxu0 %v25
  %v65 = vpop.f32.mrb[0].mxu0
  %v66 = vadd.f32 %v21, %v65
  %v67 = vpop.f32.mrb[0].mxu0
  %v68 = vpop.f32.mrb[0].mxu0
  %v69 = vpop.f32.mrb[0].mxu0
  %70 = vdwg.mxu0
  %vm71 = vcmp.ge.f32.partialorder %v66, 0.0
  %v72 = vmul.f32 %v66, 0.25
  %v73 = vsel %vm71, %v66, %v72
  %74 = vst [vmem:[%s3] sm:$0xff] %v73
  // Predicated region
  $region14: #{forward.76} parent=0 // pred_check
    _
  $region15: #{forward.76} parent=0 // pred_check_branch
    %76 = sbr.rel (0) target = $region17
  $region16: #{forward.76} parent=0 // pred_region
    _
  $region17: #{forward.76} parent=0 // pred_fallthru
    _
  // Predicated region
  $region18: #{forward.76} parent=0 // pred_check
    _
  $region19: #{forward.76} parent=0 // pred_check_branch
    %78 = sbr.rel (0) target = $region21
  $region20: #{forward.76} parent=0 // pred_region
    _
  $region21: #{forward.76} parent=0 // pred_fallthru
    _

// kernel: forward.75
$region0: #{forward.75}
  #allocation0 [shape = 'u32[]', space=smem, size = 0x4, offset = 0x4, fixed_abs, tag = 'smem constant byte address 0x4 - core index']
  #allocation1 [shape = 'u32[144,128]{1,0:T(1,128)}', space=vmem, size = 0x12000, scoped, tag = 'internal scratch']
  %s0 = inlined_call_operand.vmem [shape: bf16[8,9], index: 0, kind: input, shape index: {}]
  %s1 = inlined_call_operand.vmem [shape: bf16[9,128], index: 1, kind: input, shape index: {}]
  %s2 = inlined_call_operand.vmem [shape: f32[8,1], index: 2, kind: input, shape index: {}]
  %s3 = inlined_call_operand.vmem [shape: f32[8,128], index: 3, kind: output, shape index: {}]
  %s4 = sld [smem:[#allocation0]]
  $region22: #{forward.75} parent=0
    _
  %s6 = ssub.s32 1, %s4
  %s7 = scalar_select 0, %s6, %s4
  // Predicated region
  $region2: #{forward.75} parent=0 // pred_check
    _
  $region3: #{forward.75} parent=0 // pred_check_branch
    %9 = sbr.rel (0) target = $region5
  $region4: #{forward.75} parent=0 // pred_region
    _
  $region5: #{forward.75} parent=0 // pred_fallthru
    _
  // Predicated region
  $region6: #{forward.75} parent=0 // pred_check
    _
  $region7: #{forward.75} parent=0 // pred_check_branch
    %11 = sbr.rel (0) target = $region9
  $region8: #{forward.75} parent=0 // pred_region
    _
  $region9: #{forward.75} parent=0 // pred_fallthru
    _
  // Predicated region
  $region10: #{forward.75} parent=0 // pred_check
    _
  $region11: #{forward.75} parent=0 // pred_check_branch
    %13 = sbr.rel (0) target = $region13
  $region12: #{forward.75} parent=0 // pred_region
    _
  $region13: #{forward.75} parent=0 // pred_fallthru
    _
  %v15 = vld [vmem:[%s0] sm:$0xf]
  %v16 = vld [vmem:[%s1] sm:$0xf]
  %v17 = vld [vmem:[%s1 + $0x4] sm:$0x1]
  %v18 = vld [vmem:[%s2] sm:$0xff]
  %20 = vset.pattern.permute.xlu0 0
  %21 = vperm.xlu0 %20, %v18
  %v22 = vpop.permute.xlu0 %21
  %v26 = vunpack.c.l.b16 %v16
  %v27 = vunpack.c.l.b16 %v17
  %v28 = vpack.c.b16 %v27, %v26
  %vm29 = vcmask 72704
  %v31 = vsel %vm29, %v15, 0
  %vm33 = vcmask 1043456
  %vm34 = vcmask 1044480
  %v35 = vsel %vm33, 4294967295, 65535
  %v36 = vsel %vm34, %v35, 0
  %v38 = vand.u32 %v28, %v36
  %40 = vmatprep.subr.bf16.mxu0 0
  %41 = vmatpush1.bf16.msra.mxu0 %v38
  %42 = vmatprep.subr.bf16.mxu0 0
  %43 = vmatpush1.bf16.msra.mxu0 0
  %44 = vmatprep.subr.bf16.mxu0 0
  %45 = vmatpush1.bf16.msra.mxu0 0
  %46 = vmatprep.subr.bf16.mxu0 0
  %47 = vmatpush1.bf16.msra.mxu0 0
  %48 = vmatprep.subr.bf16.mxu0 0
  %49 = vmatpush1.bf16.msra.mxu0 0
  %50 = vmatprep.subr.bf16.mxu0 0
  %51 = vmatpush1.bf16.msra.mxu0 0
  %52 = vmatprep.subr.bf16.mxu0 0
  %53 = vmatpush1.bf16.msra.mxu0 0
  %54 = vmatprep.subr.bf16.mxu0 0
  %55 = vmatpush1.bf16.msra.mxu0 0
  %56 = vmatprep.subr.bf16.mxu0 0
  %57 = vmatpush1.bf16.msra.mxu0 0
  %58 = vmatprep.subr.bf16.mxu0 0
  %59 = vmatpush1.bf16.msra.mxu0 0
  %60 = vmatprep.subr.bf16.mxu0 0
  %61 = vmatpush1.bf16.msra.mxu0 0
  %62 = vmatprep.subr.bf16.mxu0 0
  %63 = vmatpush1.bf16.msra.mxu0 0
  %64 = vmatprep.subr.bf16.mxu0 0
  %65 = vmatpush1.bf16.msra.mxu0 0
  %66 = vmatprep.subr.bf16.mxu0 0
  %67 = vmatpush1.bf16.msra.mxu0 0
  %68 = vmatprep.subr.bf16.mxu0 0
  %69 = vmatpush1.bf16.msra.mxu0 0
  %70 = vmatprep.subr.bf16.mxu0 0
  %71 = vmatpush1.bf16.msra.mxu0 0
  %72 = vmatprep.mubr.bf16.mxu0 0
  %73 = vmatmul.mubr.bf16.gmra.mrb[0].mxu0 %v31
  %v74 = vpop.f32.mrb[0].mxu0
  %v75 = vadd.f32 %v22, %v74
  %v76 = vpop.f32.mrb[0].mxu0
  %v77 = vpop.f32.mrb[0].mxu0
  %v78 = vpop.f32.mrb[0].mxu0
  %79 = vdwg.mxu0
  %vm80 = vcmp.ge.f32.partialorder %v75, 0.0
  %v81 = vmul.f32 %v75, 0.25
  %v82 = vsel %vm80, %v75, %v81
  %83 = vst [vmem:[%s3] sm:$0xff] %v82
  // Predicated region
  $region14: #{forward.75} parent=0 // pred_check
    _
  $region15: #{forward.75} parent=0 // pred_check_branch
    %85 = sbr.rel (0) target = $region17
  $region16: #{forward.75} parent=0 // pred_region
    _
  $region17: #{forward.75} parent=0 // pred_fallthru
    _
  // Predicated region
  $region18: #{forward.75} parent=0 // pred_check
    _
  $region19: #{forward.75} parent=0 // pred_check_branch
    %87 = sbr.rel (0) target = $region21
  $region20: #{forward.75} parent=0 // pred_region
    _
  $region21: #{forward.75} parent=0 // pred_fallthru
    _

// kernel: forward.79
$region0: #{forward.79}
  #allocation0 [shape = 'u32[]', space=smem, size = 0x4, offset = 0x4, fixed_abs, tag = 'smem constant byte address 0x4 - core index']
  #allocation1 [shape = 'u32[144,128]{1,0:T(1,128)}', space=vmem, size = 0x12000, scoped, tag = 'internal scratch']
  %s0 = inlined_call_operand.vmem [shape: bf16[32,72], index: 0, kind: input, shape index: {}]
  %s1 = inlined_call_operand.vmem [shape: bf16[72,128], index: 1, kind: input, shape index: {}]
  %s2 = inlined_call_operand.vmem [shape: f32[32,1], index: 2, kind: input, shape index: {}]
  %s3 = inlined_call_operand.vmem [shape: f32[32,128], index: 3, kind: output, shape index: {}]
  %s4 = sld [smem:[#allocation0]]
  $region22: #{forward.79} parent=0
    _
  %s6 = ssub.s32 1, %s4
  %s7 = scalar_select 0, %s6, %s4
  // Predicated region
  $region2: #{forward.79} parent=0 // pred_check
    _
  $region3: #{forward.79} parent=0 // pred_check_branch
    %9 = sbr.rel (0) target = $region5
  $region4: #{forward.79} parent=0 // pred_region
    _
  $region5: #{forward.79} parent=0 // pred_fallthru
    _
  // Predicated region
  $region6: #{forward.79} parent=0 // pred_check
    _
  $region7: #{forward.79} parent=0 // pred_check_branch
    %11 = sbr.rel (0) target = $region9
  $region8: #{forward.79} parent=0 // pred_region
    _
  $region9: #{forward.79} parent=0 // pred_fallthru
    _
  // Predicated region
  $region10: #{forward.79} parent=0 // pred_check
    _
  $region11: #{forward.79} parent=0 // pred_check_branch
    %13 = sbr.rel (0) target = $region13
  $region12: #{forward.79} parent=0 // pred_region
    _
  $region13: #{forward.79} parent=0 // pred_fallthru
    _
  %v15 = vld [vmem:[%s0] sm:$0xf]
  %v16 = vld [vmem:[%s0 + $0x4] sm:$0xf]
  %v17 = vld [vmem:[%s0 + $0x8] sm:$0xf]
  %v18 = vld [vmem:[%s0 + $0xc] sm:$0xf]
  %v19 = vld [vmem:[%s1] sm:$0xf]
  %v20 = vld [vmem:[%s1 + $0x4] sm:$0xf]
  %v21 = vld [vmem:[%s1 + $0x8] sm:$0xf]
  %v22 = vld [vmem:[%s1 + $0xc] sm:$0xf]
  %v23 = vld [vmem:[%s1 + $0x10] sm:$0xf]
  %v24 = vld [vmem:[%s1 + $0x14] sm:$0xf]
  %v25 = vld [vmem:[%s1 + $0x18] sm:$0xf]
  %v26 = vld [vmem:[%s1 + $0x1c] sm:$0xf]
  %v27 = vld [vmem:[%s1 + $0x20] sm:$0xf]
  %v28 = vld [vmem:[%s2] sm:$0xff]
  %v29 = vld [vmem:[%s2 + $0x8] sm:$0xff]
  %v30 = vld [vmem:[%s2 + $0x10] sm:$0xff]
  %v31 = vld [vmem:[%s2 + $0x18] sm:$0xff]
  %33 = vset.pattern.permute.xlu0 0
  %34 = vperm.xlu0 %33, %v28
  %v35 = vpop.permute.xlu0 %34
  %38 = vset.pattern.permute.xlu0 0
  %39 = vperm.xlu0 %38, %v29
  %v40 = vpop.permute.xlu0 %39
  %43 = vset.pattern.permute.xlu0 0
  %44 = vperm.xlu0 %43, %v30
  %v45 = vpop.permute.xlu0 %44
  %48 = vset.pattern.permute.xlu0 0
  %49 = vperm.xlu0 %48, %v31
  %v50 = vpop.permute.xlu0 %49
  %v56 = vunpack.c.l.b16 %v15
  %v57 = vunpack.c.l.b16 %v16
  %v58 = vunpack.c.l.b16 %v17
  %v59 = vunpack.c.l.b16 %v18
  %v60 = vpack.c.b16 %v57, %v56
  %v61 = vpack.c.b16 %v59, %v58
  %v71 = vunpack.c.l.b16 %v19
  %v72 = vunpack.c.l.b16 %v20
  %v73 = vunpack.c.l.b16 %v21
  %v74 = vunpack.c.l.b16 %v22
  %v75 = vunpack.c.l.b16 %v23
  %v76 = vunpack.c.l.b16 %v24
  %v77 = vunpack.c.l.b16 %v25
  %v78 = vunpack.c.l.b16 %v26
  %v79 = vunpack.c.l.b16 %v27
  %v80 = vpack.c.b16 %v72, %v71
  %v81 = vpack.c.b16 %v74, %v73
  %v82 = vpack.c.b16 %v76, %v75
  %v83 = vpack.c.b16 %v78, %v77
  %v84 = vpack.c.b16 %v79, %v79
  %vm89 = vcmask 588800
  %v91 = vsel %vm89, %v60, 0
  %v94 = vsel %vm89, %v61, 0
  %vm96 = vcmask 1043456
  %v98 = vsel %vm96, %v84, 0
  %100 = vmatprep.subr.bf16.mxu0 0
  %101 = vmatpush1.bf16.msra.mxu0 %v80
  %102 = vmatprep.subr.bf16.mxu0 0
  %103 = vmatpush1.bf16.msra.mxu0 %v81
  %104 = vmatprep.subr.bf16.mxu0 0
  %105 = vmatpush1.bf16.msra.mxu0 %v82
  %106 = vmatprep.subr.bf16.mxu0 0
  %107 = vmatpush1.bf16.msra.mxu0 %v83
  %108 = vmatprep.subr.bf16.mxu0 0
  %109 = vmatpush1.bf16.msra.mxu0 %v98
  %110 = vmatprep.subr.bf16.mxu0 0
  %111 = vmatpush1.bf16.msra.mxu0 0
  %112 = vmatprep.subr.bf16.mxu0 0
  %113 = vmatpush1.bf16.msra.mxu0 0
  %114 = vmatprep.subr.bf16.mxu0 0
  %115 = vmatpush1.bf16.msra.mxu0 0
  %116 = vmatprep.subr.bf16.mxu0 0
  %117 = vmatpush1.bf16.msra.mxu0 0
  %118 = vmatprep.subr.bf16.mxu0 0
  %119 = vmatpush1.bf16.msra.mxu0 0
  %120 = vmatprep.subr.bf16.mxu0 0
  %121 = vmatpush1.bf16.msra.mxu0 0
  %122 = vmatprep.subr.bf16.mxu0 0
  %123 = vmatpush1.bf16.msra.mxu0 0
  %124 = vmatprep.subr.bf16.mxu0 0
  %125 = vmatpush1.bf16.msra.mxu0 0
  %126 = vmatprep.subr.bf16.mxu0 0
  %127 = vmatpush1.bf16.msra.mxu0 0
  %128 = vmatprep.subr.bf16.mxu0 0
  %129 = vmatpush1.bf16.msra.mxu0 0
  %130 = vmatprep.subr.bf16.mxu0 0
  %131 = vmatpush1.bf16.msra.mxu0 0
  %132 = vmatprep.mubr.bf16.mxu0 0
  %133 = vmatmul.mubr.bf16.gmra.mrb[0].mxu0 %v91
  %v134 = vpop.f32.mrb[0].mxu0
  %v135 = vadd.f32 %v35, %v134
  %v136 = vpop.f32.mrb[0].mxu0
  %v137 = vpop.f32.mrb[0].mxu0
  %v138 = vadd.f32 %v40, %v137
  %v139 = vpop.f32.mrb[0].mxu0
  %140 = vmatprep.mubr.bf16.mxu0 0
  %141 = vmatmul.mubr.bf16.gmra.mrb[0].mxu0 %v94
  %v142 = vpop.f32.mrb[0].mxu0
  %v143 = vadd.f32 %v45, %v142
  %v144 = vpop.f32.mrb[0].mxu0
  %v145 = vpop.f32.mrb[0].mxu0
  %v146 = vadd.f32 %v50, %v145
  %v147 = vpop.f32.mrb[0].mxu0
  %148 = vdwg.mxu0
  %vm149 = vcmp.ge.f32.partialorder %v135, 0.0
  %vm150 = vcmp.ge.f32.partialorder %v138, 0.0
  %vm151 = vcmp.ge.f32.partialorder %v143, 0.0
  %vm152 = vcmp.ge.f32.partialorder %v146, 0.0
  %v153 = vmul.f32 %v135, 0.25
  %v154 = vmul.f32 %v138, 0.25
  %v155 = vmul.f32 %v143, 0.25
  %v156 = vmul.f32 %v146, 0.25
  %v157 = vsel %vm149, %v135, %v153
  %v158 = vsel %vm150, %v138, %v154
  %v159 = vsel %vm151, %v143, %v155
  %v160 = vsel %vm152, %v146, %v156
  %161 = vst [vmem:[%s3] sm:$0xff] %v157
  %162 = vst [vmem:[%s3 + $0x8] sm:$0xff] %v158
  %163 = vst [vmem:[%s3 + $0x10] sm:$0xff] %v159
  %164 = vst [vmem:[%s3 + $0x18] sm:$0xff] %v160
  // Predicated region
  $region14: #{forward.79} parent=0 // pred_check
    _
  $region15: #{forward.79} parent=0 // pred_check_branch
    %166 = sbr.rel (0) target = $region17
  $region16: #{forward.79} parent=0 // pred_region
    _
  $region17: #{forward.79} parent=0 // pred_fallthru
    _
  // Predicated region
  $region18: #{forward.79} parent=0 // pred_check
    _
  $region19: #{forward.79} parent=0 // pred_check_branch
    %168 = sbr.rel (0) target = $region21
  $region20: #{forward.79} parent=0 // pred_region
    _
  $region21: #{forward.79} parent=0 // pred_fallthru
    _

// kernel: forward.80
$region0: #{forward.80}
  #allocation0 [shape = 'u32[]', space=smem, size = 0x4, offset = 0x4, fixed_abs, tag = 'smem constant byte address 0x4 - core index']
  #allocation1 [shape = 'u32[144,128]{1,0:T(1,128)}', space=vmem, size = 0x12000, scoped, tag = 'internal scratch']
  %s0 = inlined_call_operand.vmem [shape: bf16[8,288], index: 0, kind: input, shape index: {}]
  %s1 = inlined_call_operand.vmem [shape: bf16[288,128], index: 1, kind: input, shape index: {}]
  %s2 = inlined_call_operand.vmem [shape: f32[8,1], index: 2, kind: input, shape index: {}]
  %s3 = inlined_call_operand.vmem [shape: f32[8,128], index: 3, kind: output, shape index: {}]
  %s4 = sld [smem:[#allocation0]]
  $region22: #{forward.80} parent=0
    _
  %s6 = ssub.s32 1, %s4
  %s7 = scalar_select 0, %s6, %s4
  // Predicated region
  $region2: #{forward.80} parent=0 // pred_check
    _
  $region3: #{forward.80} parent=0 // pred_check_branch
    %9 = sbr.rel (0) target = $region5
  $region4: #{forward.80} parent=0 // pred_region
    _
  $region5: #{forward.80} parent=0 // pred_fallthru
    _
  // Predicated region
  $region6: #{forward.80} parent=0 // pred_check
    _
  $region7: #{forward.80} parent=0 // pred_check_branch
    %11 = sbr.rel (0) target = $region9
  $region8: #{forward.80} parent=0 // pred_region
    _
  $region9: #{forward.80} parent=0 // pred_fallthru
    _
  // Predicated region
  $region10: #{forward.80} parent=0 // pred_check
    _
  $region11: #{forward.80} parent=0 // pred_check_branch
    %13 = sbr.rel (0) target = $region13
  $region12: #{forward.80} parent=0 // pred_region
    _
  $region13: #{forward.80} parent=0 // pred_fallthru
    _
  %v15 = vld [vmem:[%s0] sm:$0xff]
  %v16 = vld [vmem:[%s0 + $0x8] sm:$0xf]
  %v17 = vld [vmem:[%s1] sm:$0xf]
  %v18 = vld [vmem:[%s1 + $0x4] sm:$0xf]
  %v19 = vld [vmem:[%s1 + $0x8] sm:$0xf]
  %v20 = vld [vmem:[%s1 + $0xc] sm:$0xf]
  %v21 = vld [vmem:[%s1 + $0x10] sm:$0xf]
  %v22 = vld [vmem:[%s1 + $0x14] sm:$0xf]
  %v23 = vld [vmem:[%s1 + $0x18] sm:$0xf]
  %v24 = vld [vmem:[%s1 + $0x1c] sm:$0xf]
  %v25 = vld [vmem:[%s1 + $0x20] sm:$0xf]
  %v26 = vld [vmem:[%s1 + $0x24] sm:$0xf]
  %v27 = vld [vmem:[%s1 + $0x28] sm:$0xf]
  %v28 = vld [vmem:[%s1 + $0x2c] sm:$0xf]
  %v29 = vld [vmem:[%s1 + $0x30] sm:$0xf]
  %v30 = vld [vmem:[%s1 + $0x34] sm:$0xf]
  %v31 = vld [vmem:[%s1 + $0x38] sm:$0xf]
  %v32 = vld [vmem:[%s1 + $0x3c] sm:$0xf]
  %v33 = vld [vmem:[%s1 + $0x40] sm:$0xf]
  %v34 = vld [vmem:[%s1 + $0x44] sm:$0xf]
  %v35 = vld [vmem:[%s1 + $0x48] sm:$0xf]
  %v36 = vld [vmem:[%s1 + $0x4c] sm:$0xf]
  %v37 = vld [vmem:[%s1 + $0x50] sm:$0xf]
  %v38 = vld [vmem:[%s1 + $0x54] sm:$0xf]
  %v39 = vld [vmem:[%s1 + $0x58] sm:$0xf]
  %v40 = vld [vmem:[%s1 + $0x5c] sm:$0xf]
  %v41 = vld [vmem:[%s1 + $0x60] sm:$0xf]
  %v42 = vld [vmem:[%s1 + $0x64] sm:$0xf]
  %v43 = vld [vmem:[%s1 + $0x68] sm:$0xf]
  %v44 = vld [vmem:[%s1 + $0x6c] sm:$0xf]
  %v45 = vld [vmem:[%s1 + $0x70] sm:$0xf]
  %v46 = vld [vmem:[%s1 + $0x74] sm:$0xf]
  %v47 = vld [vmem:[%s1 + $0x78] sm:$0xf]
  %v48 = vld [vmem:[%s1 + $0x7c] sm:$0xf]
  %v49 = vld [vmem:[%s1 + $0x80] sm:$0xf]
  %v50 = vld [vmem:[%s1 + $0x84] sm:$0xf]
  %v51 = vld [vmem:[%s1 + $0x88] sm:$0xf]
  %v52 = vld [vmem:[%s1 + $0x8c] sm:$0xf]
  %v53 = vld [vmem:[%s2] sm:$0xff]
  %55 = vset.pattern.permute.xlu0 0
  %56 = vperm.xlu0 %55, %v53
  %v57 = vpop.permute.xlu0 %56
  %v61 = vunpack.c.l.b16 %v15
  %v62 = vunpack.c.h.b16 %v15
  %v63 = vunpack.c.l.b16 %v16
  %v64 = vpack.c.b16 %v61, %v61
  %v65 = vpack.c.b16 %v62, %v62
  %v66 = vpack.c.b16 %v63, %v63
  %v105 = vunpack.c.l.b16 %v17
  %v106 = vunpack.c.l.b16 %v18
  %v107 = vunpack.c.l.b16 %v19
  %v108 = vunpack.c.l.b16 %v20
  %v109 = vunpack.c.l.b16 %v21
  %v110 = vunpack.c.l.b16 %v22
  %v111 = vunpack.c.l.b16 %v23
  %v112 = vunpack.c.l.b16 %v24
  %v113 = vunpack.c.l.b16 %v25
  %v114 = vunpack.c.l.b16 %v26
  %v115 = vunpack.c.l.b16 %v27
  %v116 = vunpack.c.l.b16 %v28
  %v117 = vunpack.c.l.b16 %v29
  %v118 = vunpack.c.l.b16 %v30
  %v119 = vunpack.c.l.b16 %v31
  %v120 = vunpack.c.l.b16 %v32
  %v121 = vunpack.c.l.b16 %v33
  %v122 = vunpack.c.l.b16 %v34
  %v123 = vunpack.c.l.b16 %v35
  %v124 = vunpack.c.l.b16 %v36
  %v125 = vunpack.c.l.b16 %v37
  %v126 = vunpack.c.l.b16 %v38
  %v127 = vunpack.c.l.b16 %v39
  %v128 = vunpack.c.l.b16 %v40
  %v129 = vunpack.c.l.b16 %v41
  %v130 = vunpack.c.l.b16 %v42
  %v131 = vunpack.c.l.b16 %v43
  %v132 = vunpack.c.l.b16 %v44
  %v133 = vunpack.c.l.b16 %v45
  %v134 = vunpack.c.l.b16 %v46
  %v135 = vunpack.c.l.b16 %v47
  %v136 = vunpack.c.l.b16 %v48
  %v137 = vunpack.c.l.b16 %v49
  %v138 = vunpack.c.l.b16 %v50
  %v139 = vunpack.c.l.b16 %v51
  %v140 = vunpack.c.l.b16 %v52
  %v141 = vpack.c.b16 %v106, %v105
  %v142 = vpack.c.b16 %v108, %v107
  %v143 = vpack.c.b16 %v110, %v109
  %v144 = vpack.c.b16 %v112, %v111
  %v145 = vpack.c.b16 %v114, %v113
  %v146 = vpack.c.b16 %v116, %v115
  %v147 = vpack.c.b16 %v118, %v117
  %v148 = vpack.c.b16 %v120, %v119
  %v149 = vpack.c.b16 %v122, %v121
  %v150 = vpack.c.b16 %v124, %v123
  %v151 = vpack.c.b16 %v126, %v125
  %v152 = vpack.c.b16 %v128, %v127
  %v153 = vpack.c.b16 %v130, %v129
  %v154 = vpack.c.b16 %v132, %v131
  %v155 = vpack.c.b16 %v134, %v133
  %v156 = vpack.c.b16 %v136, %v135
  %v157 = vpack.c.b16 %v138, %v137
  %v158 = vpack.c.b16 %v140, %v139
  %vm177 = vcmask 261120
  %v179 = vsel %vm177, %v66, 0
  %181 = vmatprep.subr.bf16.mxu0 0
  %182 = vmatpush1.bf16.msra.mxu0 %v141
  %183 = vmatprep.subr.bf16.mxu0 0
  %184 = vmatpush1.bf16.msra.mxu0 %v142
  %185 = vmatprep.subr.bf16.mxu0 0
  %186 = vmatpush1.bf16.msra.mxu0 %v143
  %187 = vmatprep.subr.bf16.mxu0 0
  %188 = vmatpush1.bf16.msra.mxu0 %v144
  %189 = vmatprep.subr.bf16.mxu0 0
  %190 = vmatpush1.bf16.msra.mxu0 %v145
  %191 = vmatprep.subr.bf16.mxu0 0
  %192 = vmatpush1.bf16.msra.mxu0 %v146
  %193 = vmatprep.subr.bf16.mxu0 0
  %194 = vmatpush1.bf16.msra.mxu0 %v147
  %195 = vmatprep.subr.bf16.mxu0 0
  %196 = vmatpush1.bf16.msra.mxu0 %v148
  %197 = vmatprep.subr.bf16.mxu0 0
  %198 = vmatpush1.bf16.msra.mxu0 %v149
  %199 = vmatprep.subr.bf16.mxu0 0
  %200 = vmatpush1.bf16.msra.mxu0 %v150
  %201 = vmatprep.subr.bf16.mxu0 0
  %202 = vmatpush1.bf16.msra.mxu0 %v151
  %203 = vmatprep.subr.bf16.mxu0 0
  %204 = vmatpush1.bf16.msra.mxu0 %v152
  %205 = vmatprep.subr.bf16.mxu0 0
  %206 = vmatpush1.bf16.msra.mxu0 %v153
  %207 = vmatprep.subr.bf16.mxu0 0
  %208 = vmatpush1.bf16.msra.mxu0 %v154
  %209 = vmatprep.subr.bf16.mxu0 0
  %210 = vmatpush1.bf16.msra.mxu0 %v155
  %211 = vmatprep.subr.bf16.mxu0 0
  %212 = vmatpush1.bf16.msra.mxu0 %v156
  %213 = vmatprep.mubr.bf16.mxu0 %v65
  %214 = vmatmul.mubr.bf16.gmra.mrb[0].mxu0 %v64
  %v215 = vpop.f32.mrb[0].mxu0
  %v216 = vadd.f32 %v57, %v215
  %v217 = vpop.f32.mrb[0].mxu0
  %v218 = vpop.f32.mrb[0].mxu0
  %v219 = vpop.f32.mrb[0].mxu0
  %220 = vdwg.mxu0
  %221 = vmatprep.subr.bf16.mxu0 0
  %222 = vmatpush1.bf16.msra.mxu0 %v157
  %223 = vmatprep.subr.bf16.mxu0 0
  %224 = vmatpush1.bf16.msra.mxu0 %v158
  %225 = vmatprep.subr.bf16.mxu0 0
  %226 = vmatpush1.bf16.msra.mxu0 0
  %227 = vmatprep.subr.bf16.mxu0 0
  %228 = vmatpush1.bf16.msra.mxu0 0
  %229 = vmatprep.subr.bf16.mxu0 0
  %230 = vmatpush1.bf16.msra.mxu0 0
  %231 = vmatprep.subr.bf16.mxu0 0
  %232 = vmatpush1.bf16.msra.mxu0 0
  %233 = vmatprep.subr.bf16.mxu0 0
  %234 = vmatpush1.bf16.msra.mxu0 0
  %235 = vmatprep.subr.bf16.mxu0 0
  %236 = vmatpush1.bf16.msra.mxu0 0
  %237 = vmatprep.subr.bf16.mxu0 0
  %238 = vmatpush1.bf16.msra.mxu0 0
  %239 = vmatprep.subr.bf16.mxu0 0
  %240 = vmatpush1.bf16.msra.mxu0 0
  %241 = vmatprep.subr.bf16.mxu0 0
  %242 = vmatpush1.bf16.msra.mxu0 0
  %243 = vmatprep.subr.bf16.mxu0 0
  %244 = vmatpush1.bf16.msra.mxu0 0
  %245 = vmatprep.subr.bf16.mxu0 0
  %246 = vmatpush1.bf16.msra.mxu0 0
  %247 = vmatprep.subr.bf16.mxu0 0
  %248 = vmatpush1.bf16.msra.mxu0 0
  %249 = vmatprep.subr.bf16.mxu0 0
  %250 = vmatpush1.bf16.msra.mxu0 0
  %251 = vmatprep.subr.bf16.mxu0 0
  %252 = vmatpush1.bf16.msra.mxu0 0
  %253 = vmatprep.mubr.bf16.mxu0 0
  %254 = vmatmul.mubr.bf16.gmra.mrb[0].mxu0 %v179
  %v255 = vpop.f32.mrb[0].mxu0
  %v256 = vadd.f32 %v216, %v255
  %v257 = vpop.f32.mrb[0].mxu0
  %v258 = vpop.f32.mrb[0].mxu0
  %v259 = vpop.f32.mrb[0].mxu0
  %260 = vdwg.mxu0
  %vm261 = vcmp.ge.f32.partialorder %v256, 0.0
  %v262 = vmul.f32 %v256, 0.25
  %v263 = vsel %vm261, %v256, %v262
  %264 = vst [vmem:[%s3] sm:$0xff] %v263
  // Predicated region
  $region14: #{forward.80} parent=0 // pred_check
    _
  $region15: #{forward.80} parent=0 // pred_check_branch
    %266 = sbr.rel (0) target = $region17
  $region16: #{forward.80} parent=0 // pred_region
    _
  $region17: #{forward.80} parent=0 // pred_fallthru
    _
  // Predicated region
  $region18: #{forward.80} parent=0 // pred_check
    _
  $region19: #{forward.80} parent=0 // pred_check_branch
    %268 = sbr.rel (0) target = $region21
  $region20: #{forward.80} parent=0 // pred_region
    _
  $region21: #{forward.80} parent=0 // pred_fallthru
    _

// kernel: forward.91
$region0: #{forward.91}
  #allocation0 [shape = 'u32[]', space=smem, size = 0x4, offset = 0x4, fixed_abs, tag = 'smem constant byte address 0x4 - core index']
  #allocation1 [shape = 'u32[144,128]{1,0:T(1,128)}', space=vmem, size = 0x12000, scoped, tag = 'internal scratch']
  %s0 = inlined_call_operand.vmem [shape: bf16[8,144], index: 0, kind: input, shape index: {}]
  %s1 = inlined_call_operand.vmem [shape: bf16[144,512], index: 1, kind: input, shape index: {}]
  %s2 = inlined_call_operand.vmem [shape: f32[8,1], index: 2, kind: input, shape index: {}]
  %s3 = inlined_call_operand.vmem [shape: f32[8,512], index: 3, kind: output, shape index: {}]
  %s4 = sld [smem:[#allocation0]]
  $region83: #{forward.91} parent=0
    _
  %s6 = ssub.s32 1, %s4
  %s7 = scalar_select 0, %s6, %s4
  $region1: #{forward.91} parent=0
    #allocation2 [shape = 'u8[147456]{0}', space=vmem, size = 0x24000, scoped, tag = 'input window, operand 1']
    loop: start=0, step=1, limit=4
    $region2: #{forward.91} parent=1 // loop_pre_header
      _
    $region3: #{forward.91} parent=1 // loop_header
      %s9 = sphi 0, %s13
      %p10 = scmp.ge.s32.totalorder %s9, 4
      %s17 = sphi 0, %s17
      %s19 = sphi 0, %s17
      %s20 = sphi 0, %s19
      %s34 = sphi 0, %s20
      %s40 = sphi 0, %s42
      %s43 = sphi 0, %s40
      %s44 = sphi 0, %s43
      %s60 = sphi 0, %s44
      %s64 = sphi 0, %s64
      %s66 = sphi 0, %s64
      %s67 = sphi 0, %s66
      %s81 = sphi 0, %s67
      %s87 = sphi 0, %s89
      %s90 = sphi 0, %s87
      %s91 = sphi 0, %s90
      %s107 = sphi 0, %s91
    $region4: #{forward.91} parent=1 // loop_header_branch
      %12 = sbr.rel (%p10) target = $region8
    $region5: #{forward.91} parent=1 // loop_body
      %s14 = ssub.s32 %s9, 1
      %s15 = ssub.s32 %s9, 2
      %s16 = sadd.s32 %s9, 1
      %s18 = sadd.s32 %s17, 1
      %p21 = scmp.eq.s32.totalorder %s9, 1
      %p22 = scmp.ne.s32.totalorder %s17, %s19
      %p23 = scmp.eq.s32.totalorder %s9, 0
      %p24 = por %p22, %p23
      %p25 = scmp.ne.s32.totalorder %s17, %s19
      %p26 = scmp.eq.s32.totalorder %s14, 1
      %p27 = por %p25, %p26
      %p28 = scmp.ne.s32.totalorder %s19, %s20
      %p29 = scmp.eq.s32.totalorder %s14, 0
      %p30 = por %p28, %p29
      %p31 = scmp.ne.s32.totalorder %s19, %s20
      %p32 = scmp.eq.s32.totalorder %s15, 1
      %p33 = por %p31, %p32
      %p35 = scmp.ne.s32.totalorder %s20, %s34
      %p36 = scmp.eq.s32.totalorder %s15, 0
      %p37 = por %p35, %p36
      %s38 = ssub.s32 %s9, %s16
      %p39 = scmp.eq.s32.totalorder %s38, 0
      %s41 = sadd.s32 %s40, 1
      %s42 = scalar_select %p39, %s40, %s41
      %p45 = pneg %p39
      %p46 = scmp.eq.s32.totalorder %s9, 1
      %p47 = por %p45, %p46
      %p48 = scmp.ne.s32.totalorder %s40, %s43
      %p49 = scmp.eq.s32.totalorder %s9, 0
      %p50 = por %p48, %p49
      %p51 = scmp.ne.s32.totalorder %s40, %s43
      %p52 = scmp.eq.s32.totalorder %s14, 1
      %p53 = por %p51, %p52
      %p54 = scmp.ne.s32.totalorder %s43, %s44
      %p55 = scmp.eq.s32.totalorder %s14, 0
      %p56 = por %p54, %p55
      %p57 = scmp.ne.s32.totalorder %s43, %s44
      %p58 = scmp.eq.s32.totalorder %s15, 1
      %p59 = por %p57, %p58
      %p61 = scmp.ne.s32.totalorder %s44, %s60
      %p62 = scmp.eq.s32.totalorder %s15, 0
      %p63 = por %p61, %p62
      %s65 = sadd.s32 %s64, 1
      %p68 = scmp.eq.s32.totalorder %s9, 1
      %p69 = scmp.ne.s32.totalorder %s64, %s66
      %p70 = scmp.eq.s32.totalorder %s9, 0
      %p71 = por %p69, %p70
      %p72 = scmp.ne.s32.totalorder %s64, %s66
      %p73 = scmp.eq.s32.totalorder %s14, 1
      %p74 = por %p72, %p73
      %p75 = scmp.ne.s32.totalorder %s66, %s67
      %p76 = scmp.eq.s32.totalorder %s14, 0
      %p77 = por %p75, %p76
      %p78 = scmp.ne.s32.totalorder %s66, %s67
      %p79 = scmp.eq.s32.totalorder %s15, 1
      %p80 = por %p78, %p79
      %p82 = scmp.ne.s32.totalorder %s67, %s81
      %p83 = scmp.eq.s32.totalorder %s15, 0
      %p84 = por %p82, %p83
      %s85 = ssub.s32 %s9, %s16
      %p86 = scmp.eq.s32.totalorder %s85, 0
      %s88 = sadd.s32 %s87, 1
      %s89 = scalar_select %p86, %s87, %s88
      %p92 = pneg %p86
      %p93 = scmp.eq.s32.totalorder %s9, 1
      %p94 = por %p92, %p93
      %p95 = scmp.ne.s32.totalorder %s87, %s90
      %p96 = scmp.eq.s32.totalorder %s9, 0
      %p97 = por %p95, %p96
      %p98 = scmp.ne.s32.totalorder %s87, %s90
      %p99 = scmp.eq.s32.totalorder %s14, 1
      %p100 = por %p98, %p99
      %p101 = scmp.ne.s32.totalorder %s90, %s91
      %p102 = scmp.eq.s32.totalorder %s14, 0
      %p103 = por %p101, %p102
      %p104 = scmp.ne.s32.totalorder %s90, %s91
      %p105 = scmp.eq.s32.totalorder %s15, 1
      %p106 = por %p104, %p105
      %p108 = scmp.ne.s32.totalorder %s91, %s107
      %p109 = scmp.eq.s32.totalorder %s15, 0
      %p110 = por %p108, %p109
      %p111 = scmp.le.s32.totalorder 1, %s9
      %p112 = scmp.lt.s32.totalorder %s9, 3
      %p113 = pnand %p111, %p112
      %p114 = pneg %p113
      // Predicated region
      $region9: #{forward.91} parent=5 // pred_check
        _
      $region10: #{forward.91} parent=5 // pred_check_branch
        %116 = sbr.rel (%p113) target = $region12
      $region11: #{forward.91} parent=5 // pred_region
        %s117 = ssub.s32 %s9, 1
        // Predicated region
        $region13: #{forward.91} parent=11 // pred_check
          %p118 = pneg %p30
        $region14: #{forward.91} parent=11 // pred_check_branch
          %120 = sbr.rel (%p118) target = $region16
        $region15: #{forward.91} parent=11 // pred_region
          _
        $region16: #{forward.91} parent=11 // pred_fallthru
          _
        // Predicated region
        $region17: #{forward.91} parent=11 // pred_check
          %p121 = pneg %p77
        $region18: #{forward.91} parent=11 // pred_check_branch
          %123 = sbr.rel (%p121) target = $region20
        $region19: #{forward.91} parent=11 // pred_region
          _
        $region20: #{forward.91} parent=11 // pred_fallthru
          _
      $region12: #{forward.91} parent=5 // pred_fallthru
        _
      %p124 = scmp.lt.s32.totalorder %s9, 2
      // Predicated region
      $region21: #{forward.91} parent=5 // pred_check
        %p125 = pneg %p124
      $region22: #{forward.91} parent=5 // pred_check_branch
        %127 = sbr.rel (%p125) target = $region24
      $region23: #{forward.91} parent=5 // pred_region
        // Predicated region
        $region25: #{forward.91} parent=23 // pred_check
          %p128 = pneg %p50
        $region26: #{forward.91} parent=23 // pred_check_branch
          %130 = sbr.rel (%p128) target = $region28
        $region27: #{forward.91} parent=23 // pred_region
          %s131 = sand.u32 %s40, 1
          %s132 = sand.u32 %s40, 1
          %s133 = smul.addr %s132, 144
          %s134 = scalar_lea.vmem [#allocation2], %s133
          %s135 = smul.u32 2, %s9
          %s136 = smul.addr %s135, 4
          %s137 = scalar_lea.vmem %s1, %s136
          // Predicated region
          $region29: #{forward.91} parent=27 // pred_check
            _
          $region30: #{forward.91} parent=27 // pred_check_branch
            %139 = sbr.rel (0) target = $region32
          $region31: #{forward.91} parent=27 // pred_region
            // Predicated region
            $region33: #{forward.91} parent=31 // pred_check
              _
            $region34: #{forward.91} parent=31 // pred_check_branch
              %141 = sbr.rel (0) target = $region36
            $region35: #{forward.91} parent=31 // pred_region
              // Predicated region
              $region48: #{forward.91} parent=35 // pred_check
                _
              $region49: #{forward.91} parent=35 // pred_check_branch
                %190 = sbr.rel (0) target = $region51
              $region50: #{forward.91} parent=35 // pred_region
                loop: start=0, step=1, limit=1
                $region52: #{forward.91} parent=50 // loop_pre_header
                  _
                $region53: #{forward.91} parent=50 // loop_header
                  %s192 = sphi 0, %s196
                  %p193 = scmp.ge.s32.totalorder %s192, 1
                  %s197 = sphi %s137, %s137
                  %s198 = sphi %s134, %s134
                $region54: #{forward.91} parent=50 // loop_header_branch
                  %195 = sbr.rel (%p193) target = $region58
                $region55: #{forward.91} parent=50 // loop_body
                  %v199 = vld [vmem:[%s197] sm:$0xff]
                  %200 = vst [vmem:[%s198] sm:$0xff] %v199
                  %v201 = vld [vmem:[%s197 + $0x10] sm:$0xff]
                  %202 = vst [vmem:[%s198 + $0x8] sm:$0xff] %v201
                  %v203 = vld [vmem:[%s197 + $0x20] sm:$0xff]
                  %204 = vst [vmem:[%s198 + $0x10] sm:$0xff] %v203
                  %v205 = vld [vmem:[%s197 + $0x30] sm:$0xff]
                  %206 = vst [vmem:[%s198 + $0x18] sm:$0xff] %v205
                  %v207 = vld [vmem:[%s197 + $0x40] sm:$0xff]
                  %208 = vst [vmem:[%s198 + $0x20] sm:$0xff] %v207
                  %v209 = vld [vmem:[%s197 + $0x50] sm:$0xff]
                  %210 = vst [vmem:[%s198 + $0x28] sm:$0xff] %v209
                  %v211 = vld [vmem:[%s197 + $0x60] sm:$0xff]
                  %212 = vst [vmem:[%s198 + $0x30] sm:$0xff] %v211
                  %v213 = vld [vmem:[%s197 + $0x70] sm:$0xff]
                  %214 = vst [vmem:[%s198 + $0x38] sm:$0xff] %v213
                  %v215 = vld [vmem:[%s197 + $0x80] sm:$0xff]
                  %216 = vst [vmem:[%s198 + $0x40] sm:$0xff] %v215
                  %v217 = vld [vmem:[%s197 + $0x90] sm:$0xff]
                  %218 = vst [vmem:[%s198 + $0x48] sm:$0xff] %v217
                  %v219 = vld [vmem:[%s197 + $0xa0] sm:$0xff]
                  %220 = vst [vmem:[%s198 + $0x50] sm:$0xff] %v219
                  %v221 = vld [vmem:[%s197 + $0xb0] sm:$0xff]
                  %222 = vst [vmem:[%s198 + $0x58] sm:$0xff] %v221
                  %v223 = vld [vmem:[%s197 + $0xc0] sm:$0xff]
                  %224 = vst [vmem:[%s198 + $0x60] sm:$0xff] %v223
                  %v225 = vld [vmem:[%s197 + $0xd0] sm:$0xff]
                  %226 = vst [vmem:[%s198 + $0x68] sm:$0xff] %v225
                  %v227 = vld [vmem:[%s197 + $0xe0] sm:$0xff]
                  %228 = vst [vmem:[%s198 + $0x70] sm:$0xff] %v227
                  %v229 = vld [vmem:[%s197 + $0xf0] sm:$0xff]
                  %230 = vst [vmem:[%s198 + $0x78] sm:$0xff] %v229
                  %v231 = vld [vmem:[%s197 + $0x100] sm:$0xff]
                  %232 = vst [vmem:[%s198 + $0x80] sm:$0xff] %v231
                  %v233 = vld [vmem:[%s197 + $0x110] sm:$0xff]
                  %234 = vst [vmem:[%s198 + $0x88] sm:$0xff] %v233
                $region56: #{forward.91} parent=50 // loop_footer
                  %s196 = sadd.s32 1, %s192
                $region57: #{forward.91} parent=50 // loop_footer_branch
                  %191 = sbr.rel target = $region53
                $region58: #{forward.91} parent=50 // loop_exit
                  _
              $region51: #{forward.91} parent=35 // pred_fallthru
                _
              // Predicated region
              $region59: #{forward.91} parent=35 // pred_check
                _
              $region60: #{forward.91} parent=35 // pred_check_branch
                %236 = sbr.rel target = $region62
              $region61: #{forward.91} parent=35 // pred_region
                _
              $region62: #{forward.91} parent=35 // pred_fallthru
                _
            $region36: #{forward.91} parent=31 // pred_fallthru
              _
            // Predicated region
            $region37: #{forward.91} parent=31 // pred_check
              _
            $region38: #{forward.91} parent=31 // pred_check_branch
              %143 = sbr.rel target = $region40
            $region39: #{forward.91} parent=31 // pred_region
              loop: start=0, step=1, limit=1
              $region41: #{forward.91} parent=39 // loop_pre_header
                _
              $region42: #{forward.91} parent=39 // loop_header
                %s146 = sphi 0, %s150
                %p147 = scmp.ge.s32.totalorder %s146, 1
                %s151 = sphi %s137, %s137
                %s152 = sphi %s134, %s134
              $region43: #{forward.91} parent=39 // loop_header_branch
                %149 = sbr.rel (%p147) target = $region47
              $region44: #{forward.91} parent=39 // loop_body
                %v153 = vld [vmem:[%s151] sm:$0xff]
                %154 = vst [vmem:[%s152] sm:$0xff] %v153
                %v155 = vld [vmem:[%s151 + $0x10] sm:$0xff]
                %156 = vst [vmem:[%s152 + $0x8] sm:$0xff] %v155
                %v157 = vld [vmem:[%s151 + $0x20] sm:$0xff]
                %158 = vst [vmem:[%s152 + $0x10] sm:$0xff] %v157
                %v159 = vld [vmem:[%s151 + $0x30] sm:$0xff]
                %160 = vst [vmem:[%s152 + $0x18] sm:$0xff] %v159
                %v161 = vld [vmem:[%s151 + $0x40] sm:$0xff]
                %162 = vst [vmem:[%s152 + $0x20] sm:$0xff] %v161
                %v163 = vld [vmem:[%s151 + $0x50] sm:$0xff]
                %164 = vst [vmem:[%s152 + $0x28] sm:$0xff] %v163
                %v165 = vld [vmem:[%s151 + $0x60] sm:$0xff]
                %166 = vst [vmem:[%s152 + $0x30] sm:$0xff] %v165
                %v167 = vld [vmem:[%s151 + $0x70] sm:$0xff]
                %168 = vst [vmem:[%s152 + $0x38] sm:$0xff] %v167
                %v169 = vld [vmem:[%s151 + $0x80] sm:$0xff]
                %170 = vst [vmem:[%s152 + $0x40] sm:$0xff] %v169
                %v171 = vld [vmem:[%s151 + $0x90] sm:$0xff]
                %172 = vst [vmem:[%s152 + $0x48] sm:$0xff] %v171
                %v173 = vld [vmem:[%s151 + $0xa0] sm:$0xff]
                %174 = vst [vmem:[%s152 + $0x50] sm:$0xff] %v173
                %v175 = vld [vmem:[%s151 + $0xb0] sm:$0xff]
                %176 = vst [vmem:[%s152 + $0x58] sm:$0xff] %v175
                %v177 = vld [vmem:[%s151 + $0xc0] sm:$0xff]
                %178 = vst [vmem:[%s152 + $0x60] sm:$0xff] %v177
                %v179 = vld [vmem:[%s151 + $0xd0] sm:$0xff]
                %180 = vst [vmem:[%s152 + $0x68] sm:$0xff] %v179
                %v181 = vld [vmem:[%s151 + $0xe0] sm:$0xff]
                %182 = vst [vmem:[%s152 + $0x70] sm:$0xff] %v181
                %v183 = vld [vmem:[%s151 + $0xf0] sm:$0xff]
                %184 = vst [vmem:[%s152 + $0x78] sm:$0xff] %v183
                %v185 = vld [vmem:[%s151 + $0x100] sm:$0xff]
                %186 = vst [vmem:[%s152 + $0x80] sm:$0xff] %v185
                %v187 = vld [vmem:[%s151 + $0x110] sm:$0xff]
                %188 = vst [vmem:[%s152 + $0x88] sm:$0xff] %v187
              $region45: #{forward.91} parent=39 // loop_footer
                %s150 = sadd.s32 1, %s146
              $region46: #{forward.91} parent=39 // loop_footer_branch
                %145 = sbr.rel target = $region42
              $region47: #{forward.91} parent=39 // loop_exit
                _
            $region40: #{forward.91} parent=31 // pred_fallthru
              _
          $region32: #{forward.91} parent=27 // pred_fallthru
            _
          %237 = vnop
        $region28: #{forward.91} parent=23 // pred_fallthru
          _
      $region24: #{forward.91} parent=5 // pred_fallthru
        _
      %p238 = scmp.le.s32.totalorder 1, %s9
      %p239 = scmp.lt.s32.totalorder %s9, 3
      %p240 = pnand %p238, %p239
      %p241 = pneg %p240
      // Predicated region
      $region63: #{forward.91} parent=5 // pred_check
        _
      $region64: #{forward.91} parent=5 // pred_check_branch
        %243 = sbr.rel (%p240) target = $region66
      $region65: #{forward.91} parent=5 // pred_region
        %s244 = ssub.s32 %s9, 1
        %s245 = sand.u32 %s43, 1
        %s246 = sand.u32 %s43, 1
        %s247 = smul.addr %s246, 144
        %s248 = scalar_lea.vmem [#allocation2], %s247
        // Predicated region
        $region67: #{forward.91} parent=65 // pred_check
          %p249 = pneg %p56
        $region68: #{forward.91} parent=65 // pred_check_branch
          %251 = sbr.rel (%p249) target = $region70
        $region69: #{forward.91} parent=65 // pred_region
          _
        $region70: #{forward.91} parent=65 // pred_fallthru
          _
        %p252 = pneg %p30
        %p253 = pneg %p27
        %s254 = sand.u32 %s43, 1
        %s255 = sand.u32 %s43, 1
        %s256 = smul.addr %s255, 144
        %s257 = scalar_lea.vmem [#allocation2], %s256
        %p258 = pneg %p56
        %p259 = pneg %p53
        %p260 = pneg %p77
        %p261 = pneg %p74
        %p262 = pneg %p103
        %p263 = pneg %p100
        %s264 = smul.u32 2, %s14
        %p265 = scmp.lt.s32.totalorder %s264, 3
        %s266 = scalar_select %p265, %s264, 3
        %s267 = smul.addr %s266, 8
        %s268 = scalar_lea.vmem %s3, %s267
        %s269 = smul.u32 2, %s14
        %s270 = smul.u32 2, %s14
        %p271 = scmp.lt.s32.totalorder %s270, 3
        %s272 = scalar_select %p271, %s270, 3
        %s273 = smul.addr %s272, 8
        %s274 = scalar_lea.vmem %s3, %s273
        %s275 = smul.u32 2, %s14
        %v277 = vld [vmem:[%s0] sm:$0xff]
        %v278 = vld [vmem:[%s248] sm:$0xff]
        %v279 = vld [vmem:[%s248 + $0x8] sm:$0xff]
        %v280 = vld [vmem:[%s248 + $0x10] sm:$0xff]
        %v281 = vld [vmem:[%s248 + $0x18] sm:$0xff]
        %v282 = vld [vmem:[%s248 + $0x20] sm:$0xff]
        %v283 = vld [vmem:[%s248 + $0x28] sm:$0xff]
        %v284 = vld [vmem:[%s248 + $0x30] sm:$0xff]
        %v285 = vld [vmem:[%s248 + $0x38] sm:$0xff]
        %v286 = vld [vmem:[%s248 + $0x40] sm:$0xff]
        %v287 = vld [vmem:[%s248 + $0x48] sm:$0xff]
        %v288 = vld [vmem:[%s248 + $0x50] sm:$0xff]
        %v289 = vld [vmem:[%s248 + $0x58] sm:$0xff]
        %v290 = vld [vmem:[%s248 + $0x60] sm:$0xff]
        %v291 = vld [vmem:[%s248 + $0x68] sm:$0xff]
        %v292 = vld [vmem:[%s248 + $0x70] sm:$0xff]
        %v293 = vld [vmem:[%s248 + $0x78] sm:$0xff]
        %v294 = vld [vmem:[%s248 + $0x80] sm:$0xff]
        %v295 = vld [vmem:[%s248 + $0x88] sm:$0xff]
        %v296 = vld [vmem:[%s2] sm:$0xff]
        %298 = vset.pattern.permute.xlu0 0
        %299 = vperm.xlu0 %298, %v296
        %v300 = vpop.permute.xlu0 %299
        %v303 = vunpack.c.l.b16 %v277
        %v304 = vunpack.c.h.b16 %v277
        %v305 = vpack.c.b16 %v303, %v303
        %v306 = vpack.c.b16 %v304, %v304
        %v326 = vunpack.c.l.b16 %v278
        %v327 = vunpack.c.h.b16 %v278
        %v328 = vunpack.c.l.b16 %v279
        %v329 = vunpack.c.h.b16 %v279
        %v330 = vunpack.c.l.b16 %v280
        %v331 = vunpack.c.h.b16 %v280
        %v332 = vunpack.c.l.b16 %v281
        %v333 = vunpack.c.h.b16 %v281
        %v334 = vunpack.c.l.b16 %v282
        %v335 = vunpack.c.h.b16 %v282
        %v336 = vunpack.c.l.b16 %v283
        %v337 = vunpack.c.h.b16 %v283
        %v338 = vunpack.c.l.b16 %v284
        %v339 = vunpack.c.h.b16 %v284
        %v340 = vunpack.c.l.b16 %v285
        %v341 = vunpack.c.h.b16 %v285
        %v342 = vunpack.c.l.b16 %v286
        %v343 = vunpack.c.h.b16 %v286
        %v344 = vunpack.c.l.b16 %v287
        %v345 = vunpack.c.h.b16 %v287
        %v346 = vunpack.c.l.b16 %v288
        %v347 = vunpack.c.h.b16 %v288
        %v348 = vunpack.c.l.b16 %v289
        %v349 = vunpack.c.h.b16 %v289
        %v350 = vunpack.c.l.b16 %v290
        %v351 = vunpack.c.h.b16 %v290
        %v352 = vunpack.c.l.b16 %v291
        %v353 = vunpack.c.h.b16 %v291
        %v354 = vunpack.c.l.b16 %v292
        %v355 = vunpack.c.h.b16 %v292
        %v356 = vunpack.c.l.b16 %v293
        %v357 = vunpack.c.h.b16 %v293
        %v358 = vunpack.c.l.b16 %v294
        %v359 = vunpack.c.h.b16 %v294
        %v360 = vunpack.c.l.b16 %v295
        %v361 = vunpack.c.h.b16 %v295
        %v362 = vpack.c.b16 %v328, %v326
        %v363 = vpack.c.b16 %v329, %v327
        %v364 = vpack.c.b16 %v332, %v330
        %v365 = vpack.c.b16 %v333, %v331
        %v366 = vpack.c.b16 %v336, %v334
        %v367 = vpack.c.b16 %v337, %v335
        %v368 = vpack.c.b16 %v340, %v338
        %v369 = vpack.c.b16 %v341, %v339
        %v370 = vpack.c.b16 %v344, %v342
        %v371 = vpack.c.b16 %v345, %v343
        %v372 = vpack.c.b16 %v348, %v346
        %v373 = vpack.c.b16 %v349, %v347
        %v374 = vpack.c.b16 %v352, %v350
        %v375 = vpack.c.b16 %v353, %v351
        %v376 = vpack.c.b16 %v356, %v354
        %v377 = vpack.c.b16 %v357, %v355
        %v378 = vpack.c.b16 %v360, %v358
        %v379 = vpack.c.b16 %v361, %v359
        %vm398 = vcmask 130048
        %v400 = vsel %vm398, %v306, 0
        %402 = vmatprep.subr.bf16.mxu0 %v363
        %403 = vmatpush1.bf16.msra.mxu0 %v362
        %404 = vmatprep.subr.bf16.mxu0 %v365
        %405 = vmatpush1.bf16.msra.mxu0 %v364
        %406 = vmatprep.subr.bf16.mxu0 %v367
        %407 = vmatpush1.bf16.msra.mxu0 %v366
        %408 = vmatprep.subr.bf16.mxu0 %v369
        %409 = vmatpush1.bf16.msra.mxu0 %v368
        %410 = vmatprep.subr.bf16.mxu0 %v371
        %411 = vmatpush1.bf16.msra.mxu0 %v370
        %412 = vmatprep.subr.bf16.mxu0 %v373
        %413 = vmatpush1.bf16.msra.mxu0 %v372
        %414 = vmatprep.subr.bf16.mxu0 %v375
        %415 = vmatpush1.bf16.msra.mxu0 %v374
        %416 = vmatprep.subr.bf16.mxu0 %v377
        %417 = vmatpush1.bf16.msra.mxu0 %v376
        %418 = vmatprep.subr.bf16.mxu0 %v379
        %419 = vmatpush1.bf16.msra.mxu0 %v378
        %420 = vmatprep.subr.bf16.mxu0 0
        %421 = vmatpush1.bf16.msra.mxu0 0
        %422 = vmatprep.subr.bf16.mxu0 0
        %423 = vmatpush1.bf16.msra.mxu0 0
        %424 = vmatprep.subr.bf16.mxu0 0
        %425 = vmatpush1.bf16.msra.mxu0 0
        %426 = vmatprep.subr.bf16.mxu0 0
        %427 = vmatpush1.bf16.msra.mxu0 0
        %428 = vmatprep.subr.bf16.mxu0 0
        %429 = vmatpush1.bf16.msra.mxu0 0
        %430 = vmatprep.subr.bf16.mxu0 0
        %431 = vmatpush1.bf16.msra.mxu0 0
        %432 = vmatprep.subr.bf16.mxu0 0
        %433 = vmatpush1.bf16.msra.mxu0 0
        %434 = vmatprep.mubr.bf16.mxu0 %v400
        %435 = vmatmul.mubr.bf16.gmra.mrb[0].mxu0 %v305
        %v436 = vpop.f32.mrb[0].mxu0
        %v437 = vadd.f32 %v300, %v436
        %v438 = vpop.f32.mrb[0].mxu0
        %v439 = vadd.f32 %v300, %v438
        %v440 = vpop.f32.mrb[0].mxu0
        %v441 = vpop.f32.mrb[0].mxu0
        %442 = vdwg.mxu0
        %vm443 = vcmp.ge.f32.partialorder %v437, 0.0
        %vm444 = vcmp.ge.f32.partialorder %v439, 0.0
        %v445 = vmul.f32 %v437, 0.25
        %v446 = vmul.f32 %v439, 0.25
        %v447 = vsel %vm443, %v437, %v445
        %v448 = vsel %vm444, %v439, %v446
        %449 = vst [vmem:[%s274] sm:$0xff] %v447
        %450 = vst [vmem:[%s274 + $0x8] sm:$0xff] %v448
        %s451 = smul.u32 2, %s14
        %p452 = scmp.lt.s32.totalorder %s451, 3
        %s453 = scalar_select %p452, %s451, 3
        %s454 = smul.addr %s453, 8
        %s455 = scalar_lea.vmem %s3, %s454
        // Predicated region
        $region71: #{forward.91} parent=65 // pred_check
          %p456 = pneg %p100
        $region72: #{forward.91} parent=65 // pred_check_branch
          %458 = sbr.rel (%p456) target = $region74
        $region73: #{forward.91} parent=65 // pred_region
          %s459 = smul.u32 2, %s14
        $region74: #{forward.91} parent=65 // pred_fallthru
          _
      $region66: #{forward.91} parent=5 // pred_fallthru
        _
      %p460 = scmp.le.s32.totalorder 2, %s9
      // Predicated region
      $region75: #{forward.91} parent=5 // pred_check
        %p461 = pneg %p460
      $region76: #{forward.91} parent=5 // pred_check_branch
        %463 = sbr.rel (%p461) target = $region78
      $region77: #{forward.91} parent=5 // pred_region
        %s464 = ssub.s32 %s9, 2
        // Predicated region
        $region79: #{forward.91} parent=77 // pred_check
          %p465 = pneg %p106
        $region80: #{forward.91} parent=77 // pred_check_branch
          %467 = sbr.rel (%p465) target = $region82
        $region81: #{forward.91} parent=77 // pred_region
          %s468 = smul.u32 2, %s15
          %p469 = scmp.lt.s32.totalorder %s468, 3
          %s470 = scalar_select %p469, %s468, 3
          %s471 = smul.addr %s470, 8
          %s472 = scalar_lea.vmem %s3, %s471
        $region82: #{forward.91} parent=77 // pred_fallthru
          _
      $region78: #{forward.91} parent=5 // pred_fallthru
        _
    $region6: #{forward.91} parent=1 // loop_footer
      %s13 = sadd.s32 1, %s9
    $region7: #{forward.91} parent=1 // loop_footer_branch
      %8 = sbr.rel target = $region3
    $region8: #{forward.91} parent=1 // loop_exit
      _

// kernel: forward.84
$region0: #{forward.84}
  #allocation0 [shape = 'u32[]', space=smem, size = 0x4, offset = 0x4, fixed_abs, tag = 'smem constant byte address 0x4 - core index']
  #allocation1 [shape = 'u32[144,128]{1,0:T(1,128)}', space=vmem, size = 0x12000, scoped, tag = 'internal scratch']
  %s0 = inlined_call_operand.vmem [shape: bf16[8,16], index: 0, kind: input, shape index: {}]
  %s1 = inlined_call_operand.vmem [shape: bf16[16,512], index: 1, kind: input, shape index: {}]
  %s2 = inlined_call_operand.vmem [shape: f32[8,1], index: 2, kind: input, shape index: {}]
  %s3 = inlined_call_operand.vmem [shape: f32[8,512], index: 3, kind: output, shape index: {}]
  %s4 = sld [smem:[#allocation0]]
  $region83: #{forward.84} parent=0
    _
  %s6 = ssub.s32 1, %s4
  %s7 = scalar_select 0, %s6, %s4
  $region1: #{forward.84} parent=0
    #allocation2 [shape = 'u8[16384]{0}', space=vmem, size = 0x4000, scoped, tag = 'input window, operand 1']
    loop: start=0, step=1, limit=4
    $region2: #{forward.84} parent=1 // loop_pre_header
      _
    $region3: #{forward.84} parent=1 // loop_header
      %s9 = sphi 0, %s13
      %p10 = scmp.ge.s32.totalorder %s9, 4
      %s17 = sphi 0, %s17
      %s19 = sphi 0, %s17
      %s20 = sphi 0, %s19
      %s34 = sphi 0, %s20
      %s40 = sphi 0, %s42
      %s43 = sphi 0, %s40
      %s44 = sphi 0, %s43
      %s60 = sphi 0, %s44
      %s64 = sphi 0, %s64
      %s66 = sphi 0, %s64
      %s67 = sphi 0, %s66
      %s81 = sphi 0, %s67
      %s87 = sphi 0, %s89
      %s90 = sphi 0, %s87
      %s91 = sphi 0, %s90
      %s107 = sphi 0, %s91
    $region4: #{forward.84} parent=1 // loop_header_branch
      %12 = sbr.rel (%p10) target = $region8
    $region5: #{forward.84} parent=1 // loop_body
      %s14 = ssub.s32 %s9, 1
      %s15 = ssub.s32 %s9, 2
      %s16 = sadd.s32 %s9, 1
      %s18 = sadd.s32 %s17, 1
      %p21 = scmp.eq.s32.totalorder %s9, 1
      %p22 = scmp.ne.s32.totalorder %s17, %s19
      %p23 = scmp.eq.s32.totalorder %s9, 0
      %p24 = por %p22, %p23
      %p25 = scmp.ne.s32.totalorder %s17, %s19
      %p26 = scmp.eq.s32.totalorder %s14, 1
      %p27 = por %p25, %p26
      %p28 = scmp.ne.s32.totalorder %s19, %s20
      %p29 = scmp.eq.s32.totalorder %s14, 0
      %p30 = por %p28, %p29
      %p31 = scmp.ne.s32.totalorder %s19, %s20
      %p32 = scmp.eq.s32.totalorder %s15, 1
      %p33 = por %p31, %p32
      %p35 = scmp.ne.s32.totalorder %s20, %s34
      %p36 = scmp.eq.s32.totalorder %s15, 0
      %p37 = por %p35, %p36
      %s38 = ssub.s32 %s9, %s16
      %p39 = scmp.eq.s32.totalorder %s38, 0
      %s41 = sadd.s32 %s40, 1
      %s42 = scalar_select %p39, %s40, %s41
      %p45 = pneg %p39
      %p46 = scmp.eq.s32.totalorder %s9, 1
      %p47 = por %p45, %p46
      %p48 = scmp.ne.s32.totalorder %s40, %s43
      %p49 = scmp.eq.s32.totalorder %s9, 0
      %p50 = por %p48, %p49
      %p51 = scmp.ne.s32.totalorder %s40, %s43
      %p52 = scmp.eq.s32.totalorder %s14, 1
      %p53 = por %p51, %p52
      %p54 = scmp.ne.s32.totalorder %s43, %s44
      %p55 = scmp.eq.s32.totalorder %s14, 0
      %p56 = por %p54, %p55
      %p57 = scmp.ne.s32.totalorder %s43, %s44
      %p58 = scmp.eq.s32.totalorder %s15, 1
      %p59 = por %p57, %p58
      %p61 = scmp.ne.s32.totalorder %s44, %s60
      %p62 = scmp.eq.s32.totalorder %s15, 0
      %p63 = por %p61, %p62
      %s65 = sadd.s32 %s64, 1
      %p68 = scmp.eq.s32.totalorder %s9, 1
      %p69 = scmp.ne.s32.totalorder %s64, %s66
      %p70 = scmp.eq.s32.totalorder %s9, 0
      %p71 = por %p69, %p70
      %p72 = scmp.ne.s32.totalorder %s64, %s66
      %p73 = scmp.eq.s32.totalorder %s14, 1
      %p74 = por %p72, %p73
      %p75 = scmp.ne.s32.totalorder %s66, %s67
      %p76 = scmp.eq.s32.totalorder %s14, 0
      %p77 = por %p75, %p76
      %p78 = scmp.ne.s32.totalorder %s66, %s67
      %p79 = scmp.eq.s32.totalorder %s15, 1
      %p80 = por %p78, %p79
      %p82 = scmp.ne.s32.totalorder %s67, %s81
      %p83 = scmp.eq.s32.totalorder %s15, 0
      %p84 = por %p82, %p83
      %s85 = ssub.s32 %s9, %s16
      %p86 = scmp.eq.s32.totalorder %s85, 0
      %s88 = sadd.s32 %s87, 1
      %s89 = scalar_select %p86, %s87, %s88
      %p92 = pneg %p86
      %p93 = scmp.eq.s32.totalorder %s9, 1
      %p94 = por %p92, %p93
      %p95 = scmp.ne.s32.totalorder %s87, %s90
      %p96 = scmp.eq.s32.totalorder %s9, 0
      %p97 = por %p95, %p96
      %p98 = scmp.ne.s32.totalorder %s87, %s90
      %p99 = scmp.eq.s32.totalorder %s14, 1
      %p100 = por %p98, %p99
      %p101 = scmp.ne.s32.totalorder %s90, %s91
      %p102 = scmp.eq.s32.totalorder %s14, 0
      %p103 = por %p101, %p102
      %p104 = scmp.ne.s32.totalorder %s90, %s91
      %p105 = scmp.eq.s32.totalorder %s15, 1
      %p106 = por %p104, %p105
      %p108 = scmp.ne.s32.totalorder %s91, %s107
      %p109 = scmp.eq.s32.totalorder %s15, 0
      %p110 = por %p108, %p109
      %p111 = scmp.le.s32.totalorder 1, %s9
      %p112 = scmp.lt.s32.totalorder %s9, 3
      %p113 = pnand %p111, %p112
      %p114 = pneg %p113
      // Predicated region
      $region9: #{forward.84} parent=5 // pred_check
        _
      $region10: #{forward.84} parent=5 // pred_check_branch
        %116 = sbr.rel (%p113) target = $region12
      $region11: #{forward.84} parent=5 // pred_region
        %s117 = ssub.s32 %s9, 1
        // Predicated region
        $region13: #{forward.84} parent=11 // pred_check
          %p118 = pneg %p30
        $region14: #{forward.84} parent=11 // pred_check_branch
          %120 = sbr.rel (%p118) target = $region16
        $region15: #{forward.84} parent=11 // pred_region
          _
        $region16: #{forward.84} parent=11 // pred_fallthru
          _
        // Predicated region
        $region17: #{forward.84} parent=11 // pred_check
          %p121 = pneg %p77
        $region18: #{forward.84} parent=11 // pred_check_branch
          %123 = sbr.rel (%p121) target = $region20
        $region19: #{forward.84} parent=11 // pred_region
          _
        $region20: #{forward.84} parent=11 // pred_fallthru
          _
      $region12: #{forward.84} parent=5 // pred_fallthru
        _
      %p124 = scmp.lt.s32.totalorder %s9, 2
      // Predicated region
      $region21: #{forward.84} parent=5 // pred_check
        %p125 = pneg %p124
      $region22: #{forward.84} parent=5 // pred_check_branch
        %127 = sbr.rel (%p125) target = $region24
      $region23: #{forward.84} parent=5 // pred_region
        // Predicated region
        $region25: #{forward.84} parent=23 // pred_check
          %p128 = pneg %p50
        $region26: #{forward.84} parent=23 // pred_check_branch
          %130 = sbr.rel (%p128) target = $region28
        $region27: #{forward.84} parent=23 // pred_region
          %s131 = sand.u32 %s40, 1
          %s132 = sand.u32 %s40, 1
          %s133 = smul.addr %s132, 16
          %s134 = scalar_lea.vmem [#allocation2], %s133
          %s135 = smul.u32 2, %s9
          %s136 = smul.addr %s135, 4
          %s137 = scalar_lea.vmem %s1, %s136
          // Predicated region
          $region29: #{forward.84} parent=27 // pred_check
            _
          $region30: #{forward.84} parent=27 // pred_check_branch
            %139 = sbr.rel (0) target = $region32
          $region31: #{forward.84} parent=27 // pred_region
            // Predicated region
            $region33: #{forward.84} parent=31 // pred_check
              _
            $region34: #{forward.84} parent=31 // pred_check_branch
              %141 = sbr.rel (0) target = $region36
            $region35: #{forward.84} parent=31 // pred_region
              // Predicated region
              $region48: #{forward.84} parent=35 // pred_check
                _
              $region49: #{forward.84} parent=35 // pred_check_branch
                %158 = sbr.rel (0) target = $region51
              $region50: #{forward.84} parent=35 // pred_region
                loop: start=0, step=1, limit=1
                $region52: #{forward.84} parent=50 // loop_pre_header
                  _
                $region53: #{forward.84} parent=50 // loop_header
                  %s160 = sphi 0, %s164
                  %p161 = scmp.ge.s32.totalorder %s160, 1
                  %s165 = sphi %s137, %s137
                  %s166 = sphi %s134, %s134
                $region54: #{forward.84} parent=50 // loop_header_branch
                  %163 = sbr.rel (%p161) target = $region58
                $region55: #{forward.84} parent=50 // loop_body
                  %v167 = vld [vmem:[%s165] sm:$0xff]
                  %168 = vst [vmem:[%s166] sm:$0xff] %v167
                  %v169 = vld [vmem:[%s165 + $0x10] sm:$0xff]
                  %170 = vst [vmem:[%s166 + $0x8] sm:$0xff] %v169
                $region56: #{forward.84} parent=50 // loop_footer
                  %s164 = sadd.s32 1, %s160
                $region57: #{forward.84} parent=50 // loop_footer_branch
                  %159 = sbr.rel target = $region53
                $region58: #{forward.84} parent=50 // loop_exit
                  _
              $region51: #{forward.84} parent=35 // pred_fallthru
                _
              // Predicated region
              $region59: #{forward.84} parent=35 // pred_check
                _
              $region60: #{forward.84} parent=35 // pred_check_branch
                %172 = sbr.rel target = $region62
              $region61: #{forward.84} parent=35 // pred_region
                _
              $region62: #{forward.84} parent=35 // pred_fallthru
                _
            $region36: #{forward.84} parent=31 // pred_fallthru
              _
            // Predicated region
            $region37: #{forward.84} parent=31 // pred_check
              _
            $region38: #{forward.84} parent=31 // pred_check_branch
              %143 = sbr.rel target = $region40
            $region39: #{forward.84} parent=31 // pred_region
              loop: start=0, step=1, limit=1
              $region41: #{forward.84} parent=39 // loop_pre_header
                _
              $region42: #{forward.84} parent=39 // loop_header
                %s146 = sphi 0, %s150
                %p147 = scmp.ge.s32.totalorder %s146, 1
                %s151 = sphi %s137, %s137
                %s152 = sphi %s134, %s134
              $region43: #{forward.84} parent=39 // loop_header_branch
                %149 = sbr.rel (%p147) target = $region47
              $region44: #{forward.84} parent=39 // loop_body
                %v153 = vld [vmem:[%s151] sm:$0xff]
                %154 = vst [vmem:[%s152] sm:$0xff] %v153
                %v155 = vld [vmem:[%s151 + $0x10] sm:$0xff]
                %156 = vst [vmem:[%s152 + $0x8] sm:$0xff] %v155
              $region45: #{forward.84} parent=39 // loop_footer
                %s150 = sadd.s32 1, %s146
              $region46: #{forward.84} parent=39 // loop_footer_branch
                %145 = sbr.rel target = $region42
              $region47: #{forward.84} parent=39 // loop_exit
                _
            $region40: #{forward.84} parent=31 // pred_fallthru
              _
          $region32: #{forward.84} parent=27 // pred_fallthru
            _
          %173 = vnop
        $region28: #{forward.84} parent=23 // pred_fallthru
          _
      $region24: #{forward.84} parent=5 // pred_fallthru
        _
      %p174 = scmp.le.s32.totalorder 1, %s9
      %p175 = scmp.lt.s32.totalorder %s9, 3
      %p176 = pnand %p174, %p175
      %p177 = pneg %p176
      // Predicated region
      $region63: #{forward.84} parent=5 // pred_check
        _
      $region64: #{forward.84} parent=5 // pred_check_branch
        %179 = sbr.rel (%p176) target = $region66
      $region65: #{forward.84} parent=5 // pred_region
        %s180 = ssub.s32 %s9, 1
        %s181 = sand.u32 %s43, 1
        %s182 = sand.u32 %s43, 1
        %s183 = smul.addr %s182, 16
        %s184 = scalar_lea.vmem [#allocation2], %s183
        // Predicated region
        $region67: #{forward.84} parent=65 // pred_check
          %p185 = pneg %p56
        $region68: #{forward.84} parent=65 // pred_check_branch
          %187 = sbr.rel (%p185) target = $region70
        $region69: #{forward.84} parent=65 // pred_region
          _
        $region70: #{forward.84} parent=65 // pred_fallthru
          _
        %p188 = pneg %p30
        %p189 = pneg %p27
        %s190 = sand.u32 %s43, 1
        %s191 = sand.u32 %s43, 1
        %s192 = smul.addr %s191, 16
        %s193 = scalar_lea.vmem [#allocation2], %s192
        %p194 = pneg %p56
        %p195 = pneg %p53
        %p196 = pneg %p77
        %p197 = pneg %p74
        %p198 = pneg %p103
        %p199 = pneg %p100
        %s200 = smul.u32 2, %s14
        %p201 = scmp.lt.s32.totalorder %s200, 3
        %s202 = scalar_select %p201, %s200, 3
        %s203 = smul.addr %s202, 8
        %s204 = scalar_lea.vmem %s3, %s203
        %s205 = smul.u32 2, %s14
        %s206 = smul.u32 2, %s14
        %p207 = scmp.lt.s32.totalorder %s206, 3
        %s208 = scalar_select %p207, %s206, 3
        %s209 = smul.addr %s208, 8
        %s210 = scalar_lea.vmem %s3, %s209
        %s211 = smul.u32 2, %s14
        %v213 = vld [vmem:[%s0] sm:$0xf]
        %v214 = vld [vmem:[%s184] sm:$0xff]
        %v215 = vld [vmem:[%s184 + $0x8] sm:$0xff]
        %v216 = vld [vmem:[%s2] sm:$0xff]
        %218 = vset.pattern.permute.xlu0 0
        %219 = vperm.xlu0 %218, %v216
        %v220 = vpop.permute.xlu0 %219
        %v224 = vunpack.c.l.b16 %v214
        %v225 = vunpack.c.h.b16 %v214
        %v226 = vunpack.c.l.b16 %v215
        %v227 = vunpack.c.h.b16 %v215
        %v228 = vpack.c.b16 %v226, %v224
        %v229 = vpack.c.b16 %v227, %v225
        %vm232 = vcmask 130048
        %v234 = vsel %vm232, %v213, 0
        %236 = vmatprep.subr.bf16.mxu0 %v229
        %237 = vmatpush1.bf16.msra.mxu0 %v228
        %238 = vmatprep.subr.bf16.mxu0 0
        %239 = vmatpush1.bf16.msra.mxu0 0
        %240 = vmatprep.subr.bf16.mxu0 0
        %241 = vmatpush1.bf16.msra.mxu0 0
        %242 = vmatprep.subr.bf16.mxu0 0
        %243 = vmatpush1.bf16.msra.mxu0 0
        %244 = vmatprep.subr.bf16.mxu0 0
        %245 = vmatpush1.bf16.msra.mxu0 0
        %246 = vmatprep.subr.bf16.mxu0 0
        %247 = vmatpush1.bf16.msra.mxu0 0
        %248 = vmatprep.subr.bf16.mxu0 0
        %249 = vmatpush1.bf16.msra.mxu0 0
        %250 = vmatprep.subr.bf16.mxu0 0
        %251 = vmatpush1.bf16.msra.mxu0 0
        %252 = vmatprep.subr.bf16.mxu0 0
        %253 = vmatpush1.bf16.msra.mxu0 0
        %254 = vmatprep.subr.bf16.mxu0 0
        %255 = vmatpush1.bf16.msra.mxu0 0
        %256 = vmatprep.subr.bf16.mxu0 0
        %257 = vmatpush1.bf16.msra.mxu0 0
        %258 = vmatprep.subr.bf16.mxu0 0
        %259 = vmatpush1.bf16.msra.mxu0 0
        %260 = vmatprep.subr.bf16.mxu0 0
        %261 = vmatpush1.bf16.msra.mxu0 0
        %262 = vmatprep.subr.bf16.mxu0 0
        %263 = vmatpush1.bf16.msra.mxu0 0
        %264 = vmatprep.subr.bf16.mxu0 0
        %265 = vmatpush1.bf16.msra.mxu0 0
        %266 = vmatprep.subr.bf16.mxu0 0
        %267 = vmatpush1.bf16.msra.mxu0 0
        %268 = vmatprep.mubr.bf16.mxu0 0
        %269 = vmatmul.mubr.bf16.gmra.mrb[0].mxu0 %v234
        %v270 = vpop.f32.mrb[0].mxu0
        %v271 = vadd.f32 %v220, %v270
        %v272 = vpop.f32.mrb[0].mxu0
        %v273 = vadd.f32 %v220, %v272
        %v274 = vpop.f32.mrb[0].mxu0
        %v275 = vpop.f32.mrb[0].mxu0
        %276 = vdwg.mxu0
        %vm277 = vcmp.ge.f32.partialorder %v271, 0.0
        %vm278 = vcmp.ge.f32.partialorder %v273, 0.0
        %v279 = vmul.f32 %v271, 0.25
        %v280 = vmul.f32 %v273, 0.25
        %v281 = vsel %vm277, %v271, %v279
        %v282 = vsel %vm278, %v273, %v280
        %283 = vst [vmem:[%s210] sm:$0xff] %v281
        %284 = vst [vmem:[%s210 + $0x8] sm:$0xff] %v282
        %s285 = smul.u32 2, %s14
        %p286 = scmp.lt.s32.totalorder %s285, 3
        %s287 = scalar_select %p286, %s285, 3
        %s288 = smul.addr %s287, 8
        %s289 = scalar_lea.vmem %s3, %s288
        // Predicated region
        $region71: #{forward.84} parent=65 // pred_check
          %p290 = pneg %p100
        $region72: #{forward.84} parent=65 // pred_check_branch
          %292 = sbr.rel (%p290) target = $region74
        $region73: #{forward.84} parent=65 // pred_region
          %s293 = smul.u32 2, %s14
        $region74: #{forward.84} parent=65 // pred_fallthru
          _
      $region66: #{forward.84} parent=5 // pred_fallthru
        _
      %p294 = scmp.le.s32.totalorder 2, %s9
      // Predicated region
      $region75: #{forward.84} parent=5 // pred_check
        %p295 = pneg %p294
      $region76: #{forward.84} parent=5 // pred_check_branch
        %297 = sbr.rel (%p295) target = $region78
      $region77: #{forward.84} parent=5 // pred_region
        %s298 = ssub.s32 %s9, 2
        // Predicated region
        $region79: #{forward.84} parent=77 // pred_check
          %p299 = pneg %p106
        $region80: #{forward.84} parent=77 // pred_check_branch
          %301 = sbr.rel (%p299) target = $region82
        $region81: #{forward.84} parent=77 // pred_region
          %s302 = smul.u32 2, %s15
          %p303 = scmp.lt.s32.totalorder %s302, 3
          %s304 = scalar_select %p303, %s302, 3
          %s305 = smul.addr %s304, 8
          %s306 = scalar_lea.vmem %s3, %s305
        $region82: #{forward.84} parent=77 // pred_fallthru
          _
      $region78: #{forward.84} parent=5 // pred_fallthru
        _
    $region6: #{forward.84} parent=1 // loop_footer
      %s13 = sadd.s32 1, %s9
    $region7: #{forward.84} parent=1 // loop_footer_branch
      %8 = sbr.rel target = $region3
    $region8: #{forward.84} parent=1 // loop_exit
      _

// kernel: forward.116
$region0: #{forward.116}
  #allocation0 [shape = 'u32[]', space=smem, size = 0x4, offset = 0x4, fixed_abs, tag = 'smem constant byte address 0x4 - core index']
  #allocation1 [shape = 'u32[144,128]{1,0:T(1,128)}', space=vmem, size = 0x12000, scoped, tag = 'internal scratch']
  %s0 = inlined_call_operand.vmem [shape: bf16[8,8], index: 0, kind: input, shape index: {}]
  %s1 = inlined_call_operand.vmem [shape: bf16[8,512], index: 1, kind: input, shape index: {}]
  %s2 = inlined_call_operand.vmem [shape: f32[8,1], index: 2, kind: input, shape index: {}]
  %s3 = inlined_call_operand.vmem [shape: f32[8,512], index: 3, kind: output, shape index: {}]
  %s4 = sld [smem:[#allocation0]]
  $region45: #{forward.116} parent=0
    _
  %s6 = ssub.s32 1, %s4
  %s7 = scalar_select 0, %s6, %s4
  loop: start=0, step=1, limit=4
  $region2: #{forward.116} parent=0 // loop_pre_header
    _
  $region3: #{forward.116} parent=0 // loop_header
    %s9 = sphi 0, %s13
    %p10 = scmp.ge.s32.totalorder %s9, 4
    %s17 = sphi 0, %s17
    %s19 = sphi 0, %s17
    %s20 = sphi 0, %s19
    %s34 = sphi 0, %s20
    %s40 = sphi 0, %s42
    %s43 = sphi 0, %s40
    %s44 = sphi 0, %s43
    %s60 = sphi 0, %s44
    %s64 = sphi 0, %s64
    %s66 = sphi 0, %s64
    %s67 = sphi 0, %s66
    %s81 = sphi 0, %s67
    %s87 = sphi 0, %s89
    %s90 = sphi 0, %s87
    %s91 = sphi 0, %s90
    %s107 = sphi 0, %s91
  $region4: #{forward.116} parent=0 // loop_header_branch
    %12 = sbr.rel (%p10) target = $region8
  $region5: #{forward.116} parent=0 // loop_body
    %s14 = ssub.s32 %s9, 1
    %s15 = ssub.s32 %s9, 2
    %s16 = sadd.s32 %s9, 1
    %s18 = sadd.s32 %s17, 1
    %p21 = scmp.eq.s32.totalorder %s9, 1
    %p22 = scmp.ne.s32.totalorder %s17, %s19
    %p23 = scmp.eq.s32.totalorder %s9, 0
    %p24 = por %p22, %p23
    %p25 = scmp.ne.s32.totalorder %s17, %s19
    %p26 = scmp.eq.s32.totalorder %s14, 1
    %p27 = por %p25, %p26
    %p28 = scmp.ne.s32.totalorder %s19, %s20
    %p29 = scmp.eq.s32.totalorder %s14, 0
    %p30 = por %p28, %p29
    %p31 = scmp.ne.s32.totalorder %s19, %s20
    %p32 = scmp.eq.s32.totalorder %s15, 1
    %p33 = por %p31, %p32
    %p35 = scmp.ne.s32.totalorder %s20, %s34
    %p36 = scmp.eq.s32.totalorder %s15, 0
    %p37 = por %p35, %p36
    %s38 = ssub.s32 %s9, %s16
    %p39 = scmp.eq.s32.totalorder %s38, 0
    %s41 = sadd.s32 %s40, 1
    %s42 = scalar_select %p39, %s40, %s41
    %p45 = pneg %p39
    %p46 = scmp.eq.s32.totalorder %s9, 1
    %p47 = por %p45, %p46
    %p48 = scmp.ne.s32.totalorder %s40, %s43
    %p49 = scmp.eq.s32.totalorder %s9, 0
    %p50 = por %p48, %p49
    %p51 = scmp.ne.s32.totalorder %s40, %s43
    %p52 = scmp.eq.s32.totalorder %s14, 1
    %p53 = por %p51, %p52
    %p54 = scmp.ne.s32.totalorder %s43, %s44
    %p55 = scmp.eq.s32.totalorder %s14, 0
    %p56 = por %p54, %p55
    %p57 = scmp.ne.s32.totalorder %s43, %s44
    %p58 = scmp.eq.s32.totalorder %s15, 1
    %p59 = por %p57, %p58
    %p61 = scmp.ne.s32.totalorder %s44, %s60
    %p62 = scmp.eq.s32.totalorder %s15, 0
    %p63 = por %p61, %p62
    %s65 = sadd.s32 %s64, 1
    %p68 = scmp.eq.s32.totalorder %s9, 1
    %p69 = scmp.ne.s32.totalorder %s64, %s66
    %p70 = scmp.eq.s32.totalorder %s9, 0
    %p71 = por %p69, %p70
    %p72 = scmp.ne.s32.totalorder %s64, %s66
    %p73 = scmp.eq.s32.totalorder %s14, 1
    %p74 = por %p72, %p73
    %p75 = scmp.ne.s32.totalorder %s66, %s67
    %p76 = scmp.eq.s32.totalorder %s14, 0
    %p77 = por %p75, %p76
    %p78 = scmp.ne.s32.totalorder %s66, %s67
    %p79 = scmp.eq.s32.totalorder %s15, 1
    %p80 = por %p78, %p79
    %p82 = scmp.ne.s32.totalorder %s67, %s81
    %p83 = scmp.eq.s32.totalorder %s15, 0
    %p84 = por %p82, %p83
    %s85 = ssub.s32 %s9, %s16
    %p86 = scmp.eq.s32.totalorder %s85, 0
    %s88 = sadd.s32 %s87, 1
    %s89 = scalar_select %p86, %s87, %s88
    %p92 = pneg %p86
    %p93 = scmp.eq.s32.totalorder %s9, 1
    %p94 = por %p92, %p93
    %p95 = scmp.ne.s32.totalorder %s87, %s90
    %p96 = scmp.eq.s32.totalorder %s9, 0
    %p97 = por %p95, %p96
    %p98 = scmp.ne.s32.totalorder %s87, %s90
    %p99 = scmp.eq.s32.totalorder %s14, 1
    %p100 = por %p98, %p99
    %p101 = scmp.ne.s32.totalorder %s90, %s91
    %p102 = scmp.eq.s32.totalorder %s14, 0
    %p103 = por %p101, %p102
    %p104 = scmp.ne.s32.totalorder %s90, %s91
    %p105 = scmp.eq.s32.totalorder %s15, 1
    %p106 = por %p104, %p105
    %p108 = scmp.ne.s32.totalorder %s91, %s107
    %p109 = scmp.eq.s32.totalorder %s15, 0
    %p110 = por %p108, %p109
    %p111 = scmp.le.s32.totalorder 1, %s9
    %p112 = scmp.lt.s32.totalorder %s9, 3
    %p113 = pnand %p111, %p112
    %p114 = pneg %p113
    // Predicated region
    $region9: #{forward.116} parent=5 // pred_check
      _
    $region10: #{forward.116} parent=5 // pred_check_branch
      %116 = sbr.rel (%p113) target = $region12
    $region11: #{forward.116} parent=5 // pred_region
      %s117 = ssub.s32 %s9, 1
      // Predicated region
      $region13: #{forward.116} parent=11 // pred_check
        %p118 = pneg %p30
      $region14: #{forward.116} parent=11 // pred_check_branch
        %120 = sbr.rel (%p118) target = $region16
      $region15: #{forward.116} parent=11 // pred_region
        _
      $region16: #{forward.116} parent=11 // pred_fallthru
        _
      // Predicated region
      $region17: #{forward.116} parent=11 // pred_check
        %p121 = pneg %p77
      $region18: #{forward.116} parent=11 // pred_check_branch
        %123 = sbr.rel (%p121) target = $region20
      $region19: #{forward.116} parent=11 // pred_region
        _
      $region20: #{forward.116} parent=11 // pred_fallthru
        _
    $region12: #{forward.116} parent=5 // pred_fallthru
      _
    %p124 = scmp.lt.s32.totalorder %s9, 2
    // Predicated region
    $region21: #{forward.116} parent=5 // pred_check
      %p125 = pneg %p124
    $region22: #{forward.116} parent=5 // pred_check_branch
      %127 = sbr.rel (%p125) target = $region24
    $region23: #{forward.116} parent=5 // pred_region
      // Predicated region
      $region25: #{forward.116} parent=23 // pred_check
        %p128 = pneg %p50
      $region26: #{forward.116} parent=23 // pred_check_branch
        %130 = sbr.rel (%p128) target = $region28
      $region27: #{forward.116} parent=23 // pred_region
        %s131 = smul.u32 2, %s9
        %p132 = scmp.lt.s32.totalorder %s131, 3
        %s133 = scalar_select %p132, %s131, 3
        %s134 = smul.addr %s133, 4
        %s135 = scalar_lea.vmem %s1, %s134
        %s136 = smul.u32 2, %s9
      $region28: #{forward.116} parent=23 // pred_fallthru
        _
    $region24: #{forward.116} parent=5 // pred_fallthru
      _
    %p137 = scmp.le.s32.totalorder 1, %s9
    %p138 = scmp.lt.s32.totalorder %s9, 3
    %p139 = pnand %p137, %p138
    %p140 = pneg %p139
    // Predicated region
    $region29: #{forward.116} parent=5 // pred_check
      _
    $region30: #{forward.116} parent=5 // pred_check_branch
      %142 = sbr.rel (%p139) target = $region32
    $region31: #{forward.116} parent=5 // pred_region
      %s143 = ssub.s32 %s9, 1
      %p144 = pneg %p30
      %p145 = pneg %p27
      %s146 = smul.u32 2, %s14
      %p147 = scmp.lt.s32.totalorder %s146, 3
      %s148 = scalar_select %p147, %s146, 3
      %s149 = smul.addr %s148, 4
      %s150 = scalar_lea.vmem %s1, %s149
      %p151 = pneg %p56
      %p152 = pneg %p53
      %p153 = pneg %p77
      %p154 = pneg %p74
      %p155 = pneg %p103
      %p156 = pneg %p100
      %s157 = smul.u32 2, %s14
      %p158 = scmp.lt.s32.totalorder %s157, 3
      %s159 = scalar_select %p158, %s157, 3
      %s160 = smul.addr %s159, 8
      %s161 = scalar_lea.vmem %s3, %s160
      %s162 = smul.u32 2, %s14
      %p163 = scmp.lt.s32.totalorder %s162, 3
      %s164 = scalar_select %p163, %s162, 3
      %s165 = smul.addr %s164, 4
      %s166 = scalar_lea.vmem %s1, %s165
      %s167 = smul.u32 2, %s14
      %s168 = smul.u32 2, %s14
      %p169 = scmp.lt.s32.totalorder %s168, 3
      %s170 = scalar_select %p169, %s168, 3
      %s171 = smul.addr %s170, 8
      %s172 = scalar_lea.vmem %s3, %s171
      %s173 = smul.u32 2, %s14
      %v175 = vld [vmem:[%s0] sm:$0xf]
      %v176 = vld [vmem:[%s166] sm:$0xff]
      %v177 = vld [vmem:[%s2] sm:$0xff]
      %179 = vset.pattern.permute.xlu0 0
      %180 = vperm.xlu0 %179, %v177
      %v181 = vpop.permute.xlu0 %180
      %v184 = vunpack.c.l.b16 %v176
      %v185 = vunpack.c.h.b16 %v176
      %v186 = vpack.c.b16 %v184, %v184
      %v187 = vpack.c.b16 %v185, %v185
      %vm188 = vcmask 64512
      %v190 = vsel %vm188, %v175, 0
      %vm192 = vcmask 1043456
      %v194 = vsel %vm192, %v186, 0
      %v197 = vsel %vm192, %v187, 0
      %199 = vmatprep.subr.bf16.mxu0 %v197
      %200 = vmatpush1.bf16.msra.mxu0 %v194
      %201 = vmatprep.subr.bf16.mxu0 0
      %202 = vmatpush1.bf16.msra.mxu0 0
      %203 = vmatprep.subr.bf16.mxu0 0
      %204 = vmatpush1.bf16.msra.mxu0 0
      %205 = vmatprep.subr.bf16.mxu0 0
      %206 = vmatpush1.bf16.msra.mxu0 0
      %207 = vmatprep.subr.bf16.mxu0 0
      %208 = vmatpush1.bf16.msra.mxu0 0
      %209 = vmatprep.subr.bf16.mxu0 0
      %210 = vmatpush1.bf16.msra.mxu0 0
      %211 = vmatprep.subr.bf16.mxu0 0
      %212 = vmatpush1.bf16.msra.mxu0 0
      %213 = vmatprep.subr.bf16.mxu0 0
      %214 = vmatpush1.bf16.msra.mxu0 0
      %215 = vmatprep.subr.bf16.mxu0 0
      %216 = vmatpush1.bf16.msra.mxu0 0
      %217 = vmatprep.subr.bf16.mxu0 0
      %218 = vmatpush1.bf16.msra.mxu0 0
      %219 = vmatprep.subr.bf16.mxu0 0
      %220 = vmatpush1.bf16.msra.mxu0 0
      %221 = vmatprep.subr.bf16.mxu0 0
      %222 = vmatpush1.bf16.msra.mxu0 0
      %223 = vmatprep.subr.bf16.mxu0 0
      %224 = vmatpush1.bf16.msra.mxu0 0
      %225 = vmatprep.subr.bf16.mxu0 0
      %226 = vmatpush1.bf16.msra.mxu0 0
      %227 = vmatprep.subr.bf16.mxu0 0
      %228 = vmatpush1.bf16.msra.mxu0 0
      %229 = vmatprep.subr.bf16.mxu0 0
      %230 = vmatpush1.bf16.msra.mxu0 0
      %231 = vmatprep.mubr.bf16.mxu0 0
      %232 = vmatmul.mubr.bf16.gmra.mrb[0].mxu0 %v190
      %v233 = vpop.f32.mrb[0].mxu0
      %v234 = vadd.f32 %v181, %v233
      %v235 = vpop.f32.mrb[0].mxu0
      %v236 = vadd.f32 %v181, %v235
      %v237 = vpop.f32.mrb[0].mxu0
      %v238 = vpop.f32.mrb[0].mxu0
      %239 = vdwg.mxu0
      %vm240 = vcmp.ge.f32.partialorder %v234, 0.0
      %vm241 = vcmp.ge.f32.partialorder %v236, 0.0
      %v242 = vmul.f32 %v234, 0.25
      %v243 = vmul.f32 %v236, 0.25
      %v244 = vsel %vm240, %v234, %v242
      %v245 = vsel %vm241, %v236, %v243
      %246 = vst [vmem:[%s172] sm:$0xff] %v244
      %247 = vst [vmem:[%s172 + $0x8] sm:$0xff] %v245
      %s248 = smul.u32 2, %s14
      %p249 = scmp.lt.s32.totalorder %s248, 3
      %s250 = scalar_select %p249, %s248, 3
      %s251 = smul.addr %s250, 8
      %s252 = scalar_lea.vmem %s3, %s251
      // Predicated region
      $region33: #{forward.116} parent=31 // pred_check
        %p253 = pneg %p100
      $region34: #{forward.116} parent=31 // pred_check_branch
        %255 = sbr.rel (%p253) target = $region36
      $region35: #{forward.116} parent=31 // pred_region
        %s256 = smul.u32 2, %s14
      $region36: #{forward.116} parent=31 // pred_fallthru
        _
    $region32: #{forward.116} parent=5 // pred_fallthru
      _
    %p257 = scmp.le.s32.totalorder 2, %s9
    // Predicated region
    $region37: #{forward.116} parent=5 // pred_check
      %p258 = pneg %p257
    $region38: #{forward.116} parent=5 // pred_check_branch
      %260 = sbr.rel (%p258) target = $region40
    $region39: #{forward.116} parent=5 // pred_region
      %s261 = ssub.s32 %s9, 2
      // Predicated region
      $region41: #{forward.116} parent=39 // pred_check
        %p262 = pneg %p106
      $region42: #{forward.116} parent=39 // pred_check_branch
        %264 = sbr.rel (%p262) target = $region44
      $region43: #{forward.116} parent=39 // pred_region
        %s265 = smul.u32 2, %s15
        %p266 = scmp.lt.s32.totalorder %s265, 3
        %s267 = scalar_select %p266, %s265, 3
        %s268 = smul.addr %s267, 8
        %s269 = scalar_lea.vmem %s3, %s268
      $region44: #{forward.116} parent=39 // pred_fallthru
        _
    $region40: #{forward.116} parent=5 // pred_fallthru
      _
  $region6: #{forward.116} parent=0 // loop_footer
    %s13 = sadd.s32 1, %s9
  $region7: #{forward.116} parent=0 // loop_footer_branch
    %8 = sbr.rel target = $region3
  $region8: #{forward.116} parent=0 // loop_exit
    _

// kernel: forward.141
$region0: #{forward.141}
  #allocation0 [shape = 'u32[]', space=smem, size = 0x4, offset = 0x4, fixed_abs, tag = 'smem constant byte address 0x4 - core index']
  #allocation1 [shape = 'u32[144,128]{1,0:T(1,128)}', space=vmem, size = 0x12000, scoped, tag = 'internal scratch']
  %s0 = inlined_call_operand.vmem [shape: bf16[8,288], index: 0, kind: input, shape index: {}]
  %s1 = inlined_call_operand.vmem [shape: bf16[288,512], index: 1, kind: input, shape index: {}]
  %s2 = inlined_call_operand.vmem [shape: f32[8,1], index: 2, kind: input, shape index: {}]
  %s3 = inlined_call_operand.vmem [shape: f32[8,512], index: 3, kind: output, shape index: {}]
  %s4 = sld [smem:[#allocation0]]
  $region83: #{forward.141} parent=0
    _
  %s6 = ssub.s32 1, %s4
  %s7 = scalar_select 0, %s6, %s4
  $region1: #{forward.141} parent=0
    #allocation2 [shape = 'u8[294912]{0}', space=vmem, size = 0x48000, scoped, tag = 'input window, operand 1']
    loop: start=0, step=1, limit=4
    $region2: #{forward.141} parent=1 // loop_pre_header
      _
    $region3: #{forward.141} parent=1 // loop_header
      %s9 = sphi 0, %s13
      %p10 = scmp.ge.s32.totalorder %s9, 4
      %s17 = sphi 0, %s17
      %s19 = sphi 0, %s17
      %s20 = sphi 0, %s19
      %s34 = sphi 0, %s20
      %s40 = sphi 0, %s42
      %s43 = sphi 0, %s40
      %s44 = sphi 0, %s43
      %s60 = sphi 0, %s44
      %s64 = sphi 0, %s64
      %s66 = sphi 0, %s64
      %s67 = sphi 0, %s66
      %s81 = sphi 0, %s67
      %s87 = sphi 0, %s89
      %s90 = sphi 0, %s87
      %s91 = sphi 0, %s90
      %s107 = sphi 0, %s91
    $region4: #{forward.141} parent=1 // loop_header_branch
      %12 = sbr.rel (%p10) target = $region8
    $region5: #{forward.141} parent=1 // loop_body
      %s14 = ssub.s32 %s9, 1
      %s15 = ssub.s32 %s9, 2
      %s16 = sadd.s32 %s9, 1
      %s18 = sadd.s32 %s17, 1
      %p21 = scmp.eq.s32.totalorder %s9, 1
      %p22 = scmp.ne.s32.totalorder %s17, %s19
      %p23 = scmp.eq.s32.totalorder %s9, 0
      %p24 = por %p22, %p23
      %p25 = scmp.ne.s32.totalorder %s17, %s19
      %p26 = scmp.eq.s32.totalorder %s14, 1
      %p27 = por %p25, %p26
      %p28 = scmp.ne.s32.totalorder %s19, %s20
      %p29 = scmp.eq.s32.totalorder %s14, 0
      %p30 = por %p28, %p29
      %p31 = scmp.ne.s32.totalorder %s19, %s20
      %p32 = scmp.eq.s32.totalorder %s15, 1
      %p33 = por %p31, %p32
      %p35 = scmp.ne.s32.totalorder %s20, %s34
      %p36 = scmp.eq.s32.totalorder %s15, 0
      %p37 = por %p35, %p36
      %s38 = ssub.s32 %s9, %s16
      %p39 = scmp.eq.s32.totalorder %s38, 0
      %s41 = sadd.s32 %s40, 1
      %s42 = scalar_select %p39, %s40, %s41
      %p45 = pneg %p39
      %p46 = scmp.eq.s32.totalorder %s9, 1
      %p47 = por %p45, %p46
      %p48 = scmp.ne.s32.totalorder %s40, %s43
      %p49 = scmp.eq.s32.totalorder %s9, 0
      %p50 = por %p48, %p49
      %p51 = scmp.ne.s32.totalorder %s40, %s43
      %p52 = scmp.eq.s32.totalorder %s14, 1
      %p53 = por %p51, %p52
      %p54 = scmp.ne.s32.totalorder %s43, %s44
      %p55 = scmp.eq.s32.totalorder %s14, 0
      %p56 = por %p54, %p55
      %p57 = scmp.ne.s32.totalorder %s43, %s44
      %p58 = scmp.eq.s32.totalorder %s15, 1
      %p59 = por %p57, %p58
      %p61 = scmp.ne.s32.totalorder %s44, %s60
      %p62 = scmp.eq.s32.totalorder %s15, 0
      %p63 = por %p61, %p62
      %s65 = sadd.s32 %s64, 1
      %p68 = scmp.eq.s32.totalorder %s9, 1
      %p69 = scmp.ne.s32.totalorder %s64, %s66
      %p70 = scmp.eq.s32.totalorder %s9, 0
      %p71 = por %p69, %p70
      %p72 = scmp.ne.s32.totalorder %s64, %s66
      %p73 = scmp.eq.s32.totalorder %s14, 1
      %p74 = por %p72, %p73
      %p75 = scmp.ne.s32.totalorder %s66, %s67
      %p76 = scmp.eq.s32.totalorder %s14, 0
      %p77 = por %p75, %p76
      %p78 = scmp.ne.s32.totalorder %s66, %s67
      %p79 = scmp.eq.s32.totalorder %s15, 1
      %p80 = por %p78, %p79
      %p82 = scmp.ne.s32.totalorder %s67, %s81
      %p83 = scmp.eq.s32.totalorder %s15, 0
      %p84 = por %p82, %p83
      %s85 = ssub.s32 %s9, %s16
      %p86 = scmp.eq.s32.totalorder %s85, 0
      %s88 = sadd.s32 %s87, 1
      %s89 = scalar_select %p86, %s87, %s88
      %p92 = pneg %p86
      %p93 = scmp.eq.s32.totalorder %s9, 1
      %p94 = por %p92, %p93
      %p95 = scmp.ne.s32.totalorder %s87, %s90
      %p96 = scmp.eq.s32.totalorder %s9, 0
      %p97 = por %p95, %p96
      %p98 = scmp.ne.s32.totalorder %s87, %s90
      %p99 = scmp.eq.s32.totalorder %s14, 1
      %p100 = por %p98, %p99
      %p101 = scmp.ne.s32.totalorder %s90, %s91
      %p102 = scmp.eq.s32.totalorder %s14, 0
      %p103 = por %p101, %p102
      %p104 = scmp.ne.s32.totalorder %s90, %s91
      %p105 = scmp.eq.s32.totalorder %s15, 1
      %p106 = por %p104, %p105
      %p108 = scmp.ne.s32.totalorder %s91, %s107
      %p109 = scmp.eq.s32.totalorder %s15, 0
      %p110 = por %p108, %p109
      %p111 = scmp.le.s32.totalorder 1, %s9
      %p112 = scmp.lt.s32.totalorder %s9, 3
      %p113 = pnand %p111, %p112
      %p114 = pneg %p113
      // Predicated region
      $region9: #{forward.141} parent=5 // pred_check
        _
      $region10: #{forward.141} parent=5 // pred_check_branch
        %116 = sbr.rel (%p113) target = $region12
      $region11: #{forward.141} parent=5 // pred_region
        %s117 = ssub.s32 %s9, 1
        // Predicated region
        $region13: #{forward.141} parent=11 // pred_check
          %p118 = pneg %p30
        $region14: #{forward.141} parent=11 // pred_check_branch
          %120 = sbr.rel (%p118) target = $region16
        $region15: #{forward.141} parent=11 // pred_region
          _
        $region16: #{forward.141} parent=11 // pred_fallthru
          _
        // Predicated region
        $region17: #{forward.141} parent=11 // pred_check
          %p121 = pneg %p77
        $region18: #{forward.141} parent=11 // pred_check_branch
          %123 = sbr.rel (%p121) target = $region20
        $region19: #{forward.141} parent=11 // pred_region
          _
        $region20: #{forward.141} parent=11 // pred_fallthru
          _
      $region12: #{forward.141} parent=5 // pred_fallthru
        _
      %p124 = scmp.lt.s32.totalorder %s9, 2
      // Predicated region
      $region21: #{forward.141} parent=5 // pred_check
        %p125 = pneg %p124
      $region22: #{forward.141} parent=5 // pred_check_branch
        %127 = sbr.rel (%p125) target = $region24
      $region23: #{forward.141} parent=5 // pred_region
        // Predicated region
        $region25: #{forward.141} parent=23 // pred_check
          %p128 = pneg %p50
        $region26: #{forward.141} parent=23 // pred_check_branch
          %130 = sbr.rel (%p128) target = $region28
        $region27: #{forward.141} parent=23 // pred_region
          %s131 = sand.u32 %s40, 1
          %s132 = sand.u32 %s40, 1
          %s133 = smul.addr %s132, 288
          %s134 = scalar_lea.vmem [#allocation2], %s133
          %s135 = smul.u32 2, %s9
          %s136 = smul.addr %s135, 4
          %s137 = scalar_lea.vmem %s1, %s136
          // Predicated region
          $region29: #{forward.141} parent=27 // pred_check
            _
          $region30: #{forward.141} parent=27 // pred_check_branch
            %139 = sbr.rel (0) target = $region32
          $region31: #{forward.141} parent=27 // pred_region
            // Predicated region
            $region33: #{forward.141} parent=31 // pred_check
              _
            $region34: #{forward.141} parent=31 // pred_check_branch
              %141 = sbr.rel (0) target = $region36
            $region35: #{forward.141} parent=31 // pred_region
              // Predicated region
              $region48: #{forward.141} parent=35 // pred_check
                _
              $region49: #{forward.141} parent=35 // pred_check_branch
                %226 = sbr.rel (0) target = $region51
              $region50: #{forward.141} parent=35 // pred_region
                loop: start=0, step=1, limit=1
                $region52: #{forward.141} parent=50 // loop_pre_header
                  _
                $region53: #{forward.141} parent=50 // loop_header
                  %s228 = sphi 0, %s232
                  %p229 = scmp.ge.s32.totalorder %s228, 1
                  %s233 = sphi %s137, %s137
                  %s234 = sphi %s134, %s134
                $region54: #{forward.141} parent=50 // loop_header_branch
                  %231 = sbr.rel (%p229) target = $region58
                $region55: #{forward.141} parent=50 // loop_body
                  %v235 = vld [vmem:[%s233] sm:$0xff]
                  %236 = vst [vmem:[%s234] sm:$0xff] %v235
                  %v237 = vld [vmem:[%s233 + $0x10] sm:$0xff]
                  %238 = vst [vmem:[%s234 + $0x8] sm:$0xff] %v237
                  %v239 = vld [vmem:[%s233 + $0x20] sm:$0xff]
                  %240 = vst [vmem:[%s234 + $0x10] sm:$0xff] %v239
                  %v241 = vld [vmem:[%s233 + $0x30] sm:$0xff]
                  %242 = vst [vmem:[%s234 + $0x18] sm:$0xff] %v241
                  %v243 = vld [vmem:[%s233 + $0x40] sm:$0xff]
                  %244 = vst [vmem:[%s234 + $0x20] sm:$0xff] %v243
                  %v245 = vld [vmem:[%s233 + $0x50] sm:$0xff]
                  %246 = vst [vmem:[%s234 + $0x28] sm:$0xff] %v245
                  %v247 = vld [vmem:[%s233 + $0x60] sm:$0xff]
                  %248 = vst [vmem:[%s234 + $0x30] sm:$0xff] %v247
                  %v249 = vld [vmem:[%s233 + $0x70] sm:$0xff]
                  %250 = vst [vmem:[%s234 + $0x38] sm:$0xff] %v249
                  %v251 = vld [vmem:[%s233 + $0x80] sm:$0xff]
                  %252 = vst [vmem:[%s234 + $0x40] sm:$0xff] %v251
                  %v253 = vld [vmem:[%s233 + $0x90] sm:$0xff]
                  %254 = vst [vmem:[%s234 + $0x48] sm:$0xff] %v253
                  %v255 = vld [vmem:[%s233 + $0xa0] sm:$0xff]
                  %256 = vst [vmem:[%s234 + $0x50] sm:$0xff] %v255
                  %v257 = vld [vmem:[%s233 + $0xb0] sm:$0xff]
                  %258 = vst [vmem:[%s234 + $0x58] sm:$0xff] %v257
                  %v259 = vld [vmem:[%s233 + $0xc0] sm:$0xff]
                  %260 = vst [vmem:[%s234 + $0x60] sm:$0xff] %v259
                  %v261 = vld [vmem:[%s233 + $0xd0] sm:$0xff]
                  %262 = vst [vmem:[%s234 + $0x68] sm:$0xff] %v261
                  %v263 = vld [vmem:[%s233 + $0xe0] sm:$0xff]
                  %264 = vst [vmem:[%s234 + $0x70] sm:$0xff] %v263
                  %v265 = vld [vmem:[%s233 + $0xf0] sm:$0xff]
                  %266 = vst [vmem:[%s234 + $0x78] sm:$0xff] %v265
                  %v267 = vld [vmem:[%s233 + $0x100] sm:$0xff]
                  %268 = vst [vmem:[%s234 + $0x80] sm:$0xff] %v267
                  %v269 = vld [vmem:[%s233 + $0x110] sm:$0xff]
                  %270 = vst [vmem:[%s234 + $0x88] sm:$0xff] %v269
                  %v271 = vld [vmem:[%s233 + $0x120] sm:$0xff]
                  %272 = vst [vmem:[%s234 + $0x90] sm:$0xff] %v271
                  %v273 = vld [vmem:[%s233 + $0x130] sm:$0xff]
                  %274 = vst [vmem:[%s234 + $0x98] sm:$0xff] %v273
                  %v275 = vld [vmem:[%s233 + $0x140] sm:$0xff]
                  %276 = vst [vmem:[%s234 + $0xa0] sm:$0xff] %v275
                  %v277 = vld [vmem:[%s233 + $0x150] sm:$0xff]
                  %278 = vst [vmem:[%s234 + $0xa8] sm:$0xff] %v277
                  %v279 = vld [vmem:[%s233 + $0x160] sm:$0xff]
                  %280 = vst [vmem:[%s234 + $0xb0] sm:$0xff] %v279
                  %v281 = vld [vmem:[%s233 + $0x170] sm:$0xff]
                  %282 = vst [vmem:[%s234 + $0xb8] sm:$0xff] %v281
                  %v283 = vld [vmem:[%s233 + $0x180] sm:$0xff]
                  %284 = vst [vmem:[%s234 + $0xc0] sm:$0xff] %v283
                  %v285 = vld [vmem:[%s233 + $0x190] sm:$0xff]
                  %286 = vst [vmem:[%s234 + $0xc8] sm:$0xff] %v285
                  %v287 = vld [vmem:[%s233 + $0x1a0] sm:$0xff]
                  %288 = vst [vmem:[%s234 + $0xd0] sm:$0xff] %v287
                  %v289 = vld [vmem:[%s233 + $0x1b0] sm:$0xff]
                  %290 = vst [vmem:[%s234 + $0xd8] sm:$0xff] %v289
                  %v291 = vld [vmem:[%s233 + $0x1c0] sm:$0xff]
                  %292 = vst [vmem:[%s234 + $0xe0] sm:$0xff] %v291
                  %v293 = vld [vmem:[%s233 + $0x1d0] sm:$0xff]
                  %294 = vst [vmem:[%s234 + $0xe8] sm:$0xff] %v293
                  %v295 = vld [vmem:[%s233 + $0x1e0] sm:$0xff]
                  %296 = vst [vmem:[%s234 + $0xf0] sm:$0xff] %v295
                  %v297 = vld [vmem:[%s233 + $0x1f0] sm:$0xff]
                  %298 = vst [vmem:[%s234 + $0xf8] sm:$0xff] %v297
                  %v299 = vld [vmem:[%s233 + $0x200] sm:$0xff]
                  %300 = vst [vmem:[%s234 + $0x100] sm:$0xff] %v299
                  %v301 = vld [vmem:[%s233 + $0x210] sm:$0xff]
                  %302 = vst [vmem:[%s234 + $0x108] sm:$0xff] %v301
                  %v303 = vld [vmem:[%s233 + $0x220] sm:$0xff]
                  %304 = vst [vmem:[%s234 + $0x110] sm:$0xff] %v303
                  %v305 = vld [vmem:[%s233 + $0x230] sm:$0xff]
                  %306 = vst [vmem:[%s234 + $0x118] sm:$0xff] %v305
                $region56: #{forward.141} parent=50 // loop_footer
                  %s232 = sadd.s32 1, %s228
                $region57: #{forward.141} parent=50 // loop_footer_branch
                  %227 = sbr.rel target = $region53
                $region58: #{forward.141} parent=50 // loop_exit
                  _
              $region51: #{forward.141} parent=35 // pred_fallthru
                _
              // Predicated region
              $region59: #{forward.141} parent=35 // pred_check
                _
              $region60: #{forward.141} parent=35 // pred_check_branch
                %308 = sbr.rel target = $region62
              $region61: #{forward.141} parent=35 // pred_region
                _
              $region62: #{forward.141} parent=35 // pred_fallthru
                _
            $region36: #{forward.141} parent=31 // pred_fallthru
              _
            // Predicated region
            $region37: #{forward.141} parent=31 // pred_check
              _
            $region38: #{forward.141} parent=31 // pred_check_branch
              %143 = sbr.rel target = $region40
            $region39: #{forward.141} parent=31 // pred_region
              loop: start=0, step=1, limit=1
              $region41: #{forward.141} parent=39 // loop_pre_header
                _
              $region42: #{forward.141} parent=39 // loop_header
                %s146 = sphi 0, %s150
                %p147 = scmp.ge.s32.totalorder %s146, 1
                %s151 = sphi %s137, %s137
                %s152 = sphi %s134, %s134
              $region43: #{forward.141} parent=39 // loop_header_branch
                %149 = sbr.rel (%p147) target = $region47
              $region44: #{forward.141} parent=39 // loop_body
                %v153 = vld [vmem:[%s151] sm:$0xff]
                %154 = vst [vmem:[%s152] sm:$0xff] %v153
                %v155 = vld [vmem:[%s151 + $0x10] sm:$0xff]
                %156 = vst [vmem:[%s152 + $0x8] sm:$0xff] %v155
                %v157 = vld [vmem:[%s151 + $0x20] sm:$0xff]
                %158 = vst [vmem:[%s152 + $0x10] sm:$0xff] %v157
                %v159 = vld [vmem:[%s151 + $0x30] sm:$0xff]
                %160 = vst [vmem:[%s152 + $0x18] sm:$0xff] %v159
                %v161 = vld [vmem:[%s151 + $0x40] sm:$0xff]
                %162 = vst [vmem:[%s152 + $0x20] sm:$0xff] %v161
                %v163 = vld [vmem:[%s151 + $0x50] sm:$0xff]
                %164 = vst [vmem:[%s152 + $0x28] sm:$0xff] %v163
                %v165 = vld [vmem:[%s151 + $0x60] sm:$0xff]
                %166 = vst [vmem:[%s152 + $0x30] sm:$0xff] %v165
                %v167 = vld [vmem:[%s151 + $0x70] sm:$0xff]
                %168 = vst [vmem:[%s152 + $0x38] sm:$0xff] %v167
                %v169 = vld [vmem:[%s151 + $0x80] sm:$0xff]
                %170 = vst [vmem:[%s152 + $0x40] sm:$0xff] %v169
                %v171 = vld [vmem:[%s151 + $0x90] sm:$0xff]
                %172 = vst [vmem:[%s152 + $0x48] sm:$0xff] %v171
                %v173 = vld [vmem:[%s151 + $0xa0] sm:$0xff]
                %174 = vst [vmem:[%s152 + $0x50] sm:$0xff] %v173
                %v175 = vld [vmem:[%s151 + $0xb0] sm:$0xff]
                %176 = vst [vmem:[%s152 + $0x58] sm:$0xff] %v175
                %v177 = vld [vmem:[%s151 + $0xc0] sm:$0xff]
                %178 = vst [vmem:[%s152 + $0x60] sm:$0xff] %v177
                %v179 = vld [vmem:[%s151 + $0xd0] sm:$0xff]
                %180 = vst [vmem:[%s152 + $0x68] sm:$0xff] %v179
                %v181 = vld [vmem:[%s151 + $0xe0] sm:$0xff]
                %182 = vst [vmem:[%s152 + $0x70] sm:$0xff] %v181
                %v183 = vld [vmem:[%s151 + $0xf0] sm:$0xff]
                %184 = vst [vmem:[%s152 + $0x78] sm:$0xff] %v183
                %v185 = vld [vmem:[%s151 + $0x100] sm:$0xff]
                %186 = vst [vmem:[%s152 + $0x80] sm:$0xff] %v185
                %v187 = vld [vmem:[%s151 + $0x110] sm:$0xff]
                %188 = vst [vmem:[%s152 + $0x88] sm:$0xff] %v187
                %v189 = vld [vmem:[%s151 + $0x120] sm:$0xff]
                %190 = vst [vmem:[%s152 + $0x90] sm:$0xff] %v189
                %v191 = vld [vmem:[%s151 + $0x130] sm:$0xff]
                %192 = vst [vmem:[%s152 + $0x98] sm:$0xff] %v191
                %v193 = vld [vmem:[%s151 + $0x140] sm:$0xff]
                %194 = vst [vmem:[%s152 + $0xa0] sm:$0xff] %v193
                %v195 = vld [vmem:[%s151 + $0x150] sm:$0xff]
                %196 = vst [vmem:[%s152 + $0xa8] sm:$0xff] %v195
                %v197 = vld [vmem:[%s151 + $0x160] sm:$0xff]
                %198 = vst [vmem:[%s152 + $0xb0] sm:$0xff] %v197
                %v199 = vld [vmem:[%s151 + $0x170] sm:$0xff]
                %200 = vst [vmem:[%s152 + $0xb8] sm:$0xff] %v199
                %v201 = vld [vmem:[%s151 + $0x180] sm:$0xff]
                %202 = vst [vmem:[%s152 + $0xc0] sm:$0xff] %v201
                %v203 = vld [vmem:[%s151 + $0x190] sm:$0xff]
                %204 = vst [vmem:[%s152 + $0xc8] sm:$0xff] %v203
                %v205 = vld [vmem:[%s151 + $0x1a0] sm:$0xff]
                %206 = vst [vmem:[%s152 + $0xd0] sm:$0xff] %v205
                %v207 = vld [vmem:[%s151 + $0x1b0] sm:$0xff]
                %208 = vst [vmem:[%s152 + $0xd8] sm:$0xff] %v207
                %v209 = vld [vmem:[%s151 + $0x1c0] sm:$0xff]
                %210 = vst [vmem:[%s152 + $0xe0] sm:$0xff] %v209
                %v211 = vld [vmem:[%s151 + $0x1d0] sm:$0xff]
                %212 = vst [vmem:[%s152 + $0xe8] sm:$0xff] %v211
                %v213 = vld [vmem:[%s151 + $0x1e0] sm:$0xff]
                %214 = vst [vmem:[%s152 + $0xf0] sm:$0xff] %v213
                %v215 = vld [vmem:[%s151 + $0x1f0] sm:$0xff]
                %216 = vst [vmem:[%s152 + $0xf8] sm:$0xff] %v215
                %v217 = vld [vmem:[%s151 + $0x200] sm:$0xff]
                %218 = vst [vmem:[%s152 + $0x100] sm:$0xff] %v217
                %v219 = vld [vmem:[%s151 + $0x210] sm:$0xff]
                %220 = vst [vmem:[%s152 + $0x108] sm:$0xff] %v219
                %v221 = vld [vmem:[%s151 + $0x220] sm:$0xff]
                %222 = vst [vmem:[%s152 + $0x110] sm:$0xff] %v221
                %v223 = vld [vmem:[%s151 + $0x230] sm:$0xff]
                %224 = vst [vmem:[%s152 + $0x118] sm:$0xff] %v223
              $region45: #{forward.141} parent=39 // loop_footer
                %s150 = sadd.s32 1, %s146
              $region46: #{forward.141} parent=39 // loop_footer_branch
                %145 = sbr.rel target = $region42
              $region47: #{forward.141} parent=39 // loop_exit
                _
            $region40: #{forward.141} parent=31 // pred_fallthru
              _
          $region32: #{forward.141} parent=27 // pred_fallthru
            _
          %309 = vnop
        $region28: #{forward.141} parent=23 // pred_fallthru
          _
      $region24: #{forward.141} parent=5 // pred_fallthru
        _
      %p310 = scmp.le.s32.totalorder 1, %s9
      %p311 = scmp.lt.s32.totalorder %s9, 3
      %p312 = pnand %p310, %p311
      %p313 = pneg %p312
      // Predicated region
      $region63: #{forward.141} parent=5 // pred_check
        _
      $region64: #{forward.141} parent=5 // pred_check_branch
        %315 = sbr.rel (%p312) target = $region66
      $region65: #{forward.141} parent=5 // pred_region
        %s316 = ssub.s32 %s9, 1
        %s317 = sand.u32 %s43, 1
        %s318 = sand.u32 %s43, 1
        %s319 = smul.addr %s318, 288
        %s320 = scalar_lea.vmem [#allocation2], %s319
        // Predicated region
        $region67: #{forward.141} parent=65 // pred_check
          %p321 = pneg %p56
        $region68: #{forward.141} parent=65 // pred_check_branch
          %323 = sbr.rel (%p321) target = $region70
        $region69: #{forward.141} parent=65 // pred_region
          _
        $region70: #{forward.141} parent=65 // pred_fallthru
          _
        %p324 = pneg %p30
        %p325 = pneg %p27
        %s326 = sand.u32 %s43, 1
        %s327 = sand.u32 %s43, 1
        %s328 = smul.addr %s327, 288
        %s329 = scalar_lea.vmem [#allocation2], %s328
        %p330 = pneg %p56
        %p331 = pneg %p53
        %p332 = pneg %p77
        %p333 = pneg %p74
        %p334 = pneg %p103
        %p335 = pneg %p100
        %s336 = smul.u32 2, %s14
        %p337 = scmp.lt.s32.totalorder %s336, 3
        %s338 = scalar_select %p337, %s336, 3
        %s339 = smul.addr %s338, 8
        %s340 = scalar_lea.vmem %s3, %s339
        %s341 = smul.u32 2, %s14
        %s342 = smul.u32 2, %s14
        %p343 = scmp.lt.s32.totalorder %s342, 3
        %s344 = scalar_select %p343, %s342, 3
        %s345 = smul.addr %s344, 8
        %s346 = scalar_lea.vmem %s3, %s345
        %s347 = smul.u32 2, %s14
        %v349 = vld [vmem:[%s0] sm:$0xff]
        %v350 = vld [vmem:[%s0 + $0x8] sm:$0xf]
        %v351 = vld [vmem:[%s320] sm:$0xff]
        %v352 = vld [vmem:[%s320 + $0x8] sm:$0xff]
        %v353 = vld [vmem:[%s320 + $0x10] sm:$0xff]
        %v354 = vld [vmem:[%s320 + $0x18] sm:$0xff]
        %v355 = vld [vmem:[%s320 + $0x20] sm:$0xff]
        %v356 = vld [vmem:[%s320 + $0x28] sm:$0xff]
        %v357 = vld [vmem:[%s320 + $0x30] sm:$0xff]
        %v358 = vld [vmem:[%s320 + $0x38] sm:$0xff]
        %v359 = vld [vmem:[%s320 + $0x40] sm:$0xff]
        %v360 = vld [vmem:[%s320 + $0x48] sm:$0xff]
        %v361 = vld [vmem:[%s320 + $0x50] sm:$0xff]
        %v362 = vld [vmem:[%s320 + $0x58] sm:$0xff]
        %v363 = vld [vmem:[%s320 + $0x60] sm:$0xff]
        %v364 = vld [vmem:[%s320 + $0x68] sm:$0xff]
        %v365 = vld [vmem:[%s320 + $0x70] sm:$0xff]
        %v366 = vld [vmem:[%s320 + $0x78] sm:$0xff]
        %v367 = vld [vmem:[%s320 + $0x80] sm:$0xff]
        %v368 = vld [vmem:[%s320 + $0x88] sm:$0xff]
        %v369 = vld [vmem:[%s320 + $0x90] sm:$0xff]
        %v370 = vld [vmem:[%s320 + $0x98] sm:$0xff]
        %v371 = vld [vmem:[%s320 + $0xa0] sm:$0xff]
        %v372 = vld [vmem:[%s320 + $0xa8] sm:$0xff]
        %v373 = vld [vmem:[%s320 + $0xb0] sm:$0xff]
        %v374 = vld [vmem:[%s320 + $0xb8] sm:$0xff]
        %v375 = vld [vmem:[%s320 + $0xc0] sm:$0xff]
        %v376 = vld [vmem:[%s320 + $0xc8] sm:$0xff]
        %v377 = vld [vmem:[%s320 + $0xd0] sm:$0xff]
        %v378 = vld [vmem:[%s320 + $0xd8] sm:$0xff]
        %v379 = vld [vmem:[%s320 + $0xe0] sm:$0xff]
        %v380 = vld [vmem:[%s320 + $0xe8] sm:$0xff]
        %v381 = vld [vmem:[%s320 + $0xf0] sm:$0xff]
        %v382 = vld [vmem:[%s320 + $0xf8] sm:$0xff]
        %v383 = vld [vmem:[%s320 + $0x100] sm:$0xff]
        %v384 = vld [vmem:[%s320 + $0x108] sm:$0xff]
        %v385 = vld [vmem:[%s320 + $0x110] sm:$0xff]
        %v386 = vld [vmem:[%s320 + $0x118] sm:$0xff]
        %v387 = vld [vmem:[%s2] sm:$0xff]
        %389 = vset.pattern.permute.xlu0 0
        %390 = vperm.xlu0 %389, %v387
        %v391 = vpop.permute.xlu0 %390
        %v395 = vunpack.c.l.b16 %v349
        %v396 = vunpack.c.h.b16 %v349
        %v397 = vunpack.c.l.b16 %v350
        %v398 = vpack.c.b16 %v395, %v395
        %v399 = vpack.c.b16 %v396, %v396
        %v400 = vpack.c.b16 %v397, %v397
        %v439 = vunpack.c.l.b16 %v351
        %v440 = vunpack.c.h.b16 %v351
        %v441 = vunpack.c.l.b16 %v352
        %v442 = vunpack.c.h.b16 %v352
        %v443 = vunpack.c.l.b16 %v353
        %v444 = vunpack.c.h.b16 %v353
        %v445 = vunpack.c.l.b16 %v354
        %v446 = vunpack.c.h.b16 %v354
        %v447 = vunpack.c.l.b16 %v355
        %v448 = vunpack.c.h.b16 %v355
        %v449 = vunpack.c.l.b16 %v356
        %v450 = vunpack.c.h.b16 %v356
        %v451 = vunpack.c.l.b16 %v357
        %v452 = vunpack.c.h.b16 %v357
        %v453 = vunpack.c.l.b16 %v358
        %v454 = vunpack.c.h.b16 %v358
        %v455 = vunpack.c.l.b16 %v359
        %v456 = vunpack.c.h.b16 %v359
        %v457 = vunpack.c.l.b16 %v360
        %v458 = vunpack.c.h.b16 %v360
        %v459 = vunpack.c.l.b16 %v361
        %v460 = vunpack.c.h.b16 %v361
        %v461 = vunpack.c.l.b16 %v362
        %v462 = vunpack.c.h.b16 %v362
        %v463 = vunpack.c.l.b16 %v363
        %v464 = vunpack.c.h.b16 %v363
        %v465 = vunpack.c.l.b16 %v364
        %v466 = vunpack.c.h.b16 %v364
        %v467 = vunpack.c.l.b16 %v365
        %v468 = vunpack.c.h.b16 %v365
        %v469 = vunpack.c.l.b16 %v366
        %v470 = vunpack.c.h.b16 %v366
        %v471 = vunpack.c.l.b16 %v367
        %v472 = vunpack.c.h.b16 %v367
        %v473 = vunpack.c.l.b16 %v368
        %v474 = vunpack.c.h.b16 %v368
        %v475 = vunpack.c.l.b16 %v369
        %v476 = vunpack.c.h.b16 %v369
        %v477 = vunpack.c.l.b16 %v370
        %v478 = vunpack.c.h.b16 %v370
        %v479 = vunpack.c.l.b16 %v371
        %v480 = vunpack.c.h.b16 %v371
        %v481 = vunpack.c.l.b16 %v372
        %v482 = vunpack.c.h.b16 %v372
        %v483 = vunpack.c.l.b16 %v373
        %v484 = vunpack.c.h.b16 %v373
        %v485 = vunpack.c.l.b16 %v374
        %v486 = vunpack.c.h.b16 %v374
        %v487 = vunpack.c.l.b16 %v375
        %v488 = vunpack.c.h.b16 %v375
        %v489 = vunpack.c.l.b16 %v376
        %v490 = vunpack.c.h.b16 %v376
        %v491 = vunpack.c.l.b16 %v377
        %v492 = vunpack.c.h.b16 %v377
        %v493 = vunpack.c.l.b16 %v378
        %v494 = vunpack.c.h.b16 %v378
        %v495 = vunpack.c.l.b16 %v379
        %v496 = vunpack.c.h.b16 %v379
        %v497 = vunpack.c.l.b16 %v380
        %v498 = vunpack.c.h.b16 %v380
        %v499 = vunpack.c.l.b16 %v381
        %v500 = vunpack.c.h.b16 %v381
        %v501 = vunpack.c.l.b16 %v382
        %v502 = vunpack.c.h.b16 %v382
        %v503 = vunpack.c.l.b16 %v383
        %v504 = vunpack.c.h.b16 %v383
        %v505 = vunpack.c.l.b16 %v384
        %v506 = vunpack.c.h.b16 %v384
        %v507 = vunpack.c.l.b16 %v385
        %v508 = vunpack.c.h.b16 %v385
        %v509 = vunpack.c.l.b16 %v386
        %v510 = vunpack.c.h.b16 %v386
        %v511 = vpack.c.b16 %v441, %v439
        %v512 = vpack.c.b16 %v442, %v440
        %v513 = vpack.c.b16 %v445, %v443
        %v514 = vpack.c.b16 %v446, %v444
        %v515 = vpack.c.b16 %v449, %v447
        %v516 = vpack.c.b16 %v450, %v448
        %v517 = vpack.c.b16 %v453, %v451
        %v518 = vpack.c.b16 %v454, %v452
        %v519 = vpack.c.b16 %v457, %v455
        %v520 = vpack.c.b16 %v458, %v456
        %v521 = vpack.c.b16 %v461, %v459
        %v522 = vpack.c.b16 %v462, %v460
        %v523 = vpack.c.b16 %v465, %v463
        %v524 = vpack.c.b16 %v466, %v464
        %v525 = vpack.c.b16 %v469, %v467
        %v526 = vpack.c.b16 %v470, %v468
        %v527 = vpack.c.b16 %v473, %v471
        %v528 = vpack.c.b16 %v474, %v472
        %v529 = vpack.c.b16 %v477, %v475
        %v530 = vpack.c.b16 %v478, %v476
        %v531 = vpack.c.b16 %v481, %v479
        %v532 = vpack.c.b16 %v482, %v480
        %v533 = vpack.c.b16 %v485, %v483
        %v534 = vpack.c.b16 %v486, %v484
        %v535 = vpack.c.b16 %v489, %v487
        %v536 = vpack.c.b16 %v490, %v488
        %v537 = vpack.c.b16 %v493, %v491
        %v538 = vpack.c.b16 %v494, %v492
        %v539 = vpack.c.b16 %v497, %v495
        %v540 = vpack.c.b16 %v498, %v496
        %v541 = vpack.c.b16 %v501, %v499
        %v542 = vpack.c.b16 %v502, %v500
        %v543 = vpack.c.b16 %v505, %v503
        %v544 = vpack.c.b16 %v506, %v504
        %v545 = vpack.c.b16 %v509, %v507
        %v546 = vpack.c.b16 %v510, %v508
        %vm583 = vcmask 261120
        %v585 = vsel %vm583, %v400, 0
        %587 = vmatprep.subr.bf16.mxu0 %v512
        %588 = vmatpush1.bf16.msra.mxu0 %v511
        %589 = vmatprep.subr.bf16.mxu0 %v514
        %590 = vmatpush1.bf16.msra.mxu0 %v513
        %591 = vmatprep.subr.bf16.mxu0 %v516
        %592 = vmatpush1.bf16.msra.mxu0 %v515
        %593 = vmatprep.subr.bf16.mxu0 %v518
        %594 = vmatpush1.bf16.msra.mxu0 %v517
        %595 = vmatprep.subr.bf16.mxu0 %v520
        %596 = vmatpush1.bf16.msra.mxu0 %v519
        %597 = vmatprep.subr.bf16.mxu0 %v522
        %598 = vmatpush1.bf16.msra.mxu0 %v521
        %599 = vmatprep.subr.bf16.mxu0 %v524
        %600 = vmatpush1.bf16.msra.mxu0 %v523
        %601 = vmatprep.subr.bf16.mxu0 %v526
        %602 = vmatpush1.bf16.msra.mxu0 %v525
        %603 = vmatprep.subr.bf16.mxu0 %v528
        %604 = vmatpush1.bf16.msra.mxu0 %v527
        %605 = vmatprep.subr.bf16.mxu0 %v530
        %606 = vmatpush1.bf16.msra.mxu0 %v529
        %607 = vmatprep.subr.bf16.mxu0 %v532
        %608 = vmatpush1.bf16.msra.mxu0 %v531
        %609 = vmatprep.subr.bf16.mxu0 %v534
        %610 = vmatpush1.bf16.msra.mxu0 %v533
        %611 = vmatprep.subr.bf16.mxu0 %v536
        %612 = vmatpush1.bf16.msra.mxu0 %v535
        %613 = vmatprep.subr.bf16.mxu0 %v538
        %614 = vmatpush1.bf16.msra.mxu0 %v537
        %615 = vmatprep.subr.bf16.mxu0 %v540
        %616 = vmatpush1.bf16.msra.mxu0 %v539
        %617 = vmatprep.subr.bf16.mxu0 %v542
        %618 = vmatpush1.bf16.msra.mxu0 %v541
        %619 = vmatprep.mubr.bf16.mxu0 %v399
        %620 = vmatmul.mubr.bf16.gmra.mrb[0].mxu0 %v398
        %v621 = vpop.f32.mrb[0].mxu0
        %v622 = vadd.f32 %v391, %v621
        %v623 = vpop.f32.mrb[0].mxu0
        %v624 = vadd.f32 %v391, %v623
        %v625 = vpop.f32.mrb[0].mxu0
        %v626 = vpop.f32.mrb[0].mxu0
        %627 = vdwg.mxu0
        %628 = vmatprep.subr.bf16.mxu0 %v544
        %629 = vmatpush1.bf16.msra.mxu0 %v543
        %630 = vmatprep.subr.bf16.mxu0 %v546
        %631 = vmatpush1.bf16.msra.mxu0 %v545
        %632 = vmatprep.subr.bf16.mxu0 0
        %633 = vmatpush1.bf16.msra.mxu0 0
        %634 = vmatprep.subr.bf16.mxu0 0
        %635 = vmatpush1.bf16.msra.mxu0 0
        %636 = vmatprep.subr.bf16.mxu0 0
        %637 = vmatpush1.bf16.msra.mxu0 0
        %638 = vmatprep.subr.bf16.mxu0 0
        %639 = vmatpush1.bf16.msra.mxu0 0
        %640 = vmatprep.subr.bf16.mxu0 0
        %641 = vmatpush1.bf16.msra.mxu0 0
        %642 = vmatprep.subr.bf16.mxu0 0
        %643 = vmatpush1.bf16.msra.mxu0 0
        %644 = vmatprep.subr.bf16.mxu0 0
        %645 = vmatpush1.bf16.msra.mxu0 0
        %646 = vmatprep.subr.bf16.mxu0 0
        %647 = vmatpush1.bf16.msra.mxu0 0
        %648 = vmatprep.subr.bf16.mxu0 0
        %649 = vmatpush1.bf16.msra.mxu0 0
        %650 = vmatprep.subr.bf16.mxu0 0
        %651 = vmatpush1.bf16.msra.mxu0 0
        %652 = vmatprep.subr.bf16.mxu0 0
        %653 = vmatpush1.bf16.msra.mxu0 0
        %654 = vmatprep.subr.bf16.mxu0 0
        %655 = vmatpush1.bf16.msra.mxu0 0
        %656 = vmatprep.subr.bf16.mxu0 0
        %657 = vmatpush1.bf16.msra.mxu0 0
        %658 = vmatprep.subr.bf16.mxu0 0
        %659 = vmatpush1.bf16.msra.mxu0 0
        %660 = vmatprep.mubr.bf16.mxu0 0
        %661 = vmatmul.mubr.bf16.gmra.mrb[0].mxu0 %v585
        %v662 = vpop.f32.mrb[0].mxu0
        %v663 = vadd.f32 %v622, %v662
        %v664 = vpop.f32.mrb[0].mxu0
        %v665 = vadd.f32 %v624, %v664
        %v666 = vpop.f32.mrb[0].mxu0
        %v667 = vpop.f32.mrb[0].mxu0
        %668 = vdwg.mxu0
        %vm669 = vcmp.ge.f32.partialorder %v663, 0.0
        %vm670 = vcmp.ge.f32.partialorder %v665, 0.0
        %v671 = vmul.f32 %v663, 0.25
        %v672 = vmul.f32 %v665, 0.25
        %v673 = vsel %vm669, %v663, %v671
        %v674 = vsel %vm670, %v665, %v672
        %675 = vst [vmem:[%s346] sm:$0xff] %v673
        %676 = vst [vmem:[%s346 + $0x8] sm:$0xff] %v674
        %s677 = smul.u32 2, %s14
        %p678 = scmp.lt.s32.totalorder %s677, 3
        %s679 = scalar_select %p678, %s677, 3
        %s680 = smul.addr %s679, 8
        %s681 = scalar_lea.vmem %s3, %s680
        // Predicated region
        $region71: #{forward.141} parent=65 // pred_check
          %p682 = pneg %p100
        $region72: #{forward.141} parent=65 // pred_check_branch
          %684 = sbr.rel (%p682) target = $region74
        $region73: #{forward.141} parent=65 // pred_region
          %s685 = smul.u32 2, %s14
        $region74: #{forward.141} parent=65 // pred_fallthru
          _
      $region66: #{forward.141} parent=5 // pred_fallthru
        _
      %p686 = scmp.le.s32.totalorder 2, %s9
      // Predicated region
      $region75: #{forward.141} parent=5 // pred_check
        %p687 = pneg %p686
      $region76: #{forward.141} parent=5 // pred_check_branch
        %689 = sbr.rel (%p687) target = $region78
      $region77: #{forward.141} parent=5 // pred_region
        %s690 = ssub.s32 %s9, 2
        // Predicated region
        $region79: #{forward.141} parent=77 // pred_check
          %p691 = pneg %p106
        $region80: #{forward.141} parent=77 // pred_check_branch
          %693 = sbr.rel (%p691) target = $region82
        $region81: #{forward.141} parent=77 // pred_region
          %s694 = smul.u32 2, %s15
          %p695 = scmp.lt.s32.totalorder %s694, 3
          %s696 = scalar_select %p695, %s694, 3
          %s697 = smul.addr %s696, 8
          %s698 = scalar_lea.vmem %s3, %s697
        $region82: #{forward.141} parent=77 // pred_fallthru
          _
      $region78: #{forward.141} parent=5 // pred_fallthru
        _
    $region6: #{forward.141} parent=1 // loop_footer
      %s13 = sadd.s32 1, %s9
    $region7: #{forward.141} parent=1 // loop_footer_branch
      %8 = sbr.rel target = $region3
    $region8: #{forward.141} parent=1 // loop_exit
      _

// kernel: forward.143
$region0: #{forward.143}
  #allocation0 [shape = 'u32[]', space=smem, size = 0x4, offset = 0x4, fixed_abs, tag = 'smem constant byte address 0x4 - core index']
  #allocation1 [shape = 'u32[144,128]{1,0:T(1,128)}', space=vmem, size = 0x12000, scoped, tag = 'internal scratch']
  %s0 = inlined_call_operand.vmem [shape: bf16[8,9], index: 0, kind: input, shape index: {}]
  %s1 = inlined_call_operand.vmem [shape: bf16[9,512], index: 1, kind: input, shape index: {}]
  %s2 = inlined_call_operand.vmem [shape: f32[8,1], index: 2, kind: input, shape index: {}]
  %s3 = inlined_call_operand.vmem [shape: f32[8,512], index: 3, kind: output, shape index: {}]
  %s4 = sld [smem:[#allocation0]]
  $region83: #{forward.143} parent=0
    _
  %s6 = ssub.s32 1, %s4
  %s7 = scalar_select 0, %s6, %s4
  $region1: #{forward.143} parent=0
    #allocation2 [shape = 'u8[16384]{0}', space=vmem, size = 0x4000, scoped, tag = 'input window, operand 1']
    loop: start=0, step=1, limit=4
    $region2: #{forward.143} parent=1 // loop_pre_header
      _
    $region3: #{forward.143} parent=1 // loop_header
      %s9 = sphi 0, %s13
      %p10 = scmp.ge.s32.totalorder %s9, 4
      %s17 = sphi 0, %s17
      %s19 = sphi 0, %s17
      %s20 = sphi 0, %s19
      %s34 = sphi 0, %s20
      %s40 = sphi 0, %s42
      %s43 = sphi 0, %s40
      %s44 = sphi 0, %s43
      %s60 = sphi 0, %s44
      %s64 = sphi 0, %s64
      %s66 = sphi 0, %s64
      %s67 = sphi 0, %s66
      %s81 = sphi 0, %s67
      %s87 = sphi 0, %s89
      %s90 = sphi 0, %s87
      %s91 = sphi 0, %s90
      %s107 = sphi 0, %s91
    $region4: #{forward.143} parent=1 // loop_header_branch
      %12 = sbr.rel (%p10) target = $region8
    $region5: #{forward.143} parent=1 // loop_body
      %s14 = ssub.s32 %s9, 1
      %s15 = ssub.s32 %s9, 2
      %s16 = sadd.s32 %s9, 1
      %s18 = sadd.s32 %s17, 1
      %p21 = scmp.eq.s32.totalorder %s9, 1
      %p22 = scmp.ne.s32.totalorder %s17, %s19
      %p23 = scmp.eq.s32.totalorder %s9, 0
      %p24 = por %p22, %p23
      %p25 = scmp.ne.s32.totalorder %s17, %s19
      %p26 = scmp.eq.s32.totalorder %s14, 1
      %p27 = por %p25, %p26
      %p28 = scmp.ne.s32.totalorder %s19, %s20
      %p29 = scmp.eq.s32.totalorder %s14, 0
      %p30 = por %p28, %p29
      %p31 = scmp.ne.s32.totalorder %s19, %s20
      %p32 = scmp.eq.s32.totalorder %s15, 1
      %p33 = por %p31, %p32
      %p35 = scmp.ne.s32.totalorder %s20, %s34
      %p36 = scmp.eq.s32.totalorder %s15, 0
      %p37 = por %p35, %p36
      %s38 = ssub.s32 %s9, %s16
      %p39 = scmp.eq.s32.totalorder %s38, 0
      %s41 = sadd.s32 %s40, 1
      %s42 = scalar_select %p39, %s40, %s41
      %p45 = pneg %p39
      %p46 = scmp.eq.s32.totalorder %s9, 1
      %p47 = por %p45, %p46
      %p48 = scmp.ne.s32.totalorder %s40, %s43
      %p49 = scmp.eq.s32.totalorder %s9, 0
      %p50 = por %p48, %p49
      %p51 = scmp.ne.s32.totalorder %s40, %s43
      %p52 = scmp.eq.s32.totalorder %s14, 1
      %p53 = por %p51, %p52
      %p54 = scmp.ne.s32.totalorder %s43, %s44
      %p55 = scmp.eq.s32.totalorder %s14, 0
      %p56 = por %p54, %p55
      %p57 = scmp.ne.s32.totalorder %s43, %s44
      %p58 = scmp.eq.s32.totalorder %s15, 1
      %p59 = por %p57, %p58
      %p61 = scmp.ne.s32.totalorder %s44, %s60
      %p62 = scmp.eq.s32.totalorder %s15, 0
      %p63 = por %p61, %p62
      %s65 = sadd.s32 %s64, 1
      %p68 = scmp.eq.s32.totalorder %s9, 1
      %p69 = scmp.ne.s32.totalorder %s64, %s66
      %p70 = scmp.eq.s32.totalorder %s9, 0
      %p71 = por %p69, %p70
      %p72 = scmp.ne.s32.totalorder %s64, %s66
      %p73 = scmp.eq.s32.totalorder %s14, 1
      %p74 = por %p72, %p73
      %p75 = scmp.ne.s32.totalorder %s66, %s67
      %p76 = scmp.eq.s32.totalorder %s14, 0
      %p77 = por %p75, %p76
      %p78 = scmp.ne.s32.totalorder %s66, %s67
      %p79 = scmp.eq.s32.totalorder %s15, 1
      %p80 = por %p78, %p79
      %p82 = scmp.ne.s32.totalorder %s67, %s81
      %p83 = scmp.eq.s32.totalorder %s15, 0
      %p84 = por %p82, %p83
      %s85 = ssub.s32 %s9, %s16
      %p86 = scmp.eq.s32.totalorder %s85, 0
      %s88 = sadd.s32 %s87, 1
      %s89 = scalar_select %p86, %s87, %s88
      %p92 = pneg %p86
      %p93 = scmp.eq.s32.totalorder %s9, 1
      %p94 = por %p92, %p93
      %p95 = scmp.ne.s32.totalorder %s87, %s90
      %p96 = scmp.eq.s32.totalorder %s9, 0
      %p97 = por %p95, %p96
      %p98 = scmp.ne.s32.totalorder %s87, %s90
      %p99 = scmp.eq.s32.totalorder %s14, 1
      %p100 = por %p98, %p99
      %p101 = scmp.ne.s32.totalorder %s90, %s91
      %p102 = scmp.eq.s32.totalorder %s14, 0
      %p103 = por %p101, %p102
      %p104 = scmp.ne.s32.totalorder %s90, %s91
      %p105 = scmp.eq.s32.totalorder %s15, 1
      %p106 = por %p104, %p105
      %p108 = scmp.ne.s32.totalorder %s91, %s107
      %p109 = scmp.eq.s32.totalorder %s15, 0
      %p110 = por %p108, %p109
      %p111 = scmp.le.s32.totalorder 1, %s9
      %p112 = scmp.lt.s32.totalorder %s9, 3
      %p113 = pnand %p111, %p112
      %p114 = pneg %p113
      // Predicated region
      $region9: #{forward.143} parent=5 // pred_check
        _
      $region10: #{forward.143} parent=5 // pred_check_branch
        %116 = sbr.rel (%p113) target = $region12
      $region11: #{forward.143} parent=5 // pred_region
        %s117 = ssub.s32 %s9, 1
        // Predicated region
        $region13: #{forward.143} parent=11 // pred_check
          %p118 = pneg %p30
        $region14: #{forward.143} parent=11 // pred_check_branch
          %120 = sbr.rel (%p118) target = $region16
        $region15: #{forward.143} parent=11 // pred_region
          _
        $region16: #{forward.143} parent=11 // pred_fallthru
          _
        // Predicated region
        $region17: #{forward.143} parent=11 // pred_check
          %p121 = pneg %p77
        $region18: #{forward.143} parent=11 // pred_check_branch
          %123 = sbr.rel (%p121) target = $region20
        $region19: #{forward.143} parent=11 // pred_region
          _
        $region20: #{forward.143} parent=11 // pred_fallthru
          _
      $region12: #{forward.143} parent=5 // pred_fallthru
        _
      %p124 = scmp.lt.s32.totalorder %s9, 2
      // Predicated region
      $region21: #{forward.143} parent=5 // pred_check
        %p125 = pneg %p124
      $region22: #{forward.143} parent=5 // pred_check_branch
        %127 = sbr.rel (%p125) target = $region24
      $region23: #{forward.143} parent=5 // pred_region
        // Predicated region
        $region25: #{forward.143} parent=23 // pred_check
          %p128 = pneg %p50
        $region26: #{forward.143} parent=23 // pred_check_branch
          %130 = sbr.rel (%p128) target = $region28
        $region27: #{forward.143} parent=23 // pred_region
          %s131 = sand.u32 %s40, 1
          %s132 = sand.u32 %s40, 1
          %s133 = smul.addr %s132, 16
          %s134 = scalar_lea.vmem [#allocation2], %s133
          %s135 = smul.u32 2, %s9
          %s136 = smul.addr %s135, 4
          %s137 = scalar_lea.vmem %s1, %s136
          // Predicated region
          $region29: #{forward.143} parent=27 // pred_check
            _
          $region30: #{forward.143} parent=27 // pred_check_branch
            %139 = sbr.rel (0) target = $region32
          $region31: #{forward.143} parent=27 // pred_region
            // Predicated region
            $region33: #{forward.143} parent=31 // pred_check
              _
            $region34: #{forward.143} parent=31 // pred_check_branch
              %141 = sbr.rel (0) target = $region36
            $region35: #{forward.143} parent=31 // pred_region
              // Predicated region
              $region48: #{forward.143} parent=35 // pred_check
                _
              $region49: #{forward.143} parent=35 // pred_check_branch
                %158 = sbr.rel (0) target = $region51
              $region50: #{forward.143} parent=35 // pred_region
                loop: start=0, step=1, limit=1
                $region52: #{forward.143} parent=50 // loop_pre_header
                  _
                $region53: #{forward.143} parent=50 // loop_header
                  %s160 = sphi 0, %s164
                  %p161 = scmp.ge.s32.totalorder %s160, 1
                  %s165 = sphi %s137, %s137
                  %s166 = sphi %s134, %s134
                $region54: #{forward.143} parent=50 // loop_header_branch
                  %163 = sbr.rel (%p161) target = $region58
                $region55: #{forward.143} parent=50 // loop_body
                  %v167 = vld [vmem:[%s165] sm:$0xff]
                  %168 = vst [vmem:[%s166] sm:$0xff] %v167
                  %v169 = vld [vmem:[%s165 + $0x10] sm:$0xff]
                  %170 = vst [vmem:[%s166 + $0x8] sm:$0xff] %v169
                $region56: #{forward.143} parent=50 // loop_footer
                  %s164 = sadd.s32 1, %s160
                $region57: #{forward.143} parent=50 // loop_footer_branch
                  %159 = sbr.rel target = $region53
                $region58: #{forward.143} parent=50 // loop_exit
                  _
              $region51: #{forward.143} parent=35 // pred_fallthru
                _
              // Predicated region
              $region59: #{forward.143} parent=35 // pred_check
                _
              $region60: #{forward.143} parent=35 // pred_check_branch
                %172 = sbr.rel target = $region62
              $region61: #{forward.143} parent=35 // pred_region
                _
              $region62: #{forward.143} parent=35 // pred_fallthru
                _
            $region36: #{forward.143} parent=31 // pred_fallthru
              _
            // Predicated region
            $region37: #{forward.143} parent=31 // pred_check
              _
            $region38: #{forward.143} parent=31 // pred_check_branch
              %143 = sbr.rel target = $region40
            $region39: #{forward.143} parent=31 // pred_region
              loop: start=0, step=1, limit=1
              $region41: #{forward.143} parent=39 // loop_pre_header
                _
              $region42: #{forward.143} parent=39 // loop_header
                %s146 = sphi 0, %s150
                %p147 = scmp.ge.s32.totalorder %s146, 1
                %s151 = sphi %s137, %s137
                %s152 = sphi %s134, %s134
              $region43: #{forward.143} parent=39 // loop_header_branch
                %149 = sbr.rel (%p147) target = $region47
              $region44: #{forward.143} parent=39 // loop_body
                %v153 = vld [vmem:[%s151] sm:$0xff]
                %154 = vst [vmem:[%s152] sm:$0xff] %v153
                %v155 = vld [vmem:[%s151 + $0x10] sm:$0xff]
                %156 = vst [vmem:[%s152 + $0x8] sm:$0xff] %v155
              $region45: #{forward.143} parent=39 // loop_footer
                %s150 = sadd.s32 1, %s146
              $region46: #{forward.143} parent=39 // loop_footer_branch
                %145 = sbr.rel target = $region42
              $region47: #{forward.143} parent=39 // loop_exit
                _
            $region40: #{forward.143} parent=31 // pred_fallthru
              _
          $region32: #{forward.143} parent=27 // pred_fallthru
            _
          %173 = vnop
        $region28: #{forward.143} parent=23 // pred_fallthru
          _
      $region24: #{forward.143} parent=5 // pred_fallthru
        _
      %p174 = scmp.le.s32.totalorder 1, %s9
      %p175 = scmp.lt.s32.totalorder %s9, 3
      %p176 = pnand %p174, %p175
      %p177 = pneg %p176
      // Predicated region
      $region63: #{forward.143} parent=5 // pred_check
        _
      $region64: #{forward.143} parent=5 // pred_check_branch
        %179 = sbr.rel (%p176) target = $region66
      $region65: #{forward.143} parent=5 // pred_region
        %s180 = ssub.s32 %s9, 1
        %s181 = sand.u32 %s43, 1
        %s182 = sand.u32 %s43, 1
        %s183 = smul.addr %s182, 16
        %s184 = scalar_lea.vmem [#allocation2], %s183
        // Predicated region
        $region67: #{forward.143} parent=65 // pred_check
          %p185 = pneg %p56
        $region68: #{forward.143} parent=65 // pred_check_branch
          %187 = sbr.rel (%p185) target = $region70
        $region69: #{forward.143} parent=65 // pred_region
          _
        $region70: #{forward.143} parent=65 // pred_fallthru
          _
        %p188 = pneg %p30
        %p189 = pneg %p27
        %s190 = sand.u32 %s43, 1
        %s191 = sand.u32 %s43, 1
        %s192 = smul.addr %s191, 16
        %s193 = scalar_lea.vmem [#allocation2], %s192
        %p194 = pneg %p56
        %p195 = pneg %p53
        %p196 = pneg %p77
        %p197 = pneg %p74
        %p198 = pneg %p103
        %p199 = pneg %p100
        %s200 = smul.u32 2, %s14
        %p201 = scmp.lt.s32.totalorder %s200, 3
        %s202 = scalar_select %p201, %s200, 3
        %s203 = smul.addr %s202, 8
        %s204 = scalar_lea.vmem %s3, %s203
        %s205 = smul.u32 2, %s14
        %s206 = smul.u32 2, %s14
        %p207 = scmp.lt.s32.totalorder %s206, 3
        %s208 = scalar_select %p207, %s206, 3
        %s209 = smul.addr %s208, 8
        %s210 = scalar_lea.vmem %s3, %s209
        %s211 = smul.u32 2, %s14
        %v213 = vld [vmem:[%s0] sm:$0xf]
        %v214 = vld [vmem:[%s184] sm:$0xff]
        %v215 = vld [vmem:[%s184 + $0x8] sm:$0x11]
        %v216 = vld [vmem:[%s2] sm:$0xff]
        %218 = vset.pattern.permute.xlu0 0
        %219 = vperm.xlu0 %218, %v216
        %v220 = vpop.permute.xlu0 %219
        %v224 = vunpack.c.l.b16 %v214
        %v225 = vunpack.c.h.b16 %v214
        %v226 = vunpack.c.l.b16 %v215
        %v227 = vunpack.c.h.b16 %v215
        %v228 = vpack.c.b16 %v226, %v224
        %v229 = vpack.c.b16 %v227, %v225
        %vm230 = vcmask 72704
        %v232 = vsel %vm230, %v213, 0
        %vm234 = vcmask 1043456
        %vm235 = vcmask 1044480
        %v236 = vsel %vm234, 4294967295, 65535
        %v237 = vsel %vm235, %v236, 0
        %v239 = vand.u32 %v228, %v237
        %v242 = vand.u32 %v229, %v237
        %244 = vmatprep.subr.bf16.mxu0 %v242
        %245 = vmatpush1.bf16.msra.mxu0 %v239
        %246 = vmatprep.subr.bf16.mxu0 0
        %247 = vmatpush1.bf16.msra.mxu0 0
        %248 = vmatprep.subr.bf16.mxu0 0
        %249 = vmatpush1.bf16.msra.mxu0 0
        %250 = vmatprep.subr.bf16.mxu0 0
        %251 = vmatpush1.bf16.msra.mxu0 0
        %252 = vmatprep.subr.bf16.mxu0 0
        %253 = vmatpush1.bf16.msra.mxu0 0
        %254 = vmatprep.subr.bf16.mxu0 0
        %255 = vmatpush1.bf16.msra.mxu0 0
        %256 = vmatprep.subr.bf16.mxu0 0
        %257 = vmatpush1.bf16.msra.mxu0 0
        %258 = vmatprep.subr.bf16.mxu0 0
        %259 = vmatpush1.bf16.msra.mxu0 0
        %260 = vmatprep.subr.bf16.mxu0 0
        %261 = vmatpush1.bf16.msra.mxu0 0
        %262 = vmatprep.subr.bf16.mxu0 0
        %263 = vmatpush1.bf16.msra.mxu0 0
        %264 = vmatprep.subr.bf16.mxu0 0
        %265 = vmatpush1.bf16.msra.mxu0 0
        %266 = vmatprep.subr.bf16.mxu0 0
        %267 = vmatpush1.bf16.msra.mxu0 0
        %268 = vmatprep.subr.bf16.mxu0 0
        %269 = vmatpush1.bf16.msra.mxu0 0
        %270 = vmatprep.subr.bf16.mxu0 0
        %271 = vmatpush1.bf16.msra.mxu0 0
        %272 = vmatprep.subr.bf16.mxu0 0
        %273 = vmatpush1.bf16.msra.mxu0 0
        %274 = vmatprep.subr.bf16.mxu0 0
        %275 = vmatpush1.bf16.msra.mxu0 0
        %276 = vmatprep.mubr.bf16.mxu0 0
        %277 = vmatmul.mubr.bf16.gmra.mrb[0].mxu0 %v232
        %v278 = vpop.f32.mrb[0].mxu0
        %v279 = vadd.f32 %v220, %v278
        %v280 = vpop.f32.mrb[0].mxu0
        %v281 = vadd.f32 %v220, %v280
        %v282 = vpop.f32.mrb[0].mxu0
        %v283 = vpop.f32.mrb[0].mxu0
        %284 = vdwg.mxu0
        %vm285 = vcmp.ge.f32.partialorder %v279, 0.0
        %vm286 = vcmp.ge.f32.partialorder %v281, 0.0
        %v287 = vmul.f32 %v279, 0.25
        %v288 = vmul.f32 %v281, 0.25
        %v289 = vsel %vm285, %v279, %v287
        %v290 = vsel %vm286, %v281, %v288
        %291 = vst [vmem:[%s210] sm:$0xff] %v289
        %292 = vst [vmem:[%s210 + $0x8] sm:$0xff] %v290
        %s293 = smul.u32 2, %s14
        %p294 = scmp.lt.s32.totalorder %s293, 3
        %s295 = scalar_select %p294, %s293, 3
        %s296 = smul.addr %s295, 8
        %s297 = scalar_lea.vmem %s3, %s296
        // Predicated region
        $region71: #{forward.143} parent=65 // pred_check
          %p298 = pneg %p100
        $region72: #{forward.143} parent=65 // pred_check_branch
          %300 = sbr.rel (%p298) target = $region74
        $region73: #{forward.143} parent=65 // pred_region
          %s301 = smul.u32 2, %s14
        $region74: #{forward.143} parent=65 // pred_fallthru
          _
      $region66: #{forward.143} parent=5 // pred_fallthru
        _
      %p302 = scmp.le.s32.totalorder 2, %s9
      // Predicated region
      $region75: #{forward.143} parent=5 // pred_check
        %p303 = pneg %p302
      $region76: #{forward.143} parent=5 // pred_check_branch
        %305 = sbr.rel (%p303) target = $region78
      $region77: #{forward.143} parent=5 // pred_region
        %s306 = ssub.s32 %s9, 2
        // Predicated region
        $region79: #{forward.143} parent=77 // pred_check
          %p307 = pneg %p106
        $region80: #{forward.143} parent=77 // pred_check_branch
          %309 = sbr.rel (%p307) target = $region82
        $region81: #{forward.143} parent=77 // pred_region
          %s310 = smul.u32 2, %s15
          %p311 = scmp.lt.s32.totalorder %s310, 3
          %s312 = scalar_select %p311, %s310, 3
          %s313 = smul.addr %s312, 8
          %s314 = scalar_lea.vmem %s3, %s313
        $region82: #{forward.143} parent=77 // pred_fallthru
          _
      $region78: #{forward.143} parent=5 // pred_fallthru
        _
    $region6: #{forward.143} parent=1 // loop_footer
      %s13 = sadd.s32 1, %s9
    $region7: #{forward.143} parent=1 // loop_footer_branch
      %8 = sbr.rel target = $region3
    $region8: #{forward.143} parent=1 // loop_exit
      _

// kernel: forward.149
$region0: #{forward.149}
  #allocation0 [shape = 'u32[]', space=smem, size = 0x4, offset = 0x4, fixed_abs, tag = 'smem constant byte address 0x4 - core index']
  #allocation1 [shape = 'u32[144,128]{1,0:T(1,128)}', space=vmem, size = 0x12000, scoped, tag = 'internal scratch']
  %s0 = inlined_call_operand.vmem [shape: bf16[8,8], index: 0, kind: input, shape index: {}]
  %s1 = inlined_call_operand.vmem [shape: bf16[8,128], index: 1, kind: input, shape index: {}]
  %s2 = inlined_call_operand.vmem [shape: f32[8,1], index: 2, kind: input, shape index: {}]
  %s3 = inlined_call_operand.vmem [shape: f32[8,128], index: 3, kind: output, shape index: {}]
  %s4 = sld [smem:[#allocation0]]
  $region22: #{forward.149} parent=0
    _
  %s6 = ssub.s32 1, %s4
  %s7 = scalar_select 0, %s6, %s4
  // Predicated region
  $region2: #{forward.149} parent=0 // pred_check
    _
  $region3: #{forward.149} parent=0 // pred_check_branch
    %9 = sbr.rel (0) target = $region5
  $region4: #{forward.149} parent=0 // pred_region
    _
  $region5: #{forward.149} parent=0 // pred_fallthru
    _
  // Predicated region
  $region6: #{forward.149} parent=0 // pred_check
    _
  $region7: #{forward.149} parent=0 // pred_check_branch
    %11 = sbr.rel (0) target = $region9
  $region8: #{forward.149} parent=0 // pred_region
    _
  $region9: #{forward.149} parent=0 // pred_fallthru
    _
  // Predicated region
  $region10: #{forward.149} parent=0 // pred_check
    _
  $region11: #{forward.149} parent=0 // pred_check_branch
    %13 = sbr.rel (0) target = $region13
  $region12: #{forward.149} parent=0 // pred_region
    _
  $region13: #{forward.149} parent=0 // pred_fallthru
    _
  %v15 = vld [vmem:[%s0] sm:$0xf]
  %v16 = vld [vmem:[%s1] sm:$0xf]
  %v17 = vld [vmem:[%s2] sm:$0xff]
  %19 = vset.pattern.permute.xlu0 0
  %20 = vperm.xlu0 %19, %v17
  %v21 = vpop.permute.xlu0 %20
  %vm23 = vcmask 64512
  %v25 = vsel %vm23, %v15, 0
  %vm27 = vcmask 1043456
  %v29 = vsel %vm27, %v16, 0
  %31 = vmatprep.subr.bf16.mxu0 0
  %32 = vmatpush1.bf16.msra.mxu0 %v29
  %33 = vmatprep.subr.bf16.mxu0 0
  %34 = vmatpush1.bf16.msra.mxu0 0
  %35 = vmatprep.subr.bf16.mxu0 0
  %36 = vmatpush1.bf16.msra.mxu0 0
  %37 = vmatprep.subr.bf16.mxu0 0
  %38 = vmatpush1.bf16.msra.mxu0 0
  %39 = vmatprep.subr.bf16.mxu0 0
  %40 = vmatpush1.bf16.msra.mxu0 0
  %41 = vmatprep.subr.bf16.mxu0 0
  %42 = vmatpush1.bf16.msra.mxu0 0
  %43 = vmatprep.subr.bf16.mxu0 0
  %44 = vmatpush1.bf16.msra.mxu0 0
  %45 = vmatprep.subr.bf16.mxu0 0
  %46 = vmatpush1.bf16.msra.mxu0 0
  %47 = vmatprep.subr.bf16.mxu0 0
  %48 = vmatpush1.bf16.msra.mxu0 0
  %49 = vmatprep.subr.bf16.mxu0 0
  %50 = vmatpush1.bf16.msra.mxu0 0
  %51 = vmatprep.subr.bf16.mxu0 0
  %52 = vmatpush1.bf16.msra.mxu0 0
  %53 = vmatprep.subr.bf16.mxu0 0
  %54 = vmatpush1.bf16.msra.mxu0 0
  %55 = vmatprep.subr.bf16.mxu0 0
  %56 = vmatpush1.bf16.msra.mxu0 0
  %57 = vmatprep.subr.bf16.mxu0 0
  %58 = vmatpush1.bf16.msra.mxu0 0
  %59 = vmatprep.subr.bf16.mxu0 0
  %60 = vmatpush1.bf16.msra.mxu0 0
  %61 = vmatprep.subr.bf16.mxu0 0
  %62 = vmatpush1.bf16.msra.mxu0 0
  %63 = vmatprep.mubr.bf16.mxu0 0
  %64 = vmatmul.mubr.bf16.gmra.mrb[0].mxu0 %v25
  %v65 = vpop.f32.mrb[0].mxu0
  %v66 = vadd.f32 %v21, %v65
  %v67 = vpop.f32.mrb[0].mxu0
  %v68 = vpop.f32.mrb[0].mxu0
  %v69 = vpop.f32.mrb[0].mxu0
  %70 = vdwg.mxu0
  %71 = vst [vmem:[%s3] sm:$0xff] %v66
  // Predicated region
  $region14: #{forward.149} parent=0 // pred_check
    _
  $region15: #{forward.149} parent=0 // pred_check_branch
    %73 = sbr.rel (0) target = $region17
  $region16: #{forward.149} parent=0 // pred_region
    _
  $region17: #{forward.149} parent=0 // pred_fallthru
    _
  // Predicated region
  $region18: #{forward.149} parent=0 // pred_check
    _
  $region19: #{forward.149} parent=0 // pred_check_branch
    %75 = sbr.rel (0) target = $region21
  $region20: #{forward.149} parent=0 // pred_region
    _
  $region21: #{forward.149} parent=0 // pred_fallthru
    _

</llo_original>
